<compile_context>
chip_gen: v6e
topology: v6e:2x2x1
jax: 0.10.0
libtpu: 0.0.40
codegen_flags: <defaults>
</compile_context>

<pallas_src>
import functools

import jax
import jax.numpy as jnp
from jax.experimental import pallas as pl
from jax.experimental.pallas import tpu as pltpu

BN_EPS = 1e-05
_LANE = 128
_SUBLANE = 8


def _round_up(x, m):
    return (x + m - 1) // m * m


def _vmem_limit_bytes():
    """Chip-aware VMEM limit (v5e/v6e: ~96 MiB, v7x: ~48 MiB, fallback 48 MiB)."""
    try:
        cap = int(pltpu.get_tpu_info().vmem_capacity_bytes)
    except Exception:
        cap = 64 * 1024 * 1024
    return max(32 * 1024 * 1024, min(cap * 3 // 4, 100 * 1024 * 1024))


def _pick_tile_h(H, W, Wp, cin_p, cout_p, kk, in_itemsize, thb, vmem_budget):
    """Largest H-tile (multiple of thb, dividing H) whose working set fits VMEM."""
    valid = [th for th in range(thb, H + 1, thb) if H % th == 0]
    if not valid:
        return H

    def working_set(th):
        return (2 * th * Wp * cin_p * in_itemsize         # input block (double buffered)
                + 2 * thb * Wp * cin_p * in_itemsize      # halo block (double buffered)
                + (th + thb) * Wp * cin_p * in_itemsize   # staging scratch
                + 2 * th * W * cout_p * 2                 # bf16 conv-out block (x2 buffers)
                + 2 * kk * cin_p * cout_p * 2             # weight taps
                + 2 * (1 << 20))                          # headroom for temporaries

    fitting = [th for th in valid
               if working_set(th) <= vmem_budget and th * W <= 2048]
    return max(fitting) if fitting else valid[0]


def _largest_divisor_block(total, cap):
    """Largest sublane-aligned row-block size dividing `total`, <= cap."""
    best = None
    r = _SUBLANE
    while r <= min(cap, total):
        if total % r == 0:
            best = r
        r += _SUBLANE
    return best if best is not None else total


def _conv_moments_kernel(x_top_ref, x_bot_ref, w_ref, conv_ref, sum_ref,
                         sumsq_ref, xbuf_ref, *, k, dilation, out_w, m_rows):
    """Conv2d (stride=1, groups=1) on one (batch, H-tile) + BN partial moments.

    x_top_ref: (1, TH,  Wp, Cin_p)  main input rows of this tile (bf16)
    x_bot_ref: (1, THB, Wp, Cin_p)  halo rows below the tile (bf16)
    w_ref:     (k*k, Cin_p, Cout_p) per-tap weights (bf16)
    conv_ref:  (1, TH*W, Cout_p)    bf16 conv output tile (lane-dense)
    sum_ref:   (1, 1, 1, Cout_p)    per-tile f32 sum of conv
    sumsq_ref: (1, 1, 1, Cout_p)    per-tile f32 sum of conv^2
    xbuf_ref:  (TH+THB, Wp, Cin_p)  VMEM staging buffer for the halo tile
    """
    th = x_top_ref.shape[1]
    thb = x_bot_ref.shape[1]
    cin = x_top_ref.shape[3]
    cout = conv_ref.shape[2]
    W = out_w
    d = dilation

    # Stage the halo tile once (tile rows + the rows needed by the k-1 taps).
    xbuf_ref[0:th] = x_top_ref[0]
    xbuf_ref[th:th + thb] = x_bot_ref[0]

    s1 = jnp.zeros((1, cout), jnp.float32)
    s2 = jnp.zeros((1, cout), jnp.float32)

    # Chunk the contraction over M (output rows) so the f32 accumulator stays
    # in-register; each chunk: k*k accumulating MXU matmuls on shifted slices
    # (no im2col scratch, no masked lane-offset stores).
    for r0 in range(0, th, m_rows):
        rr = min(m_rows, th - r0)
        acc = jnp.zeros((rr * W, cout), jnp.float32)
        for kh in range(k):
            for kw in range(k):
                t = kh * k + kw
                xs = xbuf_ref[r0 + kh * d:r0 + kh * d + rr,
                              kw * d:kw * d + W, :]
                acc = acc + jax.lax.dot_general(
                    xs.reshape(rr * W, cin), w_ref[t],
                    dimension_numbers=(((1,), (0,)), ((), ())),
                    preferred_element_type=jnp.float32)
        # Single-pass f32 moments from the f32 accumulator (before bf16 cast).
        s1 = s1 + jnp.sum(acc, axis=0, keepdims=True)
        s2 = s2 + jnp.sum(acc * acc, axis=0, keepdims=True)
        conv_ref[0, r0 * W:r0 * W + rr * W, :] = acc.astype(conv_ref.dtype)

    sum_ref[...] = s1.reshape(1, 1, 1, cout)
    sumsq_ref[...] = s2.reshape(1, 1, 1, cout)


def _bn_swish_kernel(conv_ref, scale_ref, shift_ref, o_ref):
    """Lane-dense BatchNorm affine + SiLU (f32 math, output in input dtype).

    conv_ref:  (R, Cout_p) bf16
    scale_ref: (1, Cout_p) f32   gamma / sqrt(var + eps)
    shift_ref: (1, Cout_p) f32   beta - mean * scale
    o_ref:     (R, Cout_p) input dtype
    """
    y = conv_ref[...].astype(jnp.float32) * scale_ref[...] + shift_ref[...]
    o_ref[...] = (y * jax.nn.sigmoid(y)).astype(o_ref.dtype)


def conv_bn_swish(x_nchw, weight_oihw, gamma, beta, *, k=3, stride=1, groups=1,
                  dilation=1, eps=BN_EPS, tile_h=None):
    """ConvBNSwish forward.  x_nchw: (B, Cin, H, W) -> (B, Cout, H, W)."""
    assert stride == 1 and groups == 1, "ConvBNSwish defaults (stride=1, groups=1)"
    B, Cin, H, W = x_nchw.shape
    Cout = weight_oihw.shape[0]
    kk = k * k
    pad = dilation * (k - 1) // 2
    halo = (k - 1) * dilation                       # extra rows needed below a tile
    thb = _round_up(max(halo, 1), _SUBLANE)         # halo block height (sublane aligned)
    assert H % thb == 0, (H, thb)
    Wp = W + 2 * pad
    Cin_p = _round_up(Cin, _SUBLANE)                # sublane-align K
    Cout_p = _round_up(Cout, _LANE)                 # lane-dense N / writeback
    compute_dtype = jnp.bfloat16
    in_itemsize = 2

    vmem_limit = _vmem_limit_bytes()
    if tile_h is None:
        tile_h = _pick_tile_h(H, W, Wp, Cin_p, Cout_p, kk, in_itemsize, thb,
                              vmem_limit)
    assert H % tile_h == 0 and tile_h % thb == 0, (H, tile_h, thb)
    nH = H // tile_h
    ratio = tile_h // thb

    # ~256 MXU M-rows per chunk, but at most 8 unrolled chunks per tile.
    m_rows = max(1, 256 // W)
    m_rows = max(m_rows, -(-tile_h // 8))
    m_rows = min(m_rows, tile_h)

    # --- cheap wrapper glue: layout, halo/channel zero-pad, bf16 cast --------
    # NCHW -> NHWC (channels on the lane axis), single fused pad covering the
    # conv halo rows/cols, the extra fetch rows below the image, and Cin->Cin_p.
    x_nhwc = jnp.transpose(x_nchw, (0, 2, 3, 1)).astype(compute_dtype)
    x_pad = jnp.pad(x_nhwc, ((0, 0), (pad, thb - pad), (pad, pad),
                             (0, Cin_p - Cin)))
    # OIHW -> (k*k, Cin_p, Cout_p) per-tap weights, zero padded, bf16.
    w_taps = jnp.transpose(weight_oihw, (2, 3, 1, 0)).reshape(kk, Cin, Cout)
    w_taps = jnp.pad(w_taps, ((0, 0), (0, Cin_p - Cin), (0, Cout_p - Cout)))
    w_taps = w_taps.astype(compute_dtype)

    cparams = pltpu.CompilerParams(
        # No cross-step state in either pass: both axes can be split across
        # TensorCores (megacore / v7x dual-TC).
        dimension_semantics=("parallel", "parallel"),
        vmem_limit_bytes=vmem_limit,
    )

    # ---- Pass 1: conv (halo-tiled, bf16 MXU) + per-tile BN partial moments --
    kernel = functools.partial(_conv_moments_kernel, k=k, dilation=dilation,
                               out_w=W, m_rows=m_rows)
    conv, psum, psumsq = pl.pallas_call(
        kernel,
        grid=(B, nH),
        in_specs=[
            # Main tile rows [h*tile_h, (h+1)*tile_h).
            pl.BlockSpec((1, tile_h, Wp, Cin_p), lambda b, h: (b, h, 0, 0)),
            # Halo rows [(h+1)*tile_h, (h+1)*tile_h + thb) — same array again,
            # small overlapping block so per-tile input residency is bounded.
            pl.BlockSpec((1, thb, Wp, Cin_p),
                         lambda b, h: (b, (h + 1) * ratio, 0, 0)),
            pl.BlockSpec((kk, Cin_p, Cout_p), lambda b, h: (0, 0, 0)),
        ],
        out_specs=(
            pl.BlockSpec((1, tile_h * W, Cout_p), lambda b, h: (b, h, 0)),
            pl.BlockSpec((1, 1, 1, Cout_p), lambda b, h: (b, h, 0, 0)),
            pl.BlockSpec((1, 1, 1, Cout_p), lambda b, h: (b, h, 0, 0)),
        ),
        out_shape=(
            jax.ShapeDtypeStruct((B, H * W, Cout_p), compute_dtype),  # bf16 intermediate
            jax.ShapeDtypeStruct((B, nH, 1, Cout_p), jnp.float32),
            jax.ShapeDtypeStruct((B, nH, 1, Cout_p), jnp.float32),
        ),
        scratch_shapes=[pltpu.VMEM((tile_h + thb, Wp, Cin_p), compute_dtype)],
        compiler_params=cparams,
    )(x_pad, x_pad, w_taps)

    # ---- Tiny glue: finalize batch statistics, fold gamma/beta --------------
    # Training-mode BatchNorm: biased variance over (B, H, W) per channel.
    # NOTE: single-pass E[x^2]-E[x]^2 in f32; guarded against small negatives.
    count = float(B * H * W)
    mean = jnp.sum(psum, axis=(0, 1, 2)) / count                       # (Cout_p,)
    var = jnp.maximum(jnp.sum(psumsq, axis=(0, 1, 2)) / count - mean * mean, 0.0)
    gamma_p = jnp.pad(gamma.astype(jnp.float32), (0, Cout_p - Cout),
                      constant_values=1.0)
    beta_p = jnp.pad(beta.astype(jnp.float32), (0, Cout_p - Cout))
    scale = gamma_p * jax.lax.rsqrt(var + eps)
    shift = beta_p - mean * scale
    scale_row = scale.reshape(1, Cout_p)
    shift_row = shift.reshape(1, Cout_p)

    # ---- Pass 2: lane-dense BatchNorm affine + SiLU (pure HBM streaming) ----
    total_rows = B * H * W
    conv_flat = conv.reshape(total_rows, Cout_p)     # free row-major relabel
    row_cap = min(1024, max(_SUBLANE, total_rows // 2))
    r_blk = _largest_divisor_block(total_rows, row_cap)
    out_flat = pl.pallas_call(
        _bn_swish_kernel,
        grid=(total_rows // r_blk,),
        in_specs=[
            pl.BlockSpec((r_blk, Cout_p), lambda r: (r, 0)),
            pl.BlockSpec((1, Cout_p), lambda r: (0, 0)),
            pl.BlockSpec((1, Cout_p), lambda r: (0, 0)),
        ],
        out_specs=pl.BlockSpec((r_blk, Cout_p), lambda r: (r, 0)),
        out_shape=jax.ShapeDtypeStruct((total_rows, Cout_p), x_nchw.dtype),
        compiler_params=pltpu.CompilerParams(
            dimension_semantics=("parallel",), vmem_limit_bytes=vmem_limit),
    )(conv_flat, scale_row, shift_row)

    # Drop the padded channels and return NCHW in the input dtype.
    out_nhwc = out_flat.reshape(B, H, W, Cout_p)[:, :, :, :Cout]
    return jnp.transpose(out_nhwc, (0, 3, 1, 2))


def _reference_conv_bn_swish(x, w, gamma, beta, *, k, dilation, eps):
    """Pure-JAX reference (training-mode BN).  Operands are cast through bf16
    to match the kernel's MXU operand precision (accumulation stays f32)."""
    pad = dilation * (k - 1) // 2
    xq = x.astype(jnp.bfloat16).astype(jnp.float32)
    wq = w.astype(jnp.bfloat16).astype(jnp.float32)
    conv = jax.lax.conv_general_dilated(
        xq, wq, window_strides=(1, 1), padding=[(pad, pad), (pad, pad)],
        rhs_dilation=(dilation, dilation),
        dimension_numbers=("NCHW", "OIHW", "NCHW"),
        precision=jax.lax.Precision.HIGHEST)
    mean = jnp.mean(conv, axis=(0, 2, 3), keepdims=True)
    var = jnp.mean((conv - mean) ** 2, axis=(0, 2, 3), keepdims=True)
    y = (conv - mean) * jax.lax.rsqrt(var + eps)
    y = y * gamma.reshape(1, -1, 1, 1) + beta.reshape(1, -1, 1, 1)
    return y * jax.nn.sigmoid(y)


if __name__ == "__main__":
    # Small, deterministic config: B=2, Cin=4, Cout=8, H=W=16, k=3.
    B, Cin, Cout, H, W, k = 2, 4, 8, 16, 16, 3

    key = jax.random.PRNGKey(0)
    key_x, key_w = jax.random.split(key)
    x = jax.random.normal(key_x, (B, Cin, H, W), dtype=jnp.float32)

    # Deterministic synthetic params: conv weight (Cout, Cin, k, k), no bias;
    # BN gamma=1, beta=0 (PyTorch defaults).
    fan_in = Cin * k * k
    weight = jax.random.normal(key_w, (Cout, Cin, k, k), dtype=jnp.float32) * fan_in ** -0.5
    gamma = jnp.ones((Cout,), dtype=jnp.float32)
    beta = jnp.zeros((Cout,), dtype=jnp.float32)

    # tile_h=8 -> nH=2 so the halo path and multi-tile moment reduction are
    # actually exercised (grid=(2,2): even, balanced across v7x's 2 TCs).
    fwd = jax.jit(functools.partial(conv_bn_swish, k=k, stride=1, groups=1,
                                    dilation=1, tile_h=8))
    out = jax.block_until_ready(fwd(x, weight, gamma, beta))
    assert out.shape == (B, Cout, H, W), out.shape
    assert out.dtype == x.dtype, out.dtype

    ref = jax.block_until_ready(
        _reference_conv_bn_swish(x, weight, gamma, beta, k=k, dilation=1, eps=BN_EPS))
    max_err = float(jnp.max(jnp.abs(out - ref)))
    # Tolerance covers the bf16 storage of the conv intermediate.
    assert max_err < 3e-2, f"max abs err vs reference: {max_err}"
    print("KERNEL_OK")
</pallas_src>

<mosaic_0001>
module attributes {stable_mosaic.version = 11 : i64} {
  func.func @_conv_moments_kernel(%arg0: i32, %arg1: i32, %arg2: memref<1x8x18x8xbf16, #tpu.memory_space<vmem>>, %arg3: memref<1x8x18x8xbf16, #tpu.memory_space<vmem>>, %arg4: memref<9x8x128xbf16, #tpu.memory_space<vmem>>, %arg5: memref<1x128x128xbf16, #tpu.memory_space<vmem>>, %arg6: memref<1x1x1x128xf32, #tpu.memory_space<vmem>>, %arg7: memref<1x1x1x128xf32, #tpu.memory_space<vmem>>, %arg8: memref<16x18x8xbf16, #tpu.memory_space<vmem>>) attributes {dimension_semantics = [#tpu.dimension_semantics<parallel>, #tpu.dimension_semantics<parallel>], iteration_bounds = array<i64: 2, 2>, scalar_prefetch = 0 : i64, scratch_operands = 1 : i64, tpu.core_type = #tpu.core_type<tc>, window_params = [{transform_indices = @transform_0, window_bounds = array<i64: 1, 8, 18, 8>}, {transform_indices = @transform_1, window_bounds = array<i64: 1, 8, 18, 8>}, {pipeline_mode = #tpu.pipeline_mode<synchronous>, transform_indices = @transform_2, window_bounds = array<i64: 9, 8, 128>}, {transform_indices = @transform_3, window_bounds = array<i64: 1, 128, 128>}, {transform_indices = @transform_4, window_bounds = array<i64: 1, 1, 1, 128>}, {transform_indices = @transform_5, window_bounds = array<i64: 1, 1, 1, 128>}]} {
    %c0 = arith.constant 0 : index
    %c0_0 = arith.constant 0 : index
    %c0_1 = arith.constant 0 : index
    %c0_2 = arith.constant 0 : index
    %0 = vector.load %arg2[%c0, %c0_0, %c0_1, %c0_2] : memref<1x8x18x8xbf16, #tpu.memory_space<vmem>>, vector<1x8x18x8xbf16>
    %1 = vector.shape_cast %0 : vector<1x8x18x8xbf16> to vector<8x18x8xbf16>
    %c0_3 = arith.constant 0 : index
    %c0_4 = arith.constant 0 : index
    %c0_5 = arith.constant 0 : index
    %2 = vector.load %arg8[%c0_3, %c0_4, %c0_5] : memref<16x18x8xbf16, #tpu.memory_space<vmem>>, vector<8x18x8xbf16>
    tpu.vector_store %arg8[%c0_3, %c0_4, %c0_5], %1 {strides = array<i32>} : memref<16x18x8xbf16, #tpu.memory_space<vmem>>, vector<8x18x8xbf16>,
    %c0_6 = arith.constant 0 : index
    %c0_7 = arith.constant 0 : index
    %c0_8 = arith.constant 0 : index
    %c0_9 = arith.constant 0 : index
    %3 = vector.load %arg3[%c0_6, %c0_7, %c0_8, %c0_9] : memref<1x8x18x8xbf16, #tpu.memory_space<vmem>>, vector<1x8x18x8xbf16>
    %4 = vector.shape_cast %3 : vector<1x8x18x8xbf16> to vector<8x18x8xbf16>
    %c8 = arith.constant 8 : index
    %c0_10 = arith.constant 0 : index
    %c0_11 = arith.constant 0 : index
    %5 = vector.load %arg8[%c8, %c0_10, %c0_11] : memref<16x18x8xbf16, #tpu.memory_space<vmem>>, vector<8x18x8xbf16>
    tpu.vector_store %arg8[%c8, %c0_10, %c0_11], %4 {strides = array<i32>} : memref<16x18x8xbf16, #tpu.memory_space<vmem>>, vector<8x18x8xbf16>,
    %cst = arith.constant 0.000000e+00 : f32
    %6 = vector.broadcast %cst : f32 to vector<1x128xf32>
    %cst_12 = arith.constant 0.000000e+00 : f32
    %7 = vector.broadcast %cst_12 : f32 to vector<1x128xf32>
    %cst_13 = arith.constant 0.000000e+00 : f32
    %8 = vector.broadcast %cst_13 : f32 to vector<128x128xf32>
    %c0_14 = arith.constant 0 : index
    %c0_15 = arith.constant 0 : index
    %c0_16 = arith.constant 0 : index
    %9 = vector.load %arg8[%c0_14, %c0_15, %c0_16] : memref<16x18x8xbf16, #tpu.memory_space<vmem>>, vector<8x16x8xbf16>
    %10 = vector.shape_cast %9 : vector<8x16x8xbf16> to vector<128x8xbf16>
    %c0_17 = arith.constant 0 : index
    %c0_18 = arith.constant 0 : index
    %c0_19 = arith.constant 0 : index
    %11 = vector.load %arg4[%c0_17, %c0_18, %c0_19] : memref<9x8x128xbf16, #tpu.memory_space<vmem>>, vector<1x8x128xbf16>
    %12 = vector.shape_cast %11 : vector<1x8x128xbf16> to vector<8x128xbf16>
    %cst_20 = arith.constant dense<0.000000e+00> : vector<128x128xf32>
    %13 = tpu.matmul %10, %12, %cst_20 {dimension_numbers = #tpu.dot_dimension_numbers<[1], [0], [0], [1], [0, 0, 1, 1], [], []>} : vector<128x8xbf16>, vector<8x128xbf16>, vector<128x128xf32> -> vector<128x128xf32>
    %14 = arith.addf %8, %13 : vector<128x128xf32>
    %c0_21 = arith.constant 0 : index
    %c1 = arith.constant 1 : index
    %c0_22 = arith.constant 0 : index
    %15 = vector.load %arg8[%c0_21, %c1, %c0_22] : memref<16x18x8xbf16, #tpu.memory_space<vmem>>, vector<8x16x8xbf16>
    %16 = vector.shape_cast %15 : vector<8x16x8xbf16> to vector<128x8xbf16>
    %c1_23 = arith.constant 1 : index
    %c0_24 = arith.constant 0 : index
    %c0_25 = arith.constant 0 : index
    %17 = vector.load %arg4[%c1_23, %c0_24, %c0_25] : memref<9x8x128xbf16, #tpu.memory_space<vmem>>, vector<1x8x128xbf16>
    %18 = vector.shape_cast %17 : vector<1x8x128xbf16> to vector<8x128xbf16>
    %cst_26 = arith.constant dense<0.000000e+00> : vector<128x128xf32>
    %19 = tpu.matmul %16, %18, %cst_26 {dimension_numbers = #tpu.dot_dimension_numbers<[1], [0], [0], [1], [0, 0, 1, 1], [], []>} : vector<128x8xbf16>, vector<8x128xbf16>, vector<128x128xf32> -> vector<128x128xf32>
    %20 = arith.addf %14, %19 : vector<128x128xf32>
    %c0_27 = arith.constant 0 : index
    %c2 = arith.constant 2 : index
    %c0_28 = arith.constant 0 : index
    %21 = vector.load %arg8[%c0_27, %c2, %c0_28] : memref<16x18x8xbf16, #tpu.memory_space<vmem>>, vector<8x16x8xbf16>
    %22 = vector.shape_cast %21 : vector<8x16x8xbf16> to vector<128x8xbf16>
    %c2_29 = arith.constant 2 : index
    %c0_30 = arith.constant 0 : index
    %c0_31 = arith.constant 0 : index
    %23 = vector.load %arg4[%c2_29, %c0_30, %c0_31] : memref<9x8x128xbf16, #tpu.memory_space<vmem>>, vector<1x8x128xbf16>
    %24 = vector.shape_cast %23 : vector<1x8x128xbf16> to vector<8x128xbf16>
    %cst_32 = arith.constant dense<0.000000e+00> : vector<128x128xf32>
    %25 = tpu.matmul %22, %24, %cst_32 {dimension_numbers = #tpu.dot_dimension_numbers<[1], [0], [0], [1], [0, 0, 1, 1], [], []>} : vector<128x8xbf16>, vector<8x128xbf16>, vector<128x128xf32> -> vector<128x128xf32>
    %26 = arith.addf %20, %25 : vector<128x128xf32>
    %c1_33 = arith.constant 1 : index
    %c0_34 = arith.constant 0 : index
    %c0_35 = arith.constant 0 : index
    %27 = vector.load %arg8[%c1_33, %c0_34, %c0_35] : memref<16x18x8xbf16, #tpu.memory_space<vmem>>, vector<8x16x8xbf16>
    %28 = vector.shape_cast %27 : vector<8x16x8xbf16> to vector<128x8xbf16>
    %c3 = arith.constant 3 : index
    %c0_36 = arith.constant 0 : index
    %c0_37 = arith.constant 0 : index
    %29 = vector.load %arg4[%c3, %c0_36, %c0_37] : memref<9x8x128xbf16, #tpu.memory_space<vmem>>, vector<1x8x128xbf16>
    %30 = vector.shape_cast %29 : vector<1x8x128xbf16> to vector<8x128xbf16>
    %cst_38 = arith.constant dense<0.000000e+00> : vector<128x128xf32>
    %31 = tpu.matmul %28, %30, %cst_38 {dimension_numbers = #tpu.dot_dimension_numbers<[1], [0], [0], [1], [0, 0, 1, 1], [], []>} : vector<128x8xbf16>, vector<8x128xbf16>, vector<128x128xf32> -> vector<128x128xf32>
    %32 = arith.addf %26, %31 : vector<128x128xf32>
    %c1_39 = arith.constant 1 : index
    %c1_40 = arith.constant 1 : index
    %c0_41 = arith.constant 0 : index
    %33 = vector.load %arg8[%c1_39, %c1_40, %c0_41] : memref<16x18x8xbf16, #tpu.memory_space<vmem>>, vector<8x16x8xbf16>
    %34 = vector.shape_cast %33 : vector<8x16x8xbf16> to vector<128x8xbf16>
    %c4 = arith.constant 4 : index
    %c0_42 = arith.constant 0 : index
    %c0_43 = arith.constant 0 : index
    %35 = vector.load %arg4[%c4, %c0_42, %c0_43] : memref<9x8x128xbf16, #tpu.memory_space<vmem>>, vector<1x8x128xbf16>
    %36 = vector.shape_cast %35 : vector<1x8x128xbf16> to vector<8x128xbf16>
    %cst_44 = arith.constant dense<0.000000e+00> : vector<128x128xf32>
    %37 = tpu.matmul %34, %36, %cst_44 {dimension_numbers = #tpu.dot_dimension_numbers<[1], [0], [0], [1], [0, 0, 1, 1], [], []>} : vector<128x8xbf16>, vector<8x128xbf16>, vector<128x128xf32> -> vector<128x128xf32>
    %38 = arith.addf %32, %37 : vector<128x128xf32>
    %c1_45 = arith.constant 1 : index
    %c2_46 = arith.constant 2 : index
    %c0_47 = arith.constant 0 : index
    %39 = vector.load %arg8[%c1_45, %c2_46, %c0_47] : memref<16x18x8xbf16, #tpu.memory_space<vmem>>, vector<8x16x8xbf16>
    %40 = vector.shape_cast %39 : vector<8x16x8xbf16> to vector<128x8xbf16>
    %c5 = arith.constant 5 : index
    %c0_48 = arith.constant 0 : index
    %c0_49 = arith.constant 0 : index
    %41 = vector.load %arg4[%c5, %c0_48, %c0_49] : memref<9x8x128xbf16, #tpu.memory_space<vmem>>, vector<1x8x128xbf16>
    %42 = vector.shape_cast %41 : vector<1x8x128xbf16> to vector<8x128xbf16>
    %cst_50 = arith.constant dense<0.000000e+00> : vector<128x128xf32>
    %43 = tpu.matmul %40, %42, %cst_50 {dimension_numbers = #tpu.dot_dimension_numbers<[1], [0], [0], [1], [0, 0, 1, 1], [], []>} : vector<128x8xbf16>, vector<8x128xbf16>, vector<128x128xf32> -> vector<128x128xf32>
    %44 = arith.addf %38, %43 : vector<128x128xf32>
    %c2_51 = arith.constant 2 : index
    %c0_52 = arith.constant 0 : index
    %c0_53 = arith.constant 0 : index
    %45 = vector.load %arg8[%c2_51, %c0_52, %c0_53] : memref<16x18x8xbf16, #tpu.memory_space<vmem>>, vector<8x16x8xbf16>
    %46 = vector.shape_cast %45 : vector<8x16x8xbf16> to vector<128x8xbf16>
    %c6 = arith.constant 6 : index
    %c0_54 = arith.constant 0 : index
    %c0_55 = arith.constant 0 : index
    %47 = vector.load %arg4[%c6, %c0_54, %c0_55] : memref<9x8x128xbf16, #tpu.memory_space<vmem>>, vector<1x8x128xbf16>
    %48 = vector.shape_cast %47 : vector<1x8x128xbf16> to vector<8x128xbf16>
    %cst_56 = arith.constant dense<0.000000e+00> : vector<128x128xf32>
    %49 = tpu.matmul %46, %48, %cst_56 {dimension_numbers = #tpu.dot_dimension_numbers<[1], [0], [0], [1], [0, 0, 1, 1], [], []>} : vector<128x8xbf16>, vector<8x128xbf16>, vector<128x128xf32> -> vector<128x128xf32>
    %50 = arith.addf %44, %49 : vector<128x128xf32>
    %c2_57 = arith.constant 2 : index
    %c1_58 = arith.constant 1 : index
    %c0_59 = arith.constant 0 : index
    %51 = vector.load %arg8[%c2_57, %c1_58, %c0_59] : memref<16x18x8xbf16, #tpu.memory_space<vmem>>, vector<8x16x8xbf16>
    %52 = vector.shape_cast %51 : vector<8x16x8xbf16> to vector<128x8xbf16>
    %c7 = arith.constant 7 : index
    %c0_60 = arith.constant 0 : index
    %c0_61 = arith.constant 0 : index
    %53 = vector.load %arg4[%c7, %c0_60, %c0_61] : memref<9x8x128xbf16, #tpu.memory_space<vmem>>, vector<1x8x128xbf16>
    %54 = vector.shape_cast %53 : vector<1x8x128xbf16> to vector<8x128xbf16>
    %cst_62 = arith.constant dense<0.000000e+00> : vector<128x128xf32>
    %55 = tpu.matmul %52, %54, %cst_62 {dimension_numbers = #tpu.dot_dimension_numbers<[1], [0], [0], [1], [0, 0, 1, 1], [], []>} : vector<128x8xbf16>, vector<8x128xbf16>, vector<128x128xf32> -> vector<128x128xf32>
    %56 = arith.addf %50, %55 : vector<128x128xf32>
    %c2_63 = arith.constant 2 : index
    %c2_64 = arith.constant 2 : index
    %c0_65 = arith.constant 0 : index
    %57 = vector.load %arg8[%c2_63, %c2_64, %c0_65] : memref<16x18x8xbf16, #tpu.memory_space<vmem>>, vector<8x16x8xbf16>
    %58 = vector.shape_cast %57 : vector<8x16x8xbf16> to vector<128x8xbf16>
    %c8_66 = arith.constant 8 : index
    %c0_67 = arith.constant 0 : index
    %c0_68 = arith.constant 0 : index
    %59 = vector.load %arg4[%c8_66, %c0_67, %c0_68] : memref<9x8x128xbf16, #tpu.memory_space<vmem>>, vector<1x8x128xbf16>
    %60 = vector.shape_cast %59 : vector<1x8x128xbf16> to vector<8x128xbf16>
    %cst_69 = arith.constant dense<0.000000e+00> : vector<128x128xf32>
    %61 = tpu.matmul %58, %60, %cst_69 {dimension_numbers = #tpu.dot_dimension_numbers<[1], [0], [0], [1], [0, 0, 1, 1], [], []>} : vector<128x8xbf16>, vector<8x128xbf16>, vector<128x128xf32> -> vector<128x128xf32>
    %62 = arith.addf %56, %61 : vector<128x128xf32>
    %cst_70 = arith.constant dense<0.000000e+00> : vector<128xf32>
    %63 = vector.multi_reduction <add>, %62, %cst_70 [0] : vector<128x128xf32> to vector<128xf32>
    %64 = vector.shape_cast %63 : vector<128xf32> to vector<1x128xf32>
    %65 = arith.addf %6, %64 : vector<1x128xf32>
    %66 = arith.mulf %62, %62 : vector<128x128xf32>
    %cst_71 = arith.constant dense<0.000000e+00> : vector<128xf32>
    %67 = vector.multi_reduction <add>, %66, %cst_71 [0] : vector<128x128xf32> to vector<128xf32>
    %68 = vector.shape_cast %67 : vector<128xf32> to vector<1x128xf32>
    %69 = arith.addf %7, %68 : vector<1x128xf32>
    %70 = arith.truncf %62 : vector<128x128xf32> to vector<128x128xbf16>
    %c0_72 = arith.constant 0 : index
    %c0_73 = arith.constant 0 : index
    %c0_74 = arith.constant 0 : index
    %71 = vector.load %arg5[%c0_72, %c0_73, %c0_74] : memref<1x128x128xbf16, #tpu.memory_space<vmem>>, vector<1x128x128xbf16>
    %72 = vector.shape_cast %71 : vector<1x128x128xbf16> to vector<128x128xbf16>
    %73 = vector.shape_cast %70 : vector<128x128xbf16> to vector<1x128x128xbf16>
    tpu.vector_store %arg5[%c0_72, %c0_73, %c0_74], %73 {strides = array<i32>} : memref<1x128x128xbf16, #tpu.memory_space<vmem>>, vector<1x128x128xbf16>,
    %74 = vector.shape_cast %65 : vector<1x128xf32> to vector<1x1x1x128xf32>
    %c0_75 = arith.constant 0 : index
    %c0_76 = arith.constant 0 : index
    %c0_77 = arith.constant 0 : index
    %c0_78 = arith.constant 0 : index
    %75 = vector.load %arg6[%c0_75, %c0_76, %c0_77, %c0_78] : memref<1x1x1x128xf32, #tpu.memory_space<vmem>>, vector<1x1x1x128xf32>
    tpu.vector_store %arg6[%c0_75, %c0_76, %c0_77, %c0_78], %74 {strides = array<i32>} : memref<1x1x1x128xf32, #tpu.memory_space<vmem>>, vector<1x1x1x128xf32>,
    %76 = vector.shape_cast %69 : vector<1x128xf32> to vector<1x1x1x128xf32>
    %c0_79 = arith.constant 0 : index
    %c0_80 = arith.constant 0 : index
    %c0_81 = arith.constant 0 : index
    %c0_82 = arith.constant 0 : index
    %77 = vector.load %arg7[%c0_79, %c0_80, %c0_81, %c0_82] : memref<1x1x1x128xf32, #tpu.memory_space<vmem>>, vector<1x1x1x128xf32>
    tpu.vector_store %arg7[%c0_79, %c0_80, %c0_81, %c0_82], %76 {strides = array<i32>} : memref<1x1x1x128xf32, #tpu.memory_space<vmem>>, vector<1x1x1x128xf32>,
    return
  }
  func.func @transform_0(%arg0: i32, %arg1: i32) -> (i32, i32, i32, i32) {
    %c0_i32 = arith.constant 0 : i32
    %c0_i32_0 = arith.constant 0 : i32
    %c0_i32_1 = arith.constant 0 : i32
    return %arg0, %arg1, %c0_i32, %c0_i32_0 : i32, i32, i32, i32
  }
  func.func @transform_1(%arg0: i32, %arg1: i32) -> (i32, i32, i32, i32) {
    %c1_i32 = arith.constant 1 : i32
    %0 = arith.addi %arg1, %c1_i32 : i32
    %c1_i32_0 = arith.constant 1 : i32
    %1 = arith.muli %0, %c1_i32_0 : i32
    %c0_i32 = arith.constant 0 : i32
    %c0_i32_1 = arith.constant 0 : i32
    %c0_i32_2 = arith.constant 0 : i32
    return %arg0, %1, %c0_i32, %c0_i32_1 : i32, i32, i32, i32
  }
  func.func @transform_2(%arg0: i32, %arg1: i32) -> (i32, i32, i32) {
    %c0_i32 = arith.constant 0 : i32
    %c0_i32_0 = arith.constant 0 : i32
    %c0_i32_1 = arith.constant 0 : i32
    %c0_i32_2 = arith.constant 0 : i32
    return %c0_i32, %c0_i32_0, %c0_i32_1 : i32, i32, i32
  }
  func.func @transform_3(%arg0: i32, %arg1: i32) -> (i32, i32, i32) {
    %c0_i32 = arith.constant 0 : i32
    %c0_i32_0 = arith.constant 0 : i32
    return %arg0, %arg1, %c0_i32 : i32, i32, i32
  }
  func.func @transform_4(%arg0: i32, %arg1: i32) -> (i32, i32, i32, i32) {
    %c0_i32 = arith.constant 0 : i32
    %c0_i32_0 = arith.constant 0 : i32
    %c0_i32_1 = arith.constant 0 : i32
    return %arg0, %arg1, %c0_i32, %c0_i32_0 : i32, i32, i32, i32
  }
  func.func @transform_5(%arg0: i32, %arg1: i32) -> (i32, i32, i32, i32) {
    %c0_i32 = arith.constant 0 : i32
    %c0_i32_0 = arith.constant 0 : i32
    %c0_i32_1 = arith.constant 0 : i32
    return %arg0, %arg1, %c0_i32, %c0_i32_0 : i32, i32, i32, i32
  }
}

module attributes {stable_mosaic.version = 11 : i64} {
  func.func @_bn_swish_kernel(%arg0: i32, %arg1: memref<256x128xbf16, #tpu.memory_space<vmem>>, %arg2: memref<1x128xf32, #tpu.memory_space<vmem>>, %arg3: memref<1x128xf32, #tpu.memory_space<vmem>>, %arg4: memref<256x128xf32, #tpu.memory_space<vmem>>) attributes {dimension_semantics = [#tpu.dimension_semantics<parallel>], iteration_bounds = array<i64: 2>, scalar_prefetch = 0 : i64, scratch_operands = 0 : i64, tpu.core_type = #tpu.core_type<tc>, window_params = [{transform_indices = @transform_0, window_bounds = array<i64: 256, 128>}, {pipeline_mode = #tpu.pipeline_mode<synchronous>, transform_indices = @transform_1, window_bounds = array<i64: 1, 128>}, {pipeline_mode = #tpu.pipeline_mode<synchronous>, transform_indices = @transform_2, window_bounds = array<i64: 1, 128>}, {transform_indices = @transform_3, window_bounds = array<i64: 256, 128>}]} {
    %c0 = arith.constant 0 : index
    %c0_0 = arith.constant 0 : index
    %0 = vector.load %arg1[%c0, %c0_0] : memref<256x128xbf16, #tpu.memory_space<vmem>>, vector<256x128xbf16>
    %1 = arith.extf %0 : vector<256x128xbf16> to vector<256x128xf32>
    %c0_1 = arith.constant 0 : index
    %c0_2 = arith.constant 0 : index
    %2 = vector.load %arg2[%c0_1, %c0_2] : memref<1x128xf32, #tpu.memory_space<vmem>>, vector<1x128xf32>
    %3 = vector.broadcast %2 : vector<1x128xf32> to vector<256x128xf32>
    %4 = arith.mulf %1, %3 : vector<256x128xf32>
    %c0_3 = arith.constant 0 : index
    %c0_4 = arith.constant 0 : index
    %5 = vector.load %arg3[%c0_3, %c0_4] : memref<1x128xf32, #tpu.memory_space<vmem>>, vector<1x128xf32>
    %6 = vector.broadcast %5 : vector<1x128xf32> to vector<256x128xf32>
    %7 = arith.addf %4, %6 : vector<256x128xf32>
    %8 = arith.negf %7 : vector<256x128xf32>
    %9 = math.exp %8 : vector<256x128xf32>
    %cst = arith.constant 1.000000e+00 : f32
    %10 = vector.broadcast %cst : f32 to vector<256x128xf32>
    %11 = arith.addf %10, %9 : vector<256x128xf32>
    %12 = arith.divf %10, %11 : vector<256x128xf32>
    %13 = arith.mulf %7, %12 : vector<256x128xf32>
    %c0_5 = arith.constant 0 : index
    %c0_6 = arith.constant 0 : index
    %14 = vector.load %arg4[%c0_5, %c0_6] : memref<256x128xf32, #tpu.memory_space<vmem>>, vector<256x128xf32>
    tpu.vector_store %arg4[%c0_5, %c0_6], %13 {strides = array<i32>} : memref<256x128xf32, #tpu.memory_space<vmem>>, vector<256x128xf32>,
    return
  }
  func.func @transform_0(%arg0: i32) -> (i32, i32) {
    %c0_i32 = arith.constant 0 : i32
    %c0_i32_0 = arith.constant 0 : i32
    return %arg0, %c0_i32 : i32, i32
  }
  func.func @transform_1(%arg0: i32) -> (i32, i32) {
    %c0_i32 = arith.constant 0 : i32
    %c0_i32_0 = arith.constant 0 : i32
    %c0_i32_1 = arith.constant 0 : i32
    return %c0_i32, %c0_i32_0 : i32, i32
  }
  func.func @transform_2(%arg0: i32) -> (i32, i32) {
    %c0_i32 = arith.constant 0 : i32
    %c0_i32_0 = arith.constant 0 : i32
    %c0_i32_1 = arith.constant 0 : i32
    return %c0_i32, %c0_i32_0 : i32, i32
  }
  func.func @transform_3(%arg0: i32) -> (i32, i32) {
    %c0_i32 = arith.constant 0 : i32
    %c0_i32_0 = arith.constant 0 : i32
    return %arg0, %c0_i32 : i32, i32
  }
}

</mosaic_0001>

<llo_original>
// kernel: conv_bn_swish.3
$region0: #{conv_bn_swish.3}
  #allocation0 [shape = 'u32[]', space=smem, size = 0x4, offset = 0x4, fixed_abs, tag = 'smem constant byte address 0x4 - core index']
  #allocation1 [shape = 'u32[144,128]{1,0:T(1,128)}', space=vmem, size = 0x12000, scoped, tag = 'internal scratch']
  %s0 = inlined_call_operand.vmem [shape: bf16[512,128], index: 0, kind: input, shape index: {}]
  %s1 = inlined_call_operand.vmem [shape: f32[1,128], index: 1, kind: input, shape index: {}]
  %s2 = inlined_call_operand.vmem [shape: f32[1,128], index: 2, kind: input, shape index: {}]
  %s3 = inlined_call_operand.vmem [shape: f32[512,128], index: 3, kind: output, shape index: {}]
  %s4 = sld [smem:[#allocation0]]
  $region45: #{conv_bn_swish.3} parent=0
    _
  %s6 = ssub.s32 1, %s4
  %s7 = scalar_select 0, %s6, %s4
  loop: start=0, step=1, limit=4
  $region2: #{conv_bn_swish.3} parent=0 // loop_pre_header
    _
  $region3: #{conv_bn_swish.3} parent=0 // loop_header
    %s9 = sphi 0, %s13
    %p10 = scmp.ge.s32.totalorder %s9, 4
    %s19 = sphi 0, %s21
    %s22 = sphi 0, %s19
    %s23 = sphi 0, %s22
    %s39 = sphi 0, %s23
    %s43 = sphi 0, %s43
    %s45 = sphi 0, %s43
    %s46 = sphi 0, %s45
    %s60 = sphi 0, %s46
    %s64 = sphi 0, %s64
    %s66 = sphi 0, %s64
    %s67 = sphi 0, %s66
    %s81 = sphi 0, %s67
    %s87 = sphi 0, %s89
    %s90 = sphi 0, %s87
    %s91 = sphi 0, %s90
    %s107 = sphi 0, %s91
  $region4: #{conv_bn_swish.3} parent=0 // loop_header_branch
    %12 = sbr.rel (%p10) target = $region8
  $region5: #{conv_bn_swish.3} parent=0 // loop_body
    %s14 = ssub.s32 %s9, 1
    %s15 = ssub.s32 %s9, 2
    %s16 = sadd.s32 %s9, 1
    %s17 = ssub.s32 %s9, %s16
    %p18 = scmp.eq.s32.totalorder %s17, 0
    %s20 = sadd.s32 %s19, 1
    %s21 = scalar_select %p18, %s19, %s20
    %p24 = pneg %p18
    %p25 = scmp.eq.s32.totalorder %s9, 1
    %p26 = por %p24, %p25
    %p27 = scmp.ne.s32.totalorder %s19, %s22
    %p28 = scmp.eq.s32.totalorder %s9, 0
    %p29 = por %p27, %p28
    %p30 = scmp.ne.s32.totalorder %s19, %s22
    %p31 = scmp.eq.s32.totalorder %s14, 1
    %p32 = por %p30, %p31
    %p33 = scmp.ne.s32.totalorder %s22, %s23
    %p34 = scmp.eq.s32.totalorder %s14, 0
    %p35 = por %p33, %p34
    %p36 = scmp.ne.s32.totalorder %s22, %s23
    %p37 = scmp.eq.s32.totalorder %s15, 1
    %p38 = por %p36, %p37
    %p40 = scmp.ne.s32.totalorder %s23, %s39
    %p41 = scmp.eq.s32.totalorder %s15, 0
    %p42 = por %p40, %p41
    %s44 = sadd.s32 %s43, 1
    %p47 = scmp.eq.s32.totalorder %s9, 1
    %p48 = scmp.ne.s32.totalorder %s43, %s45
    %p49 = scmp.eq.s32.totalorder %s9, 0
    %p50 = por %p48, %p49
    %p51 = scmp.ne.s32.totalorder %s43, %s45
    %p52 = scmp.eq.s32.totalorder %s14, 1
    %p53 = por %p51, %p52
    %p54 = scmp.ne.s32.totalorder %s45, %s46
    %p55 = scmp.eq.s32.totalorder %s14, 0
    %p56 = por %p54, %p55
    %p57 = scmp.ne.s32.totalorder %s45, %s46
    %p58 = scmp.eq.s32.totalorder %s15, 1
    %p59 = por %p57, %p58
    %p61 = scmp.ne.s32.totalorder %s46, %s60
    %p62 = scmp.eq.s32.totalorder %s15, 0
    %p63 = por %p61, %p62
    %s65 = sadd.s32 %s64, 1
    %p68 = scmp.eq.s32.totalorder %s9, 1
    %p69 = scmp.ne.s32.totalorder %s64, %s66
    %p70 = scmp.eq.s32.totalorder %s9, 0
    %p71 = por %p69, %p70
    %p72 = scmp.ne.s32.totalorder %s64, %s66
    %p73 = scmp.eq.s32.totalorder %s14, 1
    %p74 = por %p72, %p73
    %p75 = scmp.ne.s32.totalorder %s66, %s67
    %p76 = scmp.eq.s32.totalorder %s14, 0
    %p77 = por %p75, %p76
    %p78 = scmp.ne.s32.totalorder %s66, %s67
    %p79 = scmp.eq.s32.totalorder %s15, 1
    %p80 = por %p78, %p79
    %p82 = scmp.ne.s32.totalorder %s67, %s81
    %p83 = scmp.eq.s32.totalorder %s15, 0
    %p84 = por %p82, %p83
    %s85 = ssub.s32 %s9, %s16
    %p86 = scmp.eq.s32.totalorder %s85, 0
    %s88 = sadd.s32 %s87, 1
    %s89 = scalar_select %p86, %s87, %s88
    %p92 = pneg %p86
    %p93 = scmp.eq.s32.totalorder %s9, 1
    %p94 = por %p92, %p93
    %p95 = scmp.ne.s32.totalorder %s87, %s90
    %p96 = scmp.eq.s32.totalorder %s9, 0
    %p97 = por %p95, %p96
    %p98 = scmp.ne.s32.totalorder %s87, %s90
    %p99 = scmp.eq.s32.totalorder %s14, 1
    %p100 = por %p98, %p99
    %p101 = scmp.ne.s32.totalorder %s90, %s91
    %p102 = scmp.eq.s32.totalorder %s14, 0
    %p103 = por %p101, %p102
    %p104 = scmp.ne.s32.totalorder %s90, %s91
    %p105 = scmp.eq.s32.totalorder %s15, 1
    %p106 = por %p104, %p105
    %p108 = scmp.ne.s32.totalorder %s91, %s107
    %p109 = scmp.eq.s32.totalorder %s15, 0
    %p110 = por %p108, %p109
    %p111 = scmp.le.s32.totalorder 1, %s9
    %p112 = scmp.lt.s32.totalorder %s9, 3
    %p113 = pnand %p111, %p112
    %p114 = pneg %p113
    // Predicated region
    $region9: #{conv_bn_swish.3} parent=5 // pred_check
      _
    $region10: #{conv_bn_swish.3} parent=5 // pred_check_branch
      %116 = sbr.rel (%p113) target = $region12
    $region11: #{conv_bn_swish.3} parent=5 // pred_region
      %s117 = ssub.s32 %s9, 1
      // Predicated region
      $region13: #{conv_bn_swish.3} parent=11 // pred_check
        %p118 = pneg %p56
      $region14: #{conv_bn_swish.3} parent=11 // pred_check_branch
        %120 = sbr.rel (%p118) target = $region16
      $region15: #{conv_bn_swish.3} parent=11 // pred_region
        _
      $region16: #{conv_bn_swish.3} parent=11 // pred_fallthru
        _
      // Predicated region
      $region17: #{conv_bn_swish.3} parent=11 // pred_check
        %p121 = pneg %p77
      $region18: #{conv_bn_swish.3} parent=11 // pred_check_branch
        %123 = sbr.rel (%p121) target = $region20
      $region19: #{conv_bn_swish.3} parent=11 // pred_region
        _
      $region20: #{conv_bn_swish.3} parent=11 // pred_fallthru
        _
    $region12: #{conv_bn_swish.3} parent=5 // pred_fallthru
      _
    %p124 = scmp.lt.s32.totalorder %s9, 2
    // Predicated region
    $region21: #{conv_bn_swish.3} parent=5 // pred_check
      %p125 = pneg %p124
    $region22: #{conv_bn_swish.3} parent=5 // pred_check_branch
      %127 = sbr.rel (%p125) target = $region24
    $region23: #{conv_bn_swish.3} parent=5 // pred_region
      // Predicated region
      $region25: #{conv_bn_swish.3} parent=23 // pred_check
        %p128 = pneg %p29
      $region26: #{conv_bn_swish.3} parent=23 // pred_check_branch
        %130 = sbr.rel (%p128) target = $region28
      $region27: #{conv_bn_swish.3} parent=23 // pred_region
        %s131 = smul.u32 32, %s9
        %p132 = scmp.lt.s32.totalorder %s131, 63
        %s133 = scalar_select %p132, %s131, 63
        %s134 = smul.addr %s133, 4
        %s135 = scalar_lea.vmem %s0, %s134
        %s136 = smul.u32 32, %s9
      $region28: #{conv_bn_swish.3} parent=23 // pred_fallthru
        _
    $region24: #{conv_bn_swish.3} parent=5 // pred_fallthru
      _
    %p137 = scmp.le.s32.totalorder 1, %s9
    %p138 = scmp.lt.s32.totalorder %s9, 3
    %p139 = pnand %p137, %p138
    %p140 = pneg %p139
    // Predicated region
    $region29: #{conv_bn_swish.3} parent=5 // pred_check
      _
    $region30: #{conv_bn_swish.3} parent=5 // pred_check_branch
      %142 = sbr.rel (%p139) target = $region32
    $region31: #{conv_bn_swish.3} parent=5 // pred_region
      %s143 = ssub.s32 %s9, 1
      %s144 = smul.u32 32, %s14
      %p145 = scmp.lt.s32.totalorder %s144, 63
      %s146 = scalar_select %p145, %s144, 63
      %s147 = smul.addr %s146, 4
      %s148 = scalar_lea.vmem %s0, %s147
      %p149 = pneg %p35
      %p150 = pneg %p32
      %p151 = pneg %p56
      %p152 = pneg %p53
      %p153 = pneg %p77
      %p154 = pneg %p74
      %p155 = pneg %p103
      %p156 = pneg %p100
      %s157 = smul.u32 32, %s14
      %p158 = scmp.lt.s32.totalorder %s157, 63
      %s159 = scalar_select %p158, %s157, 63
      %s160 = smul.addr %s159, 8
      %s161 = scalar_lea.vmem %s3, %s160
      %s162 = smul.u32 32, %s14
      %p163 = scmp.lt.s32.totalorder %s162, 63
      %s164 = scalar_select %p163, %s162, 63
      %s165 = smul.addr %s164, 4
      %s166 = scalar_lea.vmem %s0, %s165
      %s167 = smul.u32 32, %s14
      %s168 = smul.u32 32, %s14
      %p169 = scmp.lt.s32.totalorder %s168, 63
      %s170 = scalar_select %p169, %s168, 63
      %s171 = smul.addr %s170, 8
      %s172 = scalar_lea.vmem %s3, %s171
      %s173 = smul.u32 32, %s14
      %v174 = vld [vmem:[%s166] sm:$0xf]
      %v175 = vld [vmem:[%s166 + $0x4] sm:$0xf]
      %v176 = vld [vmem:[%s166 + $0x8] sm:$0xf]
      %v177 = vld [vmem:[%s166 + $0xc] sm:$0xf]
      %v178 = vld [vmem:[%s166 + $0x10] sm:$0xf]
      %v179 = vld [vmem:[%s166 + $0x14] sm:$0xf]
      %v180 = vld [vmem:[%s166 + $0x18] sm:$0xf]
      %v181 = vld [vmem:[%s166 + $0x1c] sm:$0xf]
      %v182 = vld [vmem:[%s166 + $0x20] sm:$0xf]
      %v183 = vld [vmem:[%s166 + $0x24] sm:$0xf]
      %v184 = vld [vmem:[%s166 + $0x28] sm:$0xf]
      %v185 = vld [vmem:[%s166 + $0x2c] sm:$0xf]
      %v186 = vld [vmem:[%s166 + $0x30] sm:$0xf]
      %v187 = vld [vmem:[%s166 + $0x34] sm:$0xf]
      %v188 = vld [vmem:[%s166 + $0x38] sm:$0xf]
      %v189 = vld [vmem:[%s166 + $0x3c] sm:$0xf]
      %v190 = vld [vmem:[%s166 + $0x40] sm:$0xf]
      %v191 = vld [vmem:[%s166 + $0x44] sm:$0xf]
      %v192 = vld [vmem:[%s166 + $0x48] sm:$0xf]
      %v193 = vld [vmem:[%s166 + $0x4c] sm:$0xf]
      %v194 = vld [vmem:[%s166 + $0x50] sm:$0xf]
      %v195 = vld [vmem:[%s166 + $0x54] sm:$0xf]
      %v196 = vld [vmem:[%s166 + $0x58] sm:$0xf]
      %v197 = vld [vmem:[%s166 + $0x5c] sm:$0xf]
      %v198 = vld [vmem:[%s166 + $0x60] sm:$0xf]
      %v199 = vld [vmem:[%s166 + $0x64] sm:$0xf]
      %v200 = vld [vmem:[%s166 + $0x68] sm:$0xf]
      %v201 = vld [vmem:[%s166 + $0x6c] sm:$0xf]
      %v202 = vld [vmem:[%s166 + $0x70] sm:$0xf]
      %v203 = vld [vmem:[%s166 + $0x74] sm:$0xf]
      %v204 = vld [vmem:[%s166 + $0x78] sm:$0xf]
      %v205 = vld [vmem:[%s166 + $0x7c] sm:$0xf]
      %v206 = vunpack.c.l.bf16 %v174
      %v207 = vunpack.c.l.bf16 %v175
      %v208 = vunpack.c.l.bf16 %v176
      %v209 = vunpack.c.l.bf16 %v177
      %v210 = vunpack.c.l.bf16 %v178
      %v211 = vunpack.c.l.bf16 %v179
      %v212 = vunpack.c.l.bf16 %v180
      %v213 = vunpack.c.l.bf16 %v181
      %v214 = vunpack.c.l.bf16 %v182
      %v215 = vunpack.c.l.bf16 %v183
      %v216 = vunpack.c.l.bf16 %v184
      %v217 = vunpack.c.l.bf16 %v185
      %v218 = vunpack.c.l.bf16 %v186
      %v219 = vunpack.c.l.bf16 %v187
      %v220 = vunpack.c.l.bf16 %v188
      %v221 = vunpack.c.l.bf16 %v189
      %v222 = vunpack.c.l.bf16 %v190
      %v223 = vunpack.c.l.bf16 %v191
      %v224 = vunpack.c.l.bf16 %v192
      %v225 = vunpack.c.l.bf16 %v193
      %v226 = vunpack.c.l.bf16 %v194
      %v227 = vunpack.c.l.bf16 %v195
      %v228 = vunpack.c.l.bf16 %v196
      %v229 = vunpack.c.l.bf16 %v197
      %v230 = vunpack.c.l.bf16 %v198
      %v231 = vunpack.c.l.bf16 %v199
      %v232 = vunpack.c.l.bf16 %v200
      %v233 = vunpack.c.l.bf16 %v201
      %v234 = vunpack.c.l.bf16 %v202
      %v235 = vunpack.c.l.bf16 %v203
      %v236 = vunpack.c.l.bf16 %v204
      %v237 = vunpack.c.l.bf16 %v205
      %v238 = vld [vmem:[%s1] sm:$0x1]
      %v240 = vlaneseq
      %v241 = vshrl.u32 %v240, 7
      %v242 = vsub.s32 0, %v241
      %v243 = vrot.slane %v238, %v242
      %v245 = vmul.f32 %v206, %v243
      %v246 = vmul.f32 %v207, %v243
      %v247 = vmul.f32 %v208, %v243
      %v248 = vmul.f32 %v209, %v243
      %v249 = vmul.f32 %v210, %v243
      %v250 = vmul.f32 %v211, %v243
      %v251 = vmul.f32 %v212, %v243
      %v252 = vmul.f32 %v213, %v243
      %v253 = vmul.f32 %v214, %v243
      %v254 = vmul.f32 %v215, %v243
      %v255 = vmul.f32 %v216, %v243
      %v256 = vmul.f32 %v217, %v243
      %v257 = vmul.f32 %v218, %v243
      %v258 = vmul.f32 %v219, %v243
      %v259 = vmul.f32 %v220, %v243
      %v260 = vmul.f32 %v221, %v243
      %v261 = vmul.f32 %v222, %v243
      %v262 = vmul.f32 %v223, %v243
      %v263 = vmul.f32 %v224, %v243
      %v264 = vmul.f32 %v225, %v243
      %v265 = vmul.f32 %v226, %v243
      %v266 = vmul.f32 %v227, %v243
      %v267 = vmul.f32 %v228, %v243
      %v268 = vmul.f32 %v229, %v243
      %v269 = vmul.f32 %v230, %v243
      %v270 = vmul.f32 %v231, %v243
      %v271 = vmul.f32 %v232, %v243
      %v272 = vmul.f32 %v233, %v243
      %v273 = vmul.f32 %v234, %v243
      %v274 = vmul.f32 %v235, %v243
      %v275 = vmul.f32 %v236, %v243
      %v276 = vmul.f32 %v237, %v243
      %v277 = vld [vmem:[%s2] sm:$0x1]
      %v279 = vlaneseq
      %v280 = vshrl.u32 %v279, 7
      %v281 = vsub.s32 0, %v280
      %v282 = vrot.slane %v277, %v281
      %v284 = vadd.f32 %v245, %v282
      %v285 = vadd.f32 %v246, %v282
      %v286 = vadd.f32 %v247, %v282
      %v287 = vadd.f32 %v248, %v282
      %v288 = vadd.f32 %v249, %v282
      %v289 = vadd.f32 %v250, %v282
      %v290 = vadd.f32 %v251, %v282
      %v291 = vadd.f32 %v252, %v282
      %v292 = vadd.f32 %v253, %v282
      %v293 = vadd.f32 %v254, %v282
      %v294 = vadd.f32 %v255, %v282
      %v295 = vadd.f32 %v256, %v282
      %v296 = vadd.f32 %v257, %v282
      %v297 = vadd.f32 %v258, %v282
      %v298 = vadd.f32 %v259, %v282
      %v299 = vadd.f32 %v260, %v282
      %v300 = vadd.f32 %v261, %v282
      %v301 = vadd.f32 %v262, %v282
      %v302 = vadd.f32 %v263, %v282
      %v303 = vadd.f32 %v264, %v282
      %v304 = vadd.f32 %v265, %v282
      %v305 = vadd.f32 %v266, %v282
      %v306 = vadd.f32 %v267, %v282
      %v307 = vadd.f32 %v268, %v282
      %v308 = vadd.f32 %v269, %v282
      %v309 = vadd.f32 %v270, %v282
      %v310 = vadd.f32 %v271, %v282
      %v311 = vadd.f32 %v272, %v282
      %v312 = vadd.f32 %v273, %v282
      %v313 = vadd.f32 %v274, %v282
      %v314 = vadd.f32 %v275, %v282
      %v315 = vadd.f32 %v276, %v282
      %v316 = vxor.u32 %v284, 2147483648
      %v317 = vxor.u32 %v285, 2147483648
      %v318 = vxor.u32 %v286, 2147483648
      %v319 = vxor.u32 %v287, 2147483648
      %v320 = vxor.u32 %v288, 2147483648
      %v321 = vxor.u32 %v289, 2147483648
      %v322 = vxor.u32 %v290, 2147483648
      %v323 = vxor.u32 %v291, 2147483648
      %v324 = vxor.u32 %v292, 2147483648
      %v325 = vxor.u32 %v293, 2147483648
      %v326 = vxor.u32 %v294, 2147483648
      %v327 = vxor.u32 %v295, 2147483648
      %v328 = vxor.u32 %v296, 2147483648
      %v329 = vxor.u32 %v297, 2147483648
      %v330 = vxor.u32 %v298, 2147483648
      %v331 = vxor.u32 %v299, 2147483648
      %v332 = vxor.u32 %v300, 2147483648
      %v333 = vxor.u32 %v301, 2147483648
      %v334 = vxor.u32 %v302, 2147483648
      %v335 = vxor.u32 %v303, 2147483648
      %v336 = vxor.u32 %v304, 2147483648
      %v337 = vxor.u32 %v305, 2147483648
      %v338 = vxor.u32 %v306, 2147483648
      %v339 = vxor.u32 %v307, 2147483648
      %v340 = vxor.u32 %v308, 2147483648
      %v341 = vxor.u32 %v309, 2147483648
      %v342 = vxor.u32 %v310, 2147483648
      %v343 = vxor.u32 %v311, 2147483648
      %v344 = vxor.u32 %v312, 2147483648
      %v345 = vxor.u32 %v313, 2147483648
      %v346 = vxor.u32 %v314, 2147483648
      %v347 = vxor.u32 %v315, 2147483648
      %v348 = vmul.f32 %v316, 1.442695
      %v349 = vpow.pop %v348
      %v350 = vmul.f32 %v317, 1.442695
      %v351 = vpow.pop %v350
      %v352 = vmul.f32 %v318, 1.442695
      %v353 = vpow.pop %v352
      %v354 = vmul.f32 %v319, 1.442695
      %v355 = vpow.pop %v354
      %v356 = vmul.f32 %v320, 1.442695
      %v357 = vpow.pop %v356
      %v358 = vmul.f32 %v321, 1.442695
      %v359 = vpow.pop %v358
      %v360 = vmul.f32 %v322, 1.442695
      %v361 = vpow.pop %v360
      %v362 = vmul.f32 %v323, 1.442695
      %v363 = vpow.pop %v362
      %v364 = vmul.f32 %v324, 1.442695
      %v365 = vpow.pop %v364
      %v366 = vmul.f32 %v325, 1.442695
      %v367 = vpow.pop %v366
      %v368 = vmul.f32 %v326, 1.442695
      %v369 = vpow.pop %v368
      %v370 = vmul.f32 %v327, 1.442695
      %v371 = vpow.pop %v370
      %v372 = vmul.f32 %v328, 1.442695
      %v373 = vpow.pop %v372
      %v374 = vmul.f32 %v329, 1.442695
      %v375 = vpow.pop %v374
      %v376 = vmul.f32 %v330, 1.442695
      %v377 = vpow.pop %v376
      %v378 = vmul.f32 %v331, 1.442695
      %v379 = vpow.pop %v378
      %v380 = vmul.f32 %v332, 1.442695
      %v381 = vpow.pop %v380
      %v382 = vmul.f32 %v333, 1.442695
      %v383 = vpow.pop %v382
      %v384 = vmul.f32 %v334, 1.442695
      %v385 = vpow.pop %v384
      %v386 = vmul.f32 %v335, 1.442695
      %v387 = vpow.pop %v386
      %v388 = vmul.f32 %v336, 1.442695
      %v389 = vpow.pop %v388
      %v390 = vmul.f32 %v337, 1.442695
      %v391 = vpow.pop %v390
      %v392 = vmul.f32 %v338, 1.442695
      %v393 = vpow.pop %v392
      %v394 = vmul.f32 %v339, 1.442695
      %v395 = vpow.pop %v394
      %v396 = vmul.f32 %v340, 1.442695
      %v397 = vpow.pop %v396
      %v398 = vmul.f32 %v341, 1.442695
      %v399 = vpow.pop %v398
      %v400 = vmul.f32 %v342, 1.442695
      %v401 = vpow.pop %v400
      %v402 = vmul.f32 %v343, 1.442695
      %v403 = vpow.pop %v402
      %v404 = vmul.f32 %v344, 1.442695
      %v405 = vpow.pop %v404
      %v406 = vmul.f32 %v345, 1.442695
      %v407 = vpow.pop %v406
      %v408 = vmul.f32 %v346, 1.442695
      %v409 = vpow.pop %v408
      %v410 = vmul.f32 %v347, 1.442695
      %v411 = vpow.pop %v410
      %v412 = vadd.f32 %v349, 1.0
      %v413 = vadd.f32 %v351, 1.0
      %v414 = vadd.f32 %v353, 1.0
      %v415 = vadd.f32 %v355, 1.0
      %v416 = vadd.f32 %v357, 1.0
      %v417 = vadd.f32 %v359, 1.0
      %v418 = vadd.f32 %v361, 1.0
      %v419 = vadd.f32 %v363, 1.0
      %v420 = vadd.f32 %v365, 1.0
      %v421 = vadd.f32 %v367, 1.0
      %v422 = vadd.f32 %v369, 1.0
      %v423 = vadd.f32 %v371, 1.0
      %v424 = vadd.f32 %v373, 1.0
      %v425 = vadd.f32 %v375, 1.0
      %v426 = vadd.f32 %v377, 1.0
      %v427 = vadd.f32 %v379, 1.0
      %v428 = vadd.f32 %v381, 1.0
      %v429 = vadd.f32 %v383, 1.0
      %v430 = vadd.f32 %v385, 1.0
      %v431 = vadd.f32 %v387, 1.0
      %v432 = vadd.f32 %v389, 1.0
      %v433 = vadd.f32 %v391, 1.0
      %v434 = vadd.f32 %v393, 1.0
      %v435 = vadd.f32 %v395, 1.0
      %v436 = vadd.f32 %v397, 1.0
      %v437 = vadd.f32 %v399, 1.0
      %v438 = vadd.f32 %v401, 1.0
      %v439 = vadd.f32 %v403, 1.0
      %v440 = vadd.f32 %v405, 1.0
      %v441 = vadd.f32 %v407, 1.0
      %v442 = vadd.f32 %v409, 1.0
      %v443 = vadd.f32 %v411, 1.0
      %v444 = vrcp.pop %v412
      %v445 = vmul.f32 1.0, %v444
      %v446 = vrcp.pop %v413
      %v447 = vmul.f32 1.0, %v446
      %v448 = vrcp.pop %v414
      %v449 = vmul.f32 1.0, %v448
      %v450 = vrcp.pop %v415
      %v451 = vmul.f32 1.0, %v450
      %v452 = vrcp.pop %v416
      %v453 = vmul.f32 1.0, %v452
      %v454 = vrcp.pop %v417
      %v455 = vmul.f32 1.0, %v454
      %v456 = vrcp.pop %v418
      %v457 = vmul.f32 1.0, %v456
      %v458 = vrcp.pop %v419
      %v459 = vmul.f32 1.0, %v458
      %v460 = vrcp.pop %v420
      %v461 = vmul.f32 1.0, %v460
      %v462 = vrcp.pop %v421
      %v463 = vmul.f32 1.0, %v462
      %v464 = vrcp.pop %v422
      %v465 = vmul.f32 1.0, %v464
      %v466 = vrcp.pop %v423
      %v467 = vmul.f32 1.0, %v466
      %v468 = vrcp.pop %v424
      %v469 = vmul.f32 1.0, %v468
      %v470 = vrcp.pop %v425
      %v471 = vmul.f32 1.0, %v470
      %v472 = vrcp.pop %v426
      %v473 = vmul.f32 1.0, %v472
      %v474 = vrcp.pop %v427
      %v475 = vmul.f32 1.0, %v474
      %v476 = vrcp.pop %v428
      %v477 = vmul.f32 1.0, %v476
      %v478 = vrcp.pop %v429
      %v479 = vmul.f32 1.0, %v478
      %v480 = vrcp.pop %v430
      %v481 = vmul.f32 1.0, %v480
      %v482 = vrcp.pop %v431
      %v483 = vmul.f32 1.0, %v482
      %v484 = vrcp.pop %v432
      %v485 = vmul.f32 1.0, %v484
      %v486 = vrcp.pop %v433
      %v487 = vmul.f32 1.0, %v486
      %v488 = vrcp.pop %v434
      %v489 = vmul.f32 1.0, %v488
      %v490 = vrcp.pop %v435
      %v491 = vmul.f32 1.0, %v490
      %v492 = vrcp.pop %v436
      %v493 = vmul.f32 1.0, %v492
      %v494 = vrcp.pop %v437
      %v495 = vmul.f32 1.0, %v494
      %v496 = vrcp.pop %v438
      %v497 = vmul.f32 1.0, %v496
      %v498 = vrcp.pop %v439
      %v499 = vmul.f32 1.0, %v498
      %v500 = vrcp.pop %v440
      %v501 = vmul.f32 1.0, %v500
      %v502 = vrcp.pop %v441
      %v503 = vmul.f32 1.0, %v502
      %v504 = vrcp.pop %v442
      %v505 = vmul.f32 1.0, %v504
      %v506 = vrcp.pop %v443
      %v507 = vmul.f32 1.0, %v506
      %v508 = vmul.f32 %v284, %v445
      %v509 = vmul.f32 %v285, %v447
      %v510 = vmul.f32 %v286, %v449
      %v511 = vmul.f32 %v287, %v451
      %v512 = vmul.f32 %v288, %v453
      %v513 = vmul.f32 %v289, %v455
      %v514 = vmul.f32 %v290, %v457
      %v515 = vmul.f32 %v291, %v459
      %v516 = vmul.f32 %v292, %v461
      %v517 = vmul.f32 %v293, %v463
      %v518 = vmul.f32 %v294, %v465
      %v519 = vmul.f32 %v295, %v467
      %v520 = vmul.f32 %v296, %v469
      %v521 = vmul.f32 %v297, %v471
      %v522 = vmul.f32 %v298, %v473
      %v523 = vmul.f32 %v299, %v475
      %v524 = vmul.f32 %v300, %v477
      %v525 = vmul.f32 %v301, %v479
      %v526 = vmul.f32 %v302, %v481
      %v527 = vmul.f32 %v303, %v483
      %v528 = vmul.f32 %v304, %v485
      %v529 = vmul.f32 %v305, %v487
      %v530 = vmul.f32 %v306, %v489
      %v531 = vmul.f32 %v307, %v491
      %v532 = vmul.f32 %v308, %v493
      %v533 = vmul.f32 %v309, %v495
      %v534 = vmul.f32 %v310, %v497
      %v535 = vmul.f32 %v311, %v499
      %v536 = vmul.f32 %v312, %v501
      %v537 = vmul.f32 %v313, %v503
      %v538 = vmul.f32 %v314, %v505
      %v539 = vmul.f32 %v315, %v507
      %540 = vst [vmem:[%s172] sm:$0xff] %v508
      %541 = vst [vmem:[%s172 + $0x8] sm:$0xff] %v509
      %542 = vst [vmem:[%s172 + $0x10] sm:$0xff] %v510
      %543 = vst [vmem:[%s172 + $0x18] sm:$0xff] %v511
      %544 = vst [vmem:[%s172 + $0x20] sm:$0xff] %v512
      %545 = vst [vmem:[%s172 + $0x28] sm:$0xff] %v513
      %546 = vst [vmem:[%s172 + $0x30] sm:$0xff] %v514
      %547 = vst [vmem:[%s172 + $0x38] sm:$0xff] %v515
      %548 = vst [vmem:[%s172 + $0x40] sm:$0xff] %v516
      %549 = vst [vmem:[%s172 + $0x48] sm:$0xff] %v517
      %550 = vst [vmem:[%s172 + $0x50] sm:$0xff] %v518
      %551 = vst [vmem:[%s172 + $0x58] sm:$0xff] %v519
      %552 = vst [vmem:[%s172 + $0x60] sm:$0xff] %v520
      %553 = vst [vmem:[%s172 + $0x68] sm:$0xff] %v521
      %554 = vst [vmem:[%s172 + $0x70] sm:$0xff] %v522
      %555 = vst [vmem:[%s172 + $0x78] sm:$0xff] %v523
      %556 = vst [vmem:[%s172 + $0x80] sm:$0xff] %v524
      %557 = vst [vmem:[%s172 + $0x88] sm:$0xff] %v525
      %558 = vst [vmem:[%s172 + $0x90] sm:$0xff] %v526
      %559 = vst [vmem:[%s172 + $0x98] sm:$0xff] %v527
      %560 = vst [vmem:[%s172 + $0xa0] sm:$0xff] %v528
      %561 = vst [vmem:[%s172 + $0xa8] sm:$0xff] %v529
      %562 = vst [vmem:[%s172 + $0xb0] sm:$0xff] %v530
      %563 = vst [vmem:[%s172 + $0xb8] sm:$0xff] %v531
      %564 = vst [vmem:[%s172 + $0xc0] sm:$0xff] %v532
      %565 = vst [vmem:[%s172 + $0xc8] sm:$0xff] %v533
      %566 = vst [vmem:[%s172 + $0xd0] sm:$0xff] %v534
      %567 = vst [vmem:[%s172 + $0xd8] sm:$0xff] %v535
      %568 = vst [vmem:[%s172 + $0xe0] sm:$0xff] %v536
      %569 = vst [vmem:[%s172 + $0xe8] sm:$0xff] %v537
      %570 = vst [vmem:[%s172 + $0xf0] sm:$0xff] %v538
      %571 = vst [vmem:[%s172 + $0xf8] sm:$0xff] %v539
      %s572 = smul.u32 32, %s14
      %p573 = scmp.lt.s32.totalorder %s572, 63
      %s574 = scalar_select %p573, %s572, 63
      %s575 = smul.addr %s574, 8
      %s576 = scalar_lea.vmem %s3, %s575
      // Predicated region
      $region33: #{conv_bn_swish.3} parent=31 // pred_check
        %p577 = pneg %p100
      $region34: #{conv_bn_swish.3} parent=31 // pred_check_branch
        %579 = sbr.rel (%p577) target = $region36
      $region35: #{conv_bn_swish.3} parent=31 // pred_region
        %s580 = smul.u32 32, %s14
      $region36: #{conv_bn_swish.3} parent=31 // pred_fallthru
        _
    $region32: #{conv_bn_swish.3} parent=5 // pred_fallthru
      _
    %p581 = scmp.le.s32.totalorder 2, %s9
    // Predicated region
    $region37: #{conv_bn_swish.3} parent=5 // pred_check
      %p582 = pneg %p581
    $region38: #{conv_bn_swish.3} parent=5 // pred_check_branch
      %584 = sbr.rel (%p582) target = $region40
    $region39: #{conv_bn_swish.3} parent=5 // pred_region
      %s585 = ssub.s32 %s9, 2
      // Predicated region
      $region41: #{conv_bn_swish.3} parent=39 // pred_check
        %p586 = pneg %p106
      $region42: #{conv_bn_swish.3} parent=39 // pred_check_branch
        %588 = sbr.rel (%p586) target = $region44
      $region43: #{conv_bn_swish.3} parent=39 // pred_region
        %s589 = smul.u32 32, %s15
        %p590 = scmp.lt.s32.totalorder %s589, 63
        %s591 = scalar_select %p590, %s589, 63
        %s592 = smul.addr %s591, 8
        %s593 = scalar_lea.vmem %s3, %s592
      $region44: #{conv_bn_swish.3} parent=39 // pred_fallthru
        _
    $region40: #{conv_bn_swish.3} parent=5 // pred_fallthru
      _
  $region6: #{conv_bn_swish.3} parent=0 // loop_footer
    %s13 = sadd.s32 1, %s9
  $region7: #{conv_bn_swish.3} parent=0 // loop_footer_branch
    %8 = sbr.rel target = $region3
  $region8: #{conv_bn_swish.3} parent=0 // loop_exit
    _

// kernel: conv_bn_swish.2
$region0: #{conv_bn_swish.2}
  #allocation0 [shape = 'u32[]', space=smem, size = 0x4, offset = 0x4, fixed_abs, tag = 'smem constant byte address 0x4 - core index']
  #allocation1 [shape = 'u32[144,128]{1,0:T(1,128)}', space=vmem, size = 0x12000, scoped, tag = 'internal scratch']
  #allocation2 [shape = 'bf16[16,18,8]{2,1,0:T(8,128)(2,1)}', space=vmem, size = 0x18000, scoped, tag = 'scratch operand']
  %s0 = inlined_call_operand.vmem [shape: bf16[2,24,18,8], index: 0, kind: input, shape index: {}, may-alias: {0,1}]
  %s1 = inlined_call_operand.vmem [shape: bf16[2,24,18,8], index: 1, kind: input, shape index: {}, may-alias: {0,1}]
  %s2 = inlined_call_operand.vmem [shape: bf16[9,8,128], index: 2, kind: input, shape index: {}]
  %s3 = inlined_call_operand.vmem [shape: bf16[2,256,128], index: 3, kind: output, shape index: {0}]
  %s4 = inlined_call_operand.vmem [shape: f32[2,2,1,128], index: 4, kind: output, shape index: {1}]
  %s5 = inlined_call_operand.vmem [shape: f32[2,2,1,128], index: 5, kind: output, shape index: {2}]
  %6 = xla_tuple %s3, %s4, %s5
  %s7 = sld [smem:[#allocation0]]
  $region61: #{conv_bn_swish.2} parent=0
    _
  %s9 = ssub.s32 1, %s7
  %s10 = scalar_select 0, %s9, %s7
  loop: start=0, step=1, limit=6
  $region2: #{conv_bn_swish.2} parent=0 // loop_pre_header
    _
  $region3: #{conv_bn_swish.2} parent=0 // loop_header
    %s12 = sphi 0, %s16
    %p13 = scmp.ge.s32.totalorder %s12, 6
    %s19 = sphi 0, %s31
    %s20 = sphi 0, %s27
    %s21 = sphi 0, %s19
    %s22 = sphi 0, %s20
    %s23 = sphi 0, %s21
    %s24 = sphi 0, %s22
    %s36 = sphi 0, %s38
    %s39 = sphi 0, %s36
    %s40 = sphi 0, %s39
    %s56 = sphi 0, %s40
    %s66 = sphi 0, %s68
    %s69 = sphi 0, %s66
    %s70 = sphi 0, %s69
    %s86 = sphi 0, %s70
    %s90 = sphi 0, %s90
    %s92 = sphi 0, %s90
    %s93 = sphi 0, %s92
    %s107 = sphi 0, %s93
    %s115 = sphi 0, %s117
    %s118 = sphi 0, %s115
    %s119 = sphi 0, %s118
    %s135 = sphi 0, %s119
    %s143 = sphi 0, %s145
    %s146 = sphi 0, %s143
    %s147 = sphi 0, %s146
    %s163 = sphi 0, %s147
    %s171 = sphi 0, %s173
    %s174 = sphi 0, %s171
    %s175 = sphi 0, %s174
    %s191 = sphi 0, %s175
  $region4: #{conv_bn_swish.2} parent=0 // loop_header_branch
    %15 = sbr.rel (%p13) target = $region8
  $region5: #{conv_bn_swish.2} parent=0 // loop_body
    %s17 = ssub.s32 %s12, 1
    %s18 = ssub.s32 %s12, 2
    %s25 = sadd.s32 1, %s20
    %p26 = scmp.ge.s32.totalorder %s25, 2
    %s27 = scalar_select %p26, 0, %s25
    %s28 = sadd.s32 1, %s19
    %s29 = scalar_select %p26, %s28, %s19
    %p30 = scmp.ge.s32.totalorder %s29, 2
    %s31 = scalar_select %p30, 0, %s29
    %s32 = ssub.s32 %s19, %s31
    %s33 = ssub.s32 %s20, %s27
    %s34 = sor.u32 %s32, %s33
    %p35 = scmp.eq.s32.totalorder %s34, 0
    %s37 = sadd.s32 %s36, 1
    %s38 = scalar_select %p35, %s36, %s37
    %p41 = pneg %p35
    %p42 = scmp.eq.s32.totalorder %s12, 3
    %p43 = por %p41, %p42
    %p44 = scmp.ne.s32.totalorder %s36, %s39
    %p45 = scmp.eq.s32.totalorder %s12, 0
    %p46 = por %p44, %p45
    %p47 = scmp.ne.s32.totalorder %s36, %s39
    %p48 = scmp.eq.s32.totalorder %s17, 3
    %p49 = por %p47, %p48
    %p50 = scmp.ne.s32.totalorder %s39, %s40
    %p51 = scmp.eq.s32.totalorder %s17, 0
    %p52 = por %p50, %p51
    %p53 = scmp.ne.s32.totalorder %s39, %s40
    %p54 = scmp.eq.s32.totalorder %s18, 3
    %p55 = por %p53, %p54
    %p57 = scmp.ne.s32.totalorder %s40, %s56
    %p58 = scmp.eq.s32.totalorder %s18, 0
    %p59 = por %p57, %p58
    %s60 = sadd.s32 %s20, 1
    %s61 = sadd.s32 %s27, 1
    %s62 = ssub.s32 %s19, %s31
    %s63 = ssub.s32 %s60, %s61
    %s64 = sor.u32 %s62, %s63
    %p65 = scmp.eq.s32.totalorder %s64, 0
    %s67 = sadd.s32 %s66, 1
    %s68 = scalar_select %p65, %s66, %s67
    %p71 = pneg %p65
    %p72 = scmp.eq.s32.totalorder %s12, 3
    %p73 = por %p71, %p72
    %p74 = scmp.ne.s32.totalorder %s66, %s69
    %p75 = scmp.eq.s32.totalorder %s12, 0
    %p76 = por %p74, %p75
    %p77 = scmp.ne.s32.totalorder %s66, %s69
    %p78 = scmp.eq.s32.totalorder %s17, 3
    %p79 = por %p77, %p78
    %p80 = scmp.ne.s32.totalorder %s69, %s70
    %p81 = scmp.eq.s32.totalorder %s17, 0
    %p82 = por %p80, %p81
    %p83 = scmp.ne.s32.totalorder %s69, %s70
    %p84 = scmp.eq.s32.totalorder %s18, 3
    %p85 = por %p83, %p84
    %p87 = scmp.ne.s32.totalorder %s70, %s86
    %p88 = scmp.eq.s32.totalorder %s18, 0
    %p89 = por %p87, %p88
    %s91 = sadd.s32 %s90, 1
    %p94 = scmp.eq.s32.totalorder %s12, 3
    %p95 = scmp.ne.s32.totalorder %s90, %s92
    %p96 = scmp.eq.s32.totalorder %s12, 0
    %p97 = por %p95, %p96
    %p98 = scmp.ne.s32.totalorder %s90, %s92
    %p99 = scmp.eq.s32.totalorder %s17, 3
    %p100 = por %p98, %p99
    %p101 = scmp.ne.s32.totalorder %s92, %s93
    %p102 = scmp.eq.s32.totalorder %s17, 0
    %p103 = por %p101, %p102
    %p104 = scmp.ne.s32.totalorder %s92, %s93
    %p105 = scmp.eq.s32.totalorder %s18, 3
    %p106 = por %p104, %p105
    %p108 = scmp.ne.s32.totalorder %s93, %s107
    %p109 = scmp.eq.s32.totalorder %s18, 0
    %p110 = por %p108, %p109
    %s111 = ssub.s32 %s19, %s31
    %s112 = ssub.s32 %s20, %s27
    %s113 = sor.u32 %s111, %s112
    %p114 = scmp.eq.s32.totalorder %s113, 0
    %s116 = sadd.s32 %s115, 1
    %s117 = scalar_select %p114, %s115, %s116
    %p120 = pneg %p114
    %p121 = scmp.eq.s32.totalorder %s12, 3
    %p122 = por %p120, %p121
    %p123 = scmp.ne.s32.totalorder %s115, %s118
    %p124 = scmp.eq.s32.totalorder %s12, 0
    %p125 = por %p123, %p124
    %p126 = scmp.ne.s32.totalorder %s115, %s118
    %p127 = scmp.eq.s32.totalorder %s17, 3
    %p128 = por %p126, %p127
    %p129 = scmp.ne.s32.totalorder %s118, %s119
    %p130 = scmp.eq.s32.totalorder %s17, 0
    %p131 = por %p129, %p130
    %p132 = scmp.ne.s32.totalorder %s118, %s119
    %p133 = scmp.eq.s32.totalorder %s18, 3
    %p134 = por %p132, %p133
    %p136 = scmp.ne.s32.totalorder %s119, %s135
    %p137 = scmp.eq.s32.totalorder %s18, 0
    %p138 = por %p136, %p137
    %s139 = ssub.s32 %s19, %s31
    %s140 = ssub.s32 %s20, %s27
    %s141 = sor.u32 %s139, %s140
    %p142 = scmp.eq.s32.totalorder %s141, 0
    %s144 = sadd.s32 %s143, 1
    %s145 = scalar_select %p142, %s143, %s144
    %p148 = pneg %p142
    %p149 = scmp.eq.s32.totalorder %s12, 3
    %p150 = por %p148, %p149
    %p151 = scmp.ne.s32.totalorder %s143, %s146
    %p152 = scmp.eq.s32.totalorder %s12, 0
    %p153 = por %p151, %p152
    %p154 = scmp.ne.s32.totalorder %s143, %s146
    %p155 = scmp.eq.s32.totalorder %s17, 3
    %p156 = por %p154, %p155
    %p157 = scmp.ne.s32.totalorder %s146, %s147
    %p158 = scmp.eq.s32.totalorder %s17, 0
    %p159 = por %p157, %p158
    %p160 = scmp.ne.s32.totalorder %s146, %s147
    %p161 = scmp.eq.s32.totalorder %s18, 3
    %p162 = por %p160, %p161
    %p164 = scmp.ne.s32.totalorder %s147, %s163
    %p165 = scmp.eq.s32.totalorder %s18, 0
    %p166 = por %p164, %p165
    %s167 = ssub.s32 %s19, %s31
    %s168 = ssub.s32 %s20, %s27
    %s169 = sor.u32 %s167, %s168
    %p170 = scmp.eq.s32.totalorder %s169, 0
    %s172 = sadd.s32 %s171, 1
    %s173 = scalar_select %p170, %s171, %s172
    %p176 = pneg %p170
    %p177 = scmp.eq.s32.totalorder %s12, 3
    %p178 = por %p176, %p177
    %p179 = scmp.ne.s32.totalorder %s171, %s174
    %p180 = scmp.eq.s32.totalorder %s12, 0
    %p181 = por %p179, %p180
    %p182 = scmp.ne.s32.totalorder %s171, %s174
    %p183 = scmp.eq.s32.totalorder %s17, 3
    %p184 = por %p182, %p183
    %p185 = scmp.ne.s32.totalorder %s174, %s175
    %p186 = scmp.eq.s32.totalorder %s17, 0
    %p187 = por %p185, %p186
    %p188 = scmp.ne.s32.totalorder %s174, %s175
    %p189 = scmp.eq.s32.totalorder %s18, 3
    %p190 = por %p188, %p189
    %p192 = scmp.ne.s32.totalorder %s175, %s191
    %p193 = scmp.eq.s32.totalorder %s18, 0
    %p194 = por %p192, %p193
    %p195 = scmp.le.s32.totalorder 1, %s12
    %p196 = scmp.lt.s32.totalorder %s12, 5
    %p197 = pnand %p195, %p196
    %p198 = pneg %p197
    // Predicated region
    $region9: #{conv_bn_swish.2} parent=5 // pred_check
      _
    $region10: #{conv_bn_swish.2} parent=5 // pred_check_branch
      %200 = sbr.rel (%p197) target = $region12
    $region11: #{conv_bn_swish.2} parent=5 // pred_region
      %s201 = ssub.s32 %s12, 1
      // Predicated region
      $region13: #{conv_bn_swish.2} parent=11 // pred_check
        %p202 = pneg %p103
      $region14: #{conv_bn_swish.2} parent=11 // pred_check_branch
        %204 = sbr.rel (%p202) target = $region16
      $region15: #{conv_bn_swish.2} parent=11 // pred_region
        _
      $region16: #{conv_bn_swish.2} parent=11 // pred_fallthru
        _
    $region12: #{conv_bn_swish.2} parent=5 // pred_fallthru
      _
    %p205 = scmp.lt.s32.totalorder %s12, 4
    // Predicated region
    $region17: #{conv_bn_swish.2} parent=5 // pred_check
      %p206 = pneg %p205
    $region18: #{conv_bn_swish.2} parent=5 // pred_check_branch
      %208 = sbr.rel (%p206) target = $region20
    $region19: #{conv_bn_swish.2} parent=5 // pred_region
      // Predicated region
      $region21: #{conv_bn_swish.2} parent=19 // pred_check
        %p209 = pneg %p46
      $region22: #{conv_bn_swish.2} parent=19 // pred_check_branch
        %211 = sbr.rel (%p209) target = $region24
      $region23: #{conv_bn_swish.2} parent=19 // pred_region
        %s212 = smul.u32 8, %s20
        %p213 = scmp.lt.s32.totalorder %s19, 1
        %s214 = scalar_select %p213, %s19, 1
        %p215 = scmp.lt.s32.totalorder %s212, 23
        %s216 = scalar_select %p215, %s212, 23
        %s217 = smul.addr %s216, 3
        %s218 = smul.addr %s214, 72
        %s219 = sadd.s32 %s217, %s218
        %s220 = smul.addr %s219, 4
        %s221 = scalar_lea.vmem %s0, %s220
        %s222 = smul.u32 8, %s20
      $region24: #{conv_bn_swish.2} parent=19 // pred_fallthru
        _
      // Predicated region
      $region25: #{conv_bn_swish.2} parent=19 // pred_check
        %p223 = pneg %p76
      $region26: #{conv_bn_swish.2} parent=19 // pred_check_branch
        %225 = sbr.rel (%p223) target = $region28
      $region27: #{conv_bn_swish.2} parent=19 // pred_region
        %s226 = sadd.s32 %s20, 1
        %s227 = smul.u32 8, %s226
        %p228 = scmp.lt.s32.totalorder %s19, 1
        %s229 = scalar_select %p228, %s19, 1
        %p230 = scmp.lt.s32.totalorder %s227, 23
        %s231 = scalar_select %p230, %s227, 23
        %s232 = smul.addr %s231, 3
        %s233 = smul.addr %s229, 72
        %s234 = sadd.s32 %s232, %s233
        %s235 = smul.addr %s234, 4
        %s236 = scalar_lea.vmem %s1, %s235
        %s237 = sadd.s32 %s20, 1
        %s238 = smul.u32 8, %s237
      $region28: #{conv_bn_swish.2} parent=19 // pred_fallthru
        _
    $region20: #{conv_bn_swish.2} parent=5 // pred_fallthru
      _
    %p239 = scmp.le.s32.totalorder 1, %s12
    %p240 = scmp.lt.s32.totalorder %s12, 5
    %p241 = pnand %p239, %p240
    %p242 = pneg %p241
    // Predicated region
    $region29: #{conv_bn_swish.2} parent=5 // pred_check
      _
    $region30: #{conv_bn_swish.2} parent=5 // pred_check_branch
      %244 = sbr.rel (%p241) target = $region32
    $region31: #{conv_bn_swish.2} parent=5 // pred_region
      %s245 = ssub.s32 %s12, 1
      %s246 = smul.u32 8, %s22
      %p247 = scmp.lt.s32.totalorder %s21, 1
      %s248 = scalar_select %p247, %s21, 1
      %p249 = scmp.lt.s32.totalorder %s246, 23
      %s250 = scalar_select %p249, %s246, 23
      %s251 = smul.addr %s250, 3
      %s252 = smul.addr %s248, 72
      %s253 = sadd.s32 %s251, %s252
      %s254 = smul.addr %s253, 4
      %s255 = scalar_lea.vmem %s0, %s254
      %p256 = pneg %p52
      %p257 = pneg %p49
      %s258 = sadd.s32 %s22, 1
      %s259 = smul.u32 8, %s258
      %p260 = scmp.lt.s32.totalorder %s21, 1
      %s261 = scalar_select %p260, %s21, 1
      %p262 = scmp.lt.s32.totalorder %s259, 23
      %s263 = scalar_select %p262, %s259, 23
      %s264 = smul.addr %s263, 3
      %s265 = smul.addr %s261, 72
      %s266 = sadd.s32 %s264, %s265
      %s267 = smul.addr %s266, 4
      %s268 = scalar_lea.vmem %s1, %s267
      %p269 = pneg %p82
      %p270 = pneg %p79
      %p271 = pneg %p103
      %p272 = pneg %p100
      %p273 = pneg %p131
      %p274 = pneg %p128
      %s275 = smul.u32 16, %s22
      %p276 = scmp.lt.s32.totalorder %s21, 1
      %s277 = scalar_select %p276, %s21, 1
      %p278 = scmp.lt.s32.totalorder %s275, 31
      %s279 = scalar_select %p278, %s275, 31
      %s280 = smul.addr %s277, 32
      %s281 = sadd.s32 %s279, %s280
      %s282 = smul.addr %s281, 4
      %s283 = scalar_lea.vmem %s3, %s282
      %p284 = pneg %p159
      %p285 = pneg %p156
      %p286 = scmp.lt.s32.totalorder %s21, 1
      %s287 = scalar_select %p286, %s21, 1
      %p288 = scmp.lt.s32.totalorder %s22, 1
      %s289 = scalar_select %p288, %s22, 1
      %s290 = smul.addr %s287, 2
      %s291 = sadd.s32 %s289, %s290
      %s292 = scalar_lea.vmem %s4, %s291
      %p293 = pneg %p187
      %p294 = pneg %p184
      %p295 = scmp.lt.s32.totalorder %s21, 1
      %s296 = scalar_select %p295, %s21, 1
      %p297 = scmp.lt.s32.totalorder %s22, 1
      %s298 = scalar_select %p297, %s22, 1
      %s299 = smul.addr %s296, 2
      %s300 = sadd.s32 %s298, %s299
      %s301 = scalar_lea.vmem %s5, %s300
      %s302 = smul.u32 8, %s22
      %p303 = scmp.lt.s32.totalorder %s21, 1
      %s304 = scalar_select %p303, %s21, 1
      %p305 = scmp.lt.s32.totalorder %s302, 23
      %s306 = scalar_select %p305, %s302, 23
      %s307 = smul.addr %s306, 3
      %s308 = smul.addr %s304, 72
      %s309 = sadd.s32 %s307, %s308
      %s310 = smul.addr %s309, 4
      %s311 = scalar_lea.vmem %s0, %s310
      %s312 = smul.u32 8, %s22
      %s313 = sadd.s32 %s22, 1
      %s314 = smul.u32 8, %s313
      %p315 = scmp.lt.s32.totalorder %s21, 1
      %s316 = scalar_select %p315, %s21, 1
      %p317 = scmp.lt.s32.totalorder %s314, 23
      %s318 = scalar_select %p317, %s314, 23
      %s319 = smul.addr %s318, 3
      %s320 = smul.addr %s316, 72
      %s321 = sadd.s32 %s319, %s320
      %s322 = smul.addr %s321, 4
      %s323 = scalar_lea.vmem %s1, %s322
      %s324 = sadd.s32 %s22, 1
      %s325 = smul.u32 8, %s324
      %s326 = smul.u32 16, %s22
      %p327 = scmp.lt.s32.totalorder %s21, 1
      %s328 = scalar_select %p327, %s21, 1
      %p329 = scmp.lt.s32.totalorder %s326, 31
      %s330 = scalar_select %p329, %s326, 31
      %s331 = smul.addr %s328, 32
      %s332 = sadd.s32 %s330, %s331
      %s333 = smul.addr %s332, 4
      %s334 = scalar_lea.vmem %s3, %s333
      %s335 = smul.u32 16, %s22
      %p336 = scmp.lt.s32.totalorder %s21, 1
      %s337 = scalar_select %p336, %s21, 1
      %p338 = scmp.lt.s32.totalorder %s22, 1
      %s339 = scalar_select %p338, %s22, 1
      %s340 = smul.addr %s337, 2
      %s341 = sadd.s32 %s339, %s340
      %s342 = scalar_lea.vmem %s4, %s341
      %p343 = scmp.lt.s32.totalorder %s21, 1
      %s344 = scalar_select %p343, %s21, 1
      %p345 = scmp.lt.s32.totalorder %s22, 1
      %s346 = scalar_select %p345, %s22, 1
      %s347 = smul.addr %s344, 2
      %s348 = sadd.s32 %s346, %s347
      %s349 = scalar_lea.vmem %s5, %s348
      %v351 = vld [vmem:[%s311] sm:$0xf]
      %v352 = vld [vmem:[%s311 + $0x4] sm:$0xf]
      %v353 = vld [vmem:[%s311 + $0x8] sm:$0x1]
      %v354 = vld [vmem:[%s311 + $0xc] sm:$0xf]
      %v355 = vld [vmem:[%s311 + $0x10] sm:$0xf]
      %v356 = vld [vmem:[%s311 + $0x14] sm:$0x1]
      %v357 = vld [vmem:[%s311 + $0x18] sm:$0xf]
      %v358 = vld [vmem:[%s311 + $0x1c] sm:$0xf]
      %v359 = vld [vmem:[%s311 + $0x20] sm:$0x1]
      %v360 = vld [vmem:[%s311 + $0x24] sm:$0xf]
      %v361 = vld [vmem:[%s311 + $0x28] sm:$0xf]
      %v362 = vld [vmem:[%s311 + $0x2c] sm:$0x1]
      %v363 = vld [vmem:[%s311 + $0x30] sm:$0xf]
      %v364 = vld [vmem:[%s311 + $0x34] sm:$0xf]
      %v365 = vld [vmem:[%s311 + $0x38] sm:$0x1]
      %v366 = vld [vmem:[%s311 + $0x3c] sm:$0xf]
      %v367 = vld [vmem:[%s311 + $0x40] sm:$0xf]
      %v368 = vld [vmem:[%s311 + $0x44] sm:$0x1]
      %v369 = vld [vmem:[%s311 + $0x48] sm:$0xf]
      %v370 = vld [vmem:[%s311 + $0x4c] sm:$0xf]
      %v371 = vld [vmem:[%s311 + $0x50] sm:$0x1]
      %v372 = vld [vmem:[%s311 + $0x54] sm:$0xf]
      %v373 = vld [vmem:[%s311 + $0x58] sm:$0xf]
      %v374 = vld [vmem:[%s311 + $0x5c] sm:$0x1]
      %vm375 = vcmask 60416
      %376 = vst.msk [vmem:[#allocation2] sm:$0xf] %vm375, %v351
      %377 = vst.msk [vmem:[#allocation2 + $0x4] sm:$0xf] %vm375, %v352
      %vm378 = vcmask 57344
      %379 = vst.msk [vmem:[#allocation2 + $0x8] sm:$0x1] %vm378, %v353
      %380 = vst.msk [vmem:[#allocation2 + $0xc] sm:$0xf] %vm375, %v354
      %381 = vst.msk [vmem:[#allocation2 + $0x10] sm:$0xf] %vm375, %v355
      %382 = vst.msk [vmem:[#allocation2 + $0x14] sm:$0x1] %vm378, %v356
      %383 = vst.msk [vmem:[#allocation2 + $0x18] sm:$0xf] %vm375, %v357
      %384 = vst.msk [vmem:[#allocation2 + $0x1c] sm:$0xf] %vm375, %v358
      %385 = vst.msk [vmem:[#allocation2 + $0x20] sm:$0x1] %vm378, %v359
      %386 = vst.msk [vmem:[#allocation2 + $0x24] sm:$0xf] %vm375, %v360
      %387 = vst.msk [vmem:[#allocation2 + $0x28] sm:$0xf] %vm375, %v361
      %388 = vst.msk [vmem:[#allocation2 + $0x2c] sm:$0x1] %vm378, %v362
      %389 = vst.msk [vmem:[#allocation2 + $0x30] sm:$0xf] %vm375, %v363
      %390 = vst.msk [vmem:[#allocation2 + $0x34] sm:$0xf] %vm375, %v364
      %391 = vst.msk [vmem:[#allocation2 + $0x38] sm:$0x1] %vm378, %v365
      %392 = vst.msk [vmem:[#allocation2 + $0x3c] sm:$0xf] %vm375, %v366
      %393 = vst.msk [vmem:[#allocation2 + $0x40] sm:$0xf] %vm375, %v367
      %394 = vst.msk [vmem:[#allocation2 + $0x44] sm:$0x1] %vm378, %v368
      %395 = vst.msk [vmem:[#allocation2 + $0x48] sm:$0xf] %vm375, %v369
      %396 = vst.msk [vmem:[#allocation2 + $0x4c] sm:$0xf] %vm375, %v370
      %397 = vst.msk [vmem:[#allocation2 + $0x50] sm:$0x1] %vm378, %v371
      %398 = vst.msk [vmem:[#allocation2 + $0x54] sm:$0xf] %vm375, %v372
      %399 = vst.msk [vmem:[#allocation2 + $0x58] sm:$0xf] %vm375, %v373
      %400 = vst.msk [vmem:[#allocation2 + $0x5c] sm:$0x1] %vm378, %v374
      %v401 = vld [vmem:[%s323] sm:$0xf]
      %v402 = vld [vmem:[%s323 + $0x4] sm:$0xf]
      %v403 = vld [vmem:[%s323 + $0x8] sm:$0x1]
      %v404 = vld [vmem:[%s323 + $0xc] sm:$0xf]
      %v405 = vld [vmem:[%s323 + $0x10] sm:$0xf]
      %v406 = vld [vmem:[%s323 + $0x14] sm:$0x1]
      %v407 = vld [vmem:[%s323 + $0x18] sm:$0xf]
      %v408 = vld [vmem:[%s323 + $0x1c] sm:$0xf]
      %v409 = vld [vmem:[%s323 + $0x20] sm:$0x1]
      %v410 = vld [vmem:[%s323 + $0x24] sm:$0xf]
      %v411 = vld [vmem:[%s323 + $0x28] sm:$0xf]
      %v412 = vld [vmem:[%s323 + $0x2c] sm:$0x1]
      %v413 = vld [vmem:[%s323 + $0x30] sm:$0xf]
      %v414 = vld [vmem:[%s323 + $0x34] sm:$0xf]
      %v415 = vld [vmem:[%s323 + $0x38] sm:$0x1]
      %v416 = vld [vmem:[%s323 + $0x3c] sm:$0xf]
      %v417 = vld [vmem:[%s323 + $0x40] sm:$0xf]
      %v418 = vld [vmem:[%s323 + $0x44] sm:$0x1]
      %v419 = vld [vmem:[%s323 + $0x48] sm:$0xf]
      %v420 = vld [vmem:[%s323 + $0x4c] sm:$0xf]
      %v421 = vld [vmem:[%s323 + $0x50] sm:$0x1]
      %v422 = vld [vmem:[%s323 + $0x54] sm:$0xf]
      %v423 = vld [vmem:[%s323 + $0x58] sm:$0xf]
      %v424 = vld [vmem:[%s323 + $0x5c] sm:$0x1]
      %s425 = scalar_lea.vmem [#allocation2], 96
      %426 = vst.msk [vmem:[%s425] sm:$0xf] %vm375, %v401
      %427 = vst.msk [vmem:[%s425 + $0x4] sm:$0xf] %vm375, %v402
      %428 = vst.msk [vmem:[%s425 + $0x8] sm:$0x1] %vm378, %v403
      %429 = vst.msk [vmem:[%s425 + $0xc] sm:$0xf] %vm375, %v404
      %430 = vst.msk [vmem:[%s425 + $0x10] sm:$0xf] %vm375, %v405
      %431 = vst.msk [vmem:[%s425 + $0x14] sm:$0x1] %vm378, %v406
      %432 = vst.msk [vmem:[%s425 + $0x18] sm:$0xf] %vm375, %v407
      %433 = vst.msk [vmem:[%s425 + $0x1c] sm:$0xf] %vm375, %v408
      %434 = vst.msk [vmem:[%s425 + $0x20] sm:$0x1] %vm378, %v409
      %435 = vst.msk [vmem:[%s425 + $0x24] sm:$0xf] %vm375, %v410
      %436 = vst.msk [vmem:[%s425 + $0x28] sm:$0xf] %vm375, %v411
      %437 = vst.msk [vmem:[%s425 + $0x2c] sm:$0x1] %vm378, %v412
      %438 = vst.msk [vmem:[%s425 + $0x30] sm:$0xf] %vm375, %v413
      %439 = vst.msk [vmem:[%s425 + $0x34] sm:$0xf] %vm375, %v414
      %440 = vst.msk [vmem:[%s425 + $0x38] sm:$0x1] %vm378, %v415
      %441 = vst.msk [vmem:[%s425 + $0x3c] sm:$0xf] %vm375, %v416
      %442 = vst.msk [vmem:[%s425 + $0x40] sm:$0xf] %vm375, %v417
      %443 = vst.msk [vmem:[%s425 + $0x44] sm:$0x1] %vm378, %v418
      %444 = vst.msk [vmem:[%s425 + $0x48] sm:$0xf] %vm375, %v419
      %445 = vst.msk [vmem:[%s425 + $0x4c] sm:$0xf] %vm375, %v420
      %446 = vst.msk [vmem:[%s425 + $0x50] sm:$0x1] %vm378, %v421
      %447 = vst.msk [vmem:[%s425 + $0x54] sm:$0xf] %vm375, %v422
      %448 = vst.msk [vmem:[%s425 + $0x58] sm:$0xf] %vm375, %v423
      %449 = vst.msk [vmem:[%s425 + $0x5c] sm:$0x1] %vm378, %v424
      %v450 = vld [vmem:[#allocation2] sm:$0xf]
      %v451 = vld [vmem:[#allocation2 + $0x4] sm:$0xf]
      %v452 = vld [vmem:[#allocation2 + $0xc] sm:$0xf]
      %v453 = vld [vmem:[#allocation2 + $0x10] sm:$0xf]
      %v454 = vld [vmem:[#allocation2 + $0x18] sm:$0xf]
      %v455 = vld [vmem:[#allocation2 + $0x1c] sm:$0xf]
      %v456 = vld [vmem:[#allocation2 + $0x24] sm:$0xf]
      %v457 = vld [vmem:[#allocation2 + $0x28] sm:$0xf]
      %v458 = vld [vmem:[#allocation2 + $0x30] sm:$0xf]
      %v459 = vld [vmem:[#allocation2 + $0x34] sm:$0xf]
      %v460 = vld [vmem:[#allocation2 + $0x3c] sm:$0xf]
      %v461 = vld [vmem:[#allocation2 + $0x40] sm:$0xf]
      %v462 = vld [vmem:[#allocation2 + $0x48] sm:$0xf]
      %v463 = vld [vmem:[#allocation2 + $0x4c] sm:$0xf]
      %v464 = vld [vmem:[#allocation2 + $0x54] sm:$0xf]
      %v465 = vld [vmem:[#allocation2 + $0x58] sm:$0xf]
      %v466 = vld [vmem:[%s2] sm:$0xf]
      %v467 = vld [vmem:[#allocation2 + $0x8] sm:$0x1]
      %v468 = vld [vmem:[#allocation2 + $0x14] sm:$0x1]
      %v469 = vld [vmem:[#allocation2 + $0x20] sm:$0x1]
      %v470 = vld [vmem:[#allocation2 + $0x2c] sm:$0x1]
      %v471 = vld [vmem:[#allocation2 + $0x38] sm:$0x1]
      %v472 = vld [vmem:[#allocation2 + $0x44] sm:$0x1]
      %v473 = vld [vmem:[#allocation2 + $0x50] sm:$0x1]
      %v474 = vld [vmem:[#allocation2 + $0x5c] sm:$0x1]
      %vm475 = vsmask.f32 3328
      %vm476 = vsmask.f32 7440
      %vm477 = vmor %vm475, %vm476
      %v479 = vshrl.u32 %v450, 16
      %v481 = vrot.slane %v479, 4
      %v482 = vshll.u32 %v450, 16
      %v484 = vrot.slane %v482, 5
      %v485 = vor.u32 %v481, %v484
      %v486 = vrot.slane %v485, 4
      %v488 = vshll.u32 %v451, 16
      %v490 = vrot.slane %v488, 5
      %v491 = vsel %vm477, %v486, %v490
      %v492 = vshrl.u32 %v451, 16
      %v494 = vrot.slane %v492, 4
      %v495 = vor.u32 %v494, %v490
      %v496 = vrot.slane %v495, 4
      %v498 = vshll.u32 %v467, 16
      %v500 = vrot.slane %v498, 5
      %v501 = vsel %vm477, %v496, %v500
      %v503 = vshrl.u32 %v452, 16
      %v505 = vrot.slane %v503, 4
      %v506 = vshll.u32 %v452, 16
      %v508 = vrot.slane %v506, 5
      %v509 = vor.u32 %v505, %v508
      %v510 = vrot.slane %v509, 4
      %v512 = vshll.u32 %v453, 16
      %v514 = vrot.slane %v512, 5
      %v515 = vsel %vm477, %v510, %v514
      %v516 = vshrl.u32 %v453, 16
      %v518 = vrot.slane %v516, 4
      %v519 = vor.u32 %v518, %v514
      %v520 = vrot.slane %v519, 4
      %v522 = vshll.u32 %v468, 16
      %v524 = vrot.slane %v522, 5
      %v525 = vsel %vm477, %v520, %v524
      %v527 = vshrl.u32 %v454, 16
      %v529 = vrot.slane %v527, 4
      %v530 = vshll.u32 %v454, 16
      %v532 = vrot.slane %v530, 5
      %v533 = vor.u32 %v529, %v532
      %v534 = vrot.slane %v533, 4
      %v536 = vshll.u32 %v455, 16
      %v538 = vrot.slane %v536, 5
      %v539 = vsel %vm477, %v534, %v538
      %v540 = vshrl.u32 %v455, 16
      %v542 = vrot.slane %v540, 4
      %v543 = vor.u32 %v542, %v538
      %v544 = vrot.slane %v543, 4
      %v546 = vshll.u32 %v469, 16
      %v548 = vrot.slane %v546, 5
      %v549 = vsel %vm477, %v544, %v548
      %v551 = vshrl.u32 %v456, 16
      %v553 = vrot.slane %v551, 4
      %v554 = vshll.u32 %v456, 16
      %v556 = vrot.slane %v554, 5
      %v557 = vor.u32 %v553, %v556
      %v558 = vrot.slane %v557, 4
      %v560 = vshll.u32 %v457, 16
      %v562 = vrot.slane %v560, 5
      %v563 = vsel %vm477, %v558, %v562
      %v564 = vshrl.u32 %v457, 16
      %v566 = vrot.slane %v564, 4
      %v567 = vor.u32 %v566, %v562
      %v568 = vrot.slane %v567, 4
      %v570 = vshll.u32 %v470, 16
      %v572 = vrot.slane %v570, 5
      %v573 = vsel %vm477, %v568, %v572
      %v575 = vshrl.u32 %v458, 16
      %v577 = vrot.slane %v575, 4
      %v578 = vshll.u32 %v458, 16
      %v580 = vrot.slane %v578, 5
      %v581 = vor.u32 %v577, %v580
      %v582 = vrot.slane %v581, 4
      %v584 = vshll.u32 %v459, 16
      %v586 = vrot.slane %v584, 5
      %v587 = vsel %vm477, %v582, %v586
      %v588 = vshrl.u32 %v459, 16
      %v590 = vrot.slane %v588, 4
      %v591 = vor.u32 %v590, %v586
      %v592 = vrot.slane %v591, 4
      %v594 = vshll.u32 %v471, 16
      %v596 = vrot.slane %v594, 5
      %v597 = vsel %vm477, %v592, %v596
      %v599 = vshrl.u32 %v460, 16
      %v601 = vrot.slane %v599, 4
      %v602 = vshll.u32 %v460, 16
      %v604 = vrot.slane %v602, 5
      %v605 = vor.u32 %v601, %v604
      %v606 = vrot.slane %v605, 4
      %v608 = vshll.u32 %v461, 16
      %v610 = vrot.slane %v608, 5
      %v611 = vsel %vm477, %v606, %v610
      %v612 = vshrl.u32 %v461, 16
      %v614 = vrot.slane %v612, 4
      %v615 = vor.u32 %v614, %v610
      %v616 = vrot.slane %v615, 4
      %v618 = vshll.u32 %v472, 16
      %v620 = vrot.slane %v618, 5
      %v621 = vsel %vm477, %v616, %v620
      %v623 = vshrl.u32 %v462, 16
      %v625 = vrot.slane %v623, 4
      %v626 = vshll.u32 %v462, 16
      %v628 = vrot.slane %v626, 5
      %v629 = vor.u32 %v625, %v628
      %v630 = vrot.slane %v629, 4
      %v632 = vshll.u32 %v463, 16
      %v634 = vrot.slane %v632, 5
      %v635 = vsel %vm477, %v630, %v634
      %v636 = vshrl.u32 %v463, 16
      %v638 = vrot.slane %v636, 4
      %v639 = vor.u32 %v638, %v634
      %v640 = vrot.slane %v639, 4
      %v642 = vshll.u32 %v473, 16
      %v644 = vrot.slane %v642, 5
      %v645 = vsel %vm477, %v640, %v644
      %v647 = vshrl.u32 %v464, 16
      %v649 = vrot.slane %v647, 4
      %v650 = vshll.u32 %v464, 16
      %v652 = vrot.slane %v650, 5
      %v653 = vor.u32 %v649, %v652
      %v654 = vrot.slane %v653, 4
      %v656 = vshll.u32 %v465, 16
      %v658 = vrot.slane %v656, 5
      %v659 = vsel %vm477, %v654, %v658
      %v660 = vshrl.u32 %v465, 16
      %v662 = vrot.slane %v660, 4
      %v663 = vor.u32 %v662, %v658
      %v664 = vrot.slane %v663, 4
      %v666 = vshll.u32 %v474, 16
      %v668 = vrot.slane %v666, 5
      %v669 = vsel %vm477, %v664, %v668
      %s670 = scalar_lea.vmem %s2, 4
      %v671 = vld [vmem:[%s670] sm:$0xf]
      %v672 = vunpack.c.l.b16 %v491
      %v673 = vunpack.c.l.b16 %v501
      %v674 = vunpack.c.l.b16 %v515
      %v675 = vunpack.c.l.b16 %v525
      %v676 = vunpack.c.l.b16 %v539
      %v677 = vunpack.c.l.b16 %v549
      %v678 = vunpack.c.l.b16 %v563
      %v679 = vunpack.c.l.b16 %v573
      %v680 = vunpack.c.l.b16 %v587
      %v681 = vunpack.c.l.b16 %v597
      %v682 = vunpack.c.l.b16 %v611
      %v683 = vunpack.c.l.b16 %v621
      %v684 = vunpack.c.l.b16 %v635
      %v685 = vunpack.c.l.b16 %v645
      %v686 = vunpack.c.l.b16 %v659
      %v687 = vunpack.c.l.b16 %v669
      %v688 = vpack.c.b16 %v673, %v672
      %v689 = vpack.c.b16 %v675, %v674
      %v690 = vpack.c.b16 %v677, %v676
      %v691 = vpack.c.b16 %v679, %v678
      %v692 = vpack.c.b16 %v681, %v680
      %v693 = vpack.c.b16 %v683, %v682
      %v694 = vpack.c.b16 %v685, %v684
      %v695 = vpack.c.b16 %v687, %v686
      %vm696 = vcmask 64512
      %v698 = vsel %vm696, %v688, 0
      %v701 = vsel %vm696, %v689, 0
      %v704 = vsel %vm696, %v690, 0
      %v707 = vsel %vm696, %v691, 0
      %v710 = vsel %vm696, %v692, 0
      %v713 = vsel %vm696, %v693, 0
      %v716 = vsel %vm696, %v694, 0
      %v719 = vsel %vm696, %v695, 0
      %vm721 = vcmask 1043456
      %v723 = vsel %vm721, %v671, 0
      %725 = vmatprep.subr.bf16.mxu0 0
      %726 = vmatpush1.bf16.msra.mxu0 0
      %727 = vmatprep.subr.bf16.mxu0 0
      %728 = vmatpush1.bf16.msra.mxu0 0
      %729 = vmatprep.subr.bf16.mxu0 0
      %730 = vmatpush1.bf16.msra.mxu0 0
      %731 = vmatprep.subr.bf16.mxu0 0
      %732 = vmatpush1.bf16.msra.mxu0 0
      %733 = vmatprep.subr.bf16.mxu0 0
      %734 = vmatpush1.bf16.msra.mxu0 0
      %735 = vmatprep.subr.bf16.mxu0 0
      %736 = vmatpush1.bf16.msra.mxu0 0
      %737 = vmatprep.subr.bf16.mxu0 0
      %738 = vmatpush1.bf16.msra.mxu0 0
      %739 = vmatprep.subr.bf16.mxu0 0
      %740 = vmatpush1.bf16.msra.mxu0 %v723
      %741 = vmatprep.subr.bf16.mxu0 0
      %742 = vmatpush2.bf16.msra.mxu0 0
      %743 = vmatprep.subr.bf16.mxu0 0
      %744 = vmatpush2.bf16.msra.mxu0 0
      %745 = vmatprep.subr.bf16.mxu0 0
      %746 = vmatpush2.bf16.msra.mxu0 0
      %747 = vmatprep.subr.bf16.mxu0 0
      %748 = vmatpush2.bf16.msra.mxu0 0
      %749 = vmatprep.subr.bf16.mxu0 0
      %750 = vmatpush2.bf16.msra.mxu0 0
      %751 = vmatprep.subr.bf16.mxu0 0
      %752 = vmatpush2.bf16.msra.mxu0 0
      %753 = vmatprep.subr.bf16.mxu0 0
      %754 = vmatpush2.bf16.msra.mxu0 0
      %755 = vmatprep.subr.bf16.mxu0 0
      %756 = vmatpush2.bf16.msra.mxu0 0
      %757 = vmatprep.mubr.bf16.mxu0 0
      %758 = vmatmul.mubr.bf16.gmra.mxu0 %v698
      %v759 = vpop.f32.mrf.mxu0
      %v760 = vadd.f32 0.0, %v759
      %v761 = vpop.f32.mrf.mxu0
      %v762 = vpop.f32.mrf.mxu0
      %v763 = vadd.f32 0.0, %v762
      %v764 = vpop.f32.mrf.mxu0
      %765 = vmatprep.mubr.bf16.mxu0 0
      %766 = vmatmul.mubr.bf16.gmra.mxu0 %v701
      %v767 = vpop.f32.mrf.mxu0
      %v768 = vadd.f32 0.0, %v767
      %v769 = vpop.f32.mrf.mxu0
      %v770 = vpop.f32.mrf.mxu0
      %v771 = vadd.f32 0.0, %v770
      %v772 = vpop.f32.mrf.mxu0
      %773 = vmatprep.mubr.bf16.mxu0 0
      %774 = vmatmul.mubr.bf16.gmra.mxu0 %v704
      %v775 = vpop.f32.mrf.mxu0
      %v776 = vadd.f32 0.0, %v775
      %v777 = vpop.f32.mrf.mxu0
      %v778 = vpop.f32.mrf.mxu0
      %v779 = vadd.f32 0.0, %v778
      %v780 = vpop.f32.mrf.mxu0
      %781 = vmatprep.mubr.bf16.mxu0 0
      %782 = vmatmul.mubr.bf16.gmra.mxu0 %v707
      %v783 = vpop.f32.mrf.mxu0
      %v784 = vadd.f32 0.0, %v783
      %v785 = vpop.f32.mrf.mxu0
      %v786 = vpop.f32.mrf.mxu0
      %v787 = vadd.f32 0.0, %v786
      %v788 = vpop.f32.mrf.mxu0
      %789 = vmatprep.mubr.bf16.mxu0 0
      %790 = vmatmul.mubr.bf16.gmra.mxu0 %v710
      %v791 = vpop.f32.mrf.mxu0
      %v792 = vadd.f32 0.0, %v791
      %v793 = vpop.f32.mrf.mxu0
      %v794 = vpop.f32.mrf.mxu0
      %v795 = vadd.f32 0.0, %v794
      %v796 = vpop.f32.mrf.mxu0
      %797 = vmatprep.mubr.bf16.mxu0 0
      %798 = vmatmul.mubr.bf16.gmra.mxu0 %v713
      %v799 = vpop.f32.mrf.mxu0
      %v800 = vadd.f32 0.0, %v799
      %v801 = vpop.f32.mrf.mxu0
      %v802 = vpop.f32.mrf.mxu0
      %v803 = vadd.f32 0.0, %v802
      %v804 = vpop.f32.mrf.mxu0
      %805 = vmatprep.mubr.bf16.mxu0 0
      %806 = vmatmul.mubr.bf16.gmra.mxu0 %v716
      %v807 = vpop.f32.mrf.mxu0
      %v808 = vadd.f32 0.0, %v807
      %v809 = vpop.f32.mrf.mxu0
      %v810 = vpop.f32.mrf.mxu0
      %v811 = vadd.f32 0.0, %v810
      %v812 = vpop.f32.mrf.mxu0
      %813 = vmatprep.mubr.bf16.mxu0 0
      %814 = vmatmul.mubr.bf16.gmra.mxu0 %v719
      %v815 = vpop.f32.mrf.mxu0
      %v816 = vadd.f32 0.0, %v815
      %v817 = vpop.f32.mrf.mxu0
      %v818 = vpop.f32.mrf.mxu0
      %v819 = vadd.f32 0.0, %v818
      %v820 = vpop.f32.mrf.mxu0
      %821 = vdwg.mxu0
      %v838 = vunpack.c.l.b16 %v450
      %v839 = vunpack.c.l.b16 %v451
      %v840 = vunpack.c.l.b16 %v452
      %v841 = vunpack.c.l.b16 %v453
      %v842 = vunpack.c.l.b16 %v454
      %v843 = vunpack.c.l.b16 %v455
      %v844 = vunpack.c.l.b16 %v456
      %v845 = vunpack.c.l.b16 %v457
      %v846 = vunpack.c.l.b16 %v458
      %v847 = vunpack.c.l.b16 %v459
      %v848 = vunpack.c.l.b16 %v460
      %v849 = vunpack.c.l.b16 %v461
      %v850 = vunpack.c.l.b16 %v462
      %v851 = vunpack.c.l.b16 %v463
      %v852 = vunpack.c.l.b16 %v464
      %v853 = vunpack.c.l.b16 %v465
      %v854 = vpack.c.b16 %v839, %v838
      %v855 = vpack.c.b16 %v841, %v840
      %v856 = vpack.c.b16 %v843, %v842
      %v857 = vpack.c.b16 %v845, %v844
      %v858 = vpack.c.b16 %v847, %v846
      %v859 = vpack.c.b16 %v849, %v848
      %v860 = vpack.c.b16 %v851, %v850
      %v861 = vpack.c.b16 %v853, %v852
      %v863 = vsel %vm696, %v854, 0
      %v866 = vsel %vm696, %v855, 0
      %v869 = vsel %vm696, %v856, 0
      %v872 = vsel %vm696, %v857, 0
      %v875 = vsel %vm696, %v858, 0
      %v878 = vsel %vm696, %v859, 0
      %v881 = vsel %vm696, %v860, 0
      %v884 = vsel %vm696, %v861, 0
      %v887 = vsel %vm721, %v466, 0
      %889 = vmatprep.subr.bf16.mxu0 0
      %890 = vmatpush1.bf16.msra.mxu0 0
      %891 = vmatprep.subr.bf16.mxu0 0
      %892 = vmatpush1.bf16.msra.mxu0 0
      %893 = vmatprep.subr.bf16.mxu0 0
      %894 = vmatpush1.bf16.msra.mxu0 0
      %895 = vmatprep.subr.bf16.mxu0 0
      %896 = vmatpush1.bf16.msra.mxu0 0
      %897 = vmatprep.subr.bf16.mxu0 0
      %898 = vmatpush1.bf16.msra.mxu0 0
      %899 = vmatprep.subr.bf16.mxu0 0
      %900 = vmatpush1.bf16.msra.mxu0 0
      %901 = vmatprep.subr.bf16.mxu0 0
      %902 = vmatpush1.bf16.msra.mxu0 0
      %903 = vmatprep.subr.bf16.mxu0 0
      %904 = vmatpush1.bf16.msra.mxu0 %v887
      %905 = vmatprep.subr.bf16.mxu0 0
      %906 = vmatpush2.bf16.msra.mxu0 0
      %907 = vmatprep.subr.bf16.mxu0 0
      %908 = vmatpush2.bf16.msra.mxu0 0
      %909 = vmatprep.subr.bf16.mxu0 0
      %910 = vmatpush2.bf16.msra.mxu0 0
      %911 = vmatprep.subr.bf16.mxu0 0
      %912 = vmatpush2.bf16.msra.mxu0 0
      %913 = vmatprep.subr.bf16.mxu0 0
      %914 = vmatpush2.bf16.msra.mxu0 0
      %915 = vmatprep.subr.bf16.mxu0 0
      %916 = vmatpush2.bf16.msra.mxu0 0
      %917 = vmatprep.subr.bf16.mxu0 0
      %918 = vmatpush2.bf16.msra.mxu0 0
      %919 = vmatprep.subr.bf16.mxu0 0
      %920 = vmatpush2.bf16.msra.mxu0 0
      %921 = vmatprep.mubr.bf16.mxu0 0
      %922 = vmatmul.mubr.bf16.gmra.mxu0 %v863
      %v923 = vpop.f32.mrf.mxu0
      %v924 = vadd.f32 %v760, %v923
      %v925 = vpop.f32.mrf.mxu0
      %v926 = vpop.f32.mrf.mxu0
      %v927 = vadd.f32 %v763, %v926
      %v928 = vpop.f32.mrf.mxu0
      %929 = vmatprep.mubr.bf16.mxu0 0
      %930 = vmatmul.mubr.bf16.gmra.mxu0 %v866
      %v931 = vpop.f32.mrf.mxu0
      %v932 = vadd.f32 %v768, %v931
      %v933 = vpop.f32.mrf.mxu0
      %v934 = vpop.f32.mrf.mxu0
      %v935 = vadd.f32 %v771, %v934
      %v936 = vpop.f32.mrf.mxu0
      %937 = vmatprep.mubr.bf16.mxu0 0
      %938 = vmatmul.mubr.bf16.gmra.mxu0 %v869
      %v939 = vpop.f32.mrf.mxu0
      %v940 = vadd.f32 %v776, %v939
      %v941 = vpop.f32.mrf.mxu0
      %v942 = vpop.f32.mrf.mxu0
      %v943 = vadd.f32 %v779, %v942
      %v944 = vpop.f32.mrf.mxu0
      %945 = vmatprep.mubr.bf16.mxu0 0
      %946 = vmatmul.mubr.bf16.gmra.mxu0 %v872
      %v947 = vpop.f32.mrf.mxu0
      %v948 = vadd.f32 %v784, %v947
      %v949 = vpop.f32.mrf.mxu0
      %v950 = vpop.f32.mrf.mxu0
      %v951 = vadd.f32 %v787, %v950
      %v952 = vpop.f32.mrf.mxu0
      %953 = vmatprep.mubr.bf16.mxu0 0
      %954 = vmatmul.mubr.bf16.gmra.mxu0 %v875
      %v955 = vpop.f32.mrf.mxu0
      %v956 = vadd.f32 %v792, %v955
      %v957 = vpop.f32.mrf.mxu0
      %v958 = vpop.f32.mrf.mxu0
      %v959 = vadd.f32 %v795, %v958
      %v960 = vpop.f32.mrf.mxu0
      %961 = vmatprep.mubr.bf16.mxu0 0
      %962 = vmatmul.mubr.bf16.gmra.mxu0 %v878
      %v963 = vpop.f32.mrf.mxu0
      %v964 = vadd.f32 %v800, %v963
      %v965 = vpop.f32.mrf.mxu0
      %v966 = vpop.f32.mrf.mxu0
      %v967 = vadd.f32 %v803, %v966
      %v968 = vpop.f32.mrf.mxu0
      %969 = vmatprep.mubr.bf16.mxu0 0
      %970 = vmatmul.mubr.bf16.gmra.mxu0 %v881
      %v971 = vpop.f32.mrf.mxu0
      %v972 = vadd.f32 %v808, %v971
      %v973 = vpop.f32.mrf.mxu0
      %v974 = vpop.f32.mrf.mxu0
      %v975 = vadd.f32 %v811, %v974
      %v976 = vpop.f32.mrf.mxu0
      %977 = vmatprep.mubr.bf16.mxu0 0
      %978 = vmatmul.mubr.bf16.gmra.mxu0 %v884
      %v979 = vpop.f32.mrf.mxu0
      %v980 = vadd.f32 %v816, %v979
      %v981 = vpop.f32.mrf.mxu0
      %v982 = vpop.f32.mrf.mxu0
      %v983 = vadd.f32 %v819, %v982
      %v984 = vpop.f32.mrf.mxu0
      %985 = vdwg.mxu0
      %v986 = vld [vmem:[#allocation2] sm:$0xe]
      %v987 = vld [vmem:[#allocation2 + $0xc] sm:$0xe]
      %v988 = vld [vmem:[#allocation2 + $0x18] sm:$0xe]
      %v989 = vld [vmem:[#allocation2 + $0x24] sm:$0xe]
      %v990 = vld [vmem:[#allocation2 + $0x30] sm:$0xe]
      %v991 = vld [vmem:[#allocation2 + $0x3c] sm:$0xe]
      %v992 = vld [vmem:[#allocation2 + $0x48] sm:$0xe]
      %v993 = vld [vmem:[#allocation2 + $0x54] sm:$0xe]
      %vm1010 = vcmask 1042432
      %vm1011 = vcmask 1046532
      %vm1012 = vmor %vm1010, %vm1011
      %v1013 = vrot.slane %v986, 5
      %v1014 = vrot.slane %v1013, 4
      %v1015 = vrot.slane %v451, 5
      %v1016 = vsel %vm1012, %v1014, %v1015
      %v1017 = vrot.slane %v1015, 4
      %v1018 = vrot.slane %v467, 5
      %v1019 = vsel %vm1012, %v1017, %v1018
      %v1020 = vrot.slane %v987, 5
      %v1021 = vrot.slane %v1020, 4
      %v1022 = vrot.slane %v453, 5
      %v1023 = vsel %vm1012, %v1021, %v1022
      %v1024 = vrot.slane %v1022, 4
      %v1025 = vrot.slane %v468, 5
      %v1026 = vsel %vm1012, %v1024, %v1025
      %v1027 = vrot.slane %v988, 5
      %v1028 = vrot.slane %v1027, 4
      %v1029 = vrot.slane %v455, 5
      %v1030 = vsel %vm1012, %v1028, %v1029
      %v1031 = vrot.slane %v1029, 4
      %v1032 = vrot.slane %v469, 5
      %v1033 = vsel %vm1012, %v1031, %v1032
      %v1034 = vrot.slane %v989, 5
      %v1035 = vrot.slane %v1034, 4
      %v1036 = vrot.slane %v457, 5
      %v1037 = vsel %vm1012, %v1035, %v1036
      %v1038 = vrot.slane %v1036, 4
      %v1039 = vrot.slane %v470, 5
      %v1040 = vsel %vm1012, %v1038, %v1039
      %v1041 = vrot.slane %v990, 5
      %v1042 = vrot.slane %v1041, 4
      %v1043 = vrot.slane %v459, 5
      %v1044 = vsel %vm1012, %v1042, %v1043
      %v1045 = vrot.slane %v1043, 4
      %v1046 = vrot.slane %v471, 5
      %v1047 = vsel %vm1012, %v1045, %v1046
      %v1048 = vrot.slane %v991, 5
      %v1049 = vrot.slane %v1048, 4
      %v1050 = vrot.slane %v461, 5
      %v1051 = vsel %vm1012, %v1049, %v1050
      %v1052 = vrot.slane %v1050, 4
      %v1053 = vrot.slane %v472, 5
      %v1054 = vsel %vm1012, %v1052, %v1053
      %v1055 = vrot.slane %v992, 5
      %v1056 = vrot.slane %v1055, 4
      %v1057 = vrot.slane %v463, 5
      %v1058 = vsel %vm1012, %v1056, %v1057
      %v1059 = vrot.slane %v1057, 4
      %v1060 = vrot.slane %v473, 5
      %v1061 = vsel %vm1012, %v1059, %v1060
      %v1062 = vrot.slane %v993, 5
      %v1063 = vrot.slane %v1062, 4
      %v1064 = vrot.slane %v465, 5
      %v1065 = vsel %vm1012, %v1063, %v1064
      %v1066 = vrot.slane %v1064, 4
      %v1067 = vrot.slane %v474, 5
      %v1068 = vsel %vm1012, %v1066, %v1067
      %s1069 = scalar_lea.vmem %s2, 8
      %v1070 = vld [vmem:[%s1069] sm:$0xf]
      %v1071 = vunpack.c.l.b16 %v1016
      %v1072 = vunpack.c.l.b16 %v1019
      %v1073 = vunpack.c.l.b16 %v1023
      %v1074 = vunpack.c.l.b16 %v1026
      %v1075 = vunpack.c.l.b16 %v1030
      %v1076 = vunpack.c.l.b16 %v1033
      %v1077 = vunpack.c.l.b16 %v1037
      %v1078 = vunpack.c.l.b16 %v1040
      %v1079 = vunpack.c.l.b16 %v1044
      %v1080 = vunpack.c.l.b16 %v1047
      %v1081 = vunpack.c.l.b16 %v1051
      %v1082 = vunpack.c.l.b16 %v1054
      %v1083 = vunpack.c.l.b16 %v1058
      %v1084 = vunpack.c.l.b16 %v1061
      %v1085 = vunpack.c.l.b16 %v1065
      %v1086 = vunpack.c.l.b16 %v1068
      %v1087 = vpack.c.b16 %v1072, %v1071
      %v1088 = vpack.c.b16 %v1074, %v1073
      %v1089 = vpack.c.b16 %v1076, %v1075
      %v1090 = vpack.c.b16 %v1078, %v1077
      %v1091 = vpack.c.b16 %v1080, %v1079
      %v1092 = vpack.c.b16 %v1082, %v1081
      %v1093 = vpack.c.b16 %v1084, %v1083
      %v1094 = vpack.c.b16 %v1086, %v1085
      %v1096 = vsel %vm696, %v1087, 0
      %v1099 = vsel %vm696, %v1088, 0
      %v1102 = vsel %vm696, %v1089, 0
      %v1105 = vsel %vm696, %v1090, 0
      %v1108 = vsel %vm696, %v1091, 0
      %v1111 = vsel %vm696, %v1092, 0
      %v1114 = vsel %vm696, %v1093, 0
      %v1117 = vsel %vm696, %v1094, 0
      %v1120 = vsel %vm721, %v1070, 0
      %1122 = vmatprep.subr.bf16.mxu0 0
      %1123 = vmatpush1.bf16.msra.mxu0 0
      %1124 = vmatprep.subr.bf16.mxu0 0
      %1125 = vmatpush1.bf16.msra.mxu0 0
      %1126 = vmatprep.subr.bf16.mxu0 0
      %1127 = vmatpush1.bf16.msra.mxu0 0
      %1128 = vmatprep.subr.bf16.mxu0 0
      %1129 = vmatpush1.bf16.msra.mxu0 0
      %1130 = vmatprep.subr.bf16.mxu0 0
      %1131 = vmatpush1.bf16.msra.mxu0 0
      %1132 = vmatprep.subr.bf16.mxu0 0
      %1133 = vmatpush1.bf16.msra.mxu0 0
      %1134 = vmatprep.subr.bf16.mxu0 0
      %1135 = vmatpush1.bf16.msra.mxu0 0
      %1136 = vmatprep.subr.bf16.mxu0 0
      %1137 = vmatpush1.bf16.msra.mxu0 %v1120
      %1138 = vmatprep.subr.bf16.mxu0 0
      %1139 = vmatpush2.bf16.msra.mxu0 0
      %1140 = vmatprep.subr.bf16.mxu0 0
      %1141 = vmatpush2.bf16.msra.mxu0 0
      %1142 = vmatprep.subr.bf16.mxu0 0
      %1143 = vmatpush2.bf16.msra.mxu0 0
      %1144 = vmatprep.subr.bf16.mxu0 0
      %1145 = vmatpush2.bf16.msra.mxu0 0
      %1146 = vmatprep.subr.bf16.mxu0 0
      %1147 = vmatpush2.bf16.msra.mxu0 0
      %1148 = vmatprep.subr.bf16.mxu0 0
      %1149 = vmatpush2.bf16.msra.mxu0 0
      %1150 = vmatprep.subr.bf16.mxu0 0
      %1151 = vmatpush2.bf16.msra.mxu0 0
      %1152 = vmatprep.subr.bf16.mxu0 0
      %1153 = vmatpush2.bf16.msra.mxu0 0
      %1154 = vmatprep.mubr.bf16.mxu0 0
      %1155 = vmatmul.mubr.bf16.gmra.mxu0 %v1096
      %v1156 = vpop.f32.mrf.mxu0
      %v1157 = vadd.f32 0.0, %v1156
      %v1158 = vpop.f32.mrf.mxu0
      %v1159 = vpop.f32.mrf.mxu0
      %v1160 = vadd.f32 0.0, %v1159
      %v1161 = vpop.f32.mrf.mxu0
      %1162 = vmatprep.mubr.bf16.mxu0 0
      %1163 = vmatmul.mubr.bf16.gmra.mxu0 %v1099
      %v1164 = vpop.f32.mrf.mxu0
      %v1165 = vadd.f32 0.0, %v1164
      %v1166 = vpop.f32.mrf.mxu0
      %v1167 = vpop.f32.mrf.mxu0
      %v1168 = vadd.f32 0.0, %v1167
      %v1169 = vpop.f32.mrf.mxu0
      %1170 = vmatprep.mubr.bf16.mxu0 0
      %1171 = vmatmul.mubr.bf16.gmra.mxu0 %v1102
      %v1172 = vpop.f32.mrf.mxu0
      %v1173 = vadd.f32 0.0, %v1172
      %v1174 = vpop.f32.mrf.mxu0
      %v1175 = vpop.f32.mrf.mxu0
      %v1176 = vadd.f32 0.0, %v1175
      %v1177 = vpop.f32.mrf.mxu0
      %1178 = vmatprep.mubr.bf16.mxu0 0
      %1179 = vmatmul.mubr.bf16.gmra.mxu0 %v1105
      %v1180 = vpop.f32.mrf.mxu0
      %v1181 = vadd.f32 0.0, %v1180
      %v1182 = vpop.f32.mrf.mxu0
      %v1183 = vpop.f32.mrf.mxu0
      %v1184 = vadd.f32 0.0, %v1183
      %v1185 = vpop.f32.mrf.mxu0
      %1186 = vmatprep.mubr.bf16.mxu0 0
      %1187 = vmatmul.mubr.bf16.gmra.mxu0 %v1108
      %v1188 = vpop.f32.mrf.mxu0
      %v1189 = vadd.f32 0.0, %v1188
      %v1190 = vpop.f32.mrf.mxu0
      %v1191 = vpop.f32.mrf.mxu0
      %v1192 = vadd.f32 0.0, %v1191
      %v1193 = vpop.f32.mrf.mxu0
      %1194 = vmatprep.mubr.bf16.mxu0 0
      %1195 = vmatmul.mubr.bf16.gmra.mxu0 %v1111
      %v1196 = vpop.f32.mrf.mxu0
      %v1197 = vadd.f32 0.0, %v1196
      %v1198 = vpop.f32.mrf.mxu0
      %v1199 = vpop.f32.mrf.mxu0
      %v1200 = vadd.f32 0.0, %v1199
      %v1201 = vpop.f32.mrf.mxu0
      %1202 = vmatprep.mubr.bf16.mxu0 0
      %1203 = vmatmul.mubr.bf16.gmra.mxu0 %v1114
      %v1204 = vpop.f32.mrf.mxu0
      %v1205 = vadd.f32 0.0, %v1204
      %v1206 = vpop.f32.mrf.mxu0
      %v1207 = vpop.f32.mrf.mxu0
      %v1208 = vadd.f32 0.0, %v1207
      %v1209 = vpop.f32.mrf.mxu0
      %1210 = vmatprep.mubr.bf16.mxu0 0
      %1211 = vmatmul.mubr.bf16.gmra.mxu0 %v1117
      %v1212 = vpop.f32.mrf.mxu0
      %v1213 = vadd.f32 0.0, %v1212
      %v1214 = vpop.f32.mrf.mxu0
      %v1215 = vpop.f32.mrf.mxu0
      %v1216 = vadd.f32 0.0, %v1215
      %v1217 = vpop.f32.mrf.mxu0
      %1218 = vdwg.mxu0
      %v1219 = vadd.f32 %v924, %v1157
      %v1220 = vadd.f32 %v927, %v1160
      %v1221 = vadd.f32 %v932, %v1165
      %v1222 = vadd.f32 %v935, %v1168
      %v1223 = vadd.f32 %v940, %v1173
      %v1224 = vadd.f32 %v943, %v1176
      %v1225 = vadd.f32 %v948, %v1181
      %v1226 = vadd.f32 %v951, %v1184
      %v1227 = vadd.f32 %v956, %v1189
      %v1228 = vadd.f32 %v959, %v1192
      %v1229 = vadd.f32 %v964, %v1197
      %v1230 = vadd.f32 %v967, %v1200
      %v1231 = vadd.f32 %v972, %v1205
      %v1232 = vadd.f32 %v975, %v1208
      %v1233 = vadd.f32 %v980, %v1213
      %v1234 = vadd.f32 %v983, %v1216
      %s1235 = scalar_lea.vmem [#allocation2], 12
      %v1236 = vld [vmem:[%s1235] sm:$0xf]
      %v1237 = vld [vmem:[%s1235 + $0x4] sm:$0xf]
      %v1238 = vld [vmem:[%s1235 + $0xc] sm:$0xf]
      %v1239 = vld [vmem:[%s1235 + $0x10] sm:$0xf]
      %v1240 = vld [vmem:[%s1235 + $0x18] sm:$0xf]
      %v1241 = vld [vmem:[%s1235 + $0x1c] sm:$0xf]
      %v1242 = vld [vmem:[%s1235 + $0x24] sm:$0xf]
      %v1243 = vld [vmem:[%s1235 + $0x28] sm:$0xf]
      %v1244 = vld [vmem:[%s1235 + $0x30] sm:$0xf]
      %v1245 = vld [vmem:[%s1235 + $0x34] sm:$0xf]
      %v1246 = vld [vmem:[%s1235 + $0x3c] sm:$0xf]
      %v1247 = vld [vmem:[%s1235 + $0x40] sm:$0xf]
      %v1248 = vld [vmem:[%s1235 + $0x48] sm:$0xf]
      %v1249 = vld [vmem:[%s1235 + $0x4c] sm:$0xf]
      %v1250 = vld [vmem:[%s1235 + $0x54] sm:$0xf]
      %v1251 = vld [vmem:[%s1235 + $0x58] sm:$0xf]
      %s1252 = scalar_lea.vmem %s2, 12
      %v1253 = vld [vmem:[%s1252] sm:$0xf]
      %v1270 = vunpack.c.l.b16 %v1236
      %v1271 = vunpack.c.l.b16 %v1237
      %v1272 = vunpack.c.l.b16 %v1238
      %v1273 = vunpack.c.l.b16 %v1239
      %v1274 = vunpack.c.l.b16 %v1240
      %v1275 = vunpack.c.l.b16 %v1241
      %v1276 = vunpack.c.l.b16 %v1242
      %v1277 = vunpack.c.l.b16 %v1243
      %v1278 = vunpack.c.l.b16 %v1244
      %v1279 = vunpack.c.l.b16 %v1245
      %v1280 = vunpack.c.l.b16 %v1246
      %v1281 = vunpack.c.l.b16 %v1247
      %v1282 = vunpack.c.l.b16 %v1248
      %v1283 = vunpack.c.l.b16 %v1249
      %v1284 = vunpack.c.l.b16 %v1250
      %v1285 = vunpack.c.l.b16 %v1251
      %v1286 = vpack.c.b16 %v1271, %v1270
      %v1287 = vpack.c.b16 %v1273, %v1272
      %v1288 = vpack.c.b16 %v1275, %v1274
      %v1289 = vpack.c.b16 %v1277, %v1276
      %v1290 = vpack.c.b16 %v1279, %v1278
      %v1291 = vpack.c.b16 %v1281, %v1280
      %v1292 = vpack.c.b16 %v1283, %v1282
      %v1293 = vpack.c.b16 %v1285, %v1284
      %v1295 = vsel %vm696, %v1286, 0
      %v1298 = vsel %vm696, %v1287, 0
      %v1301 = vsel %vm696, %v1288, 0
      %v1304 = vsel %vm696, %v1289, 0
      %v1307 = vsel %vm696, %v1290, 0
      %v1310 = vsel %vm696, %v1291, 0
      %v1313 = vsel %vm696, %v1292, 0
      %v1316 = vsel %vm696, %v1293, 0
      %v1319 = vsel %vm721, %v1253, 0
      %1321 = vmatprep.subr.bf16.mxu0 0
      %1322 = vmatpush1.bf16.msra.mxu0 0
      %1323 = vmatprep.subr.bf16.mxu0 0
      %1324 = vmatpush1.bf16.msra.mxu0 0
      %1325 = vmatprep.subr.bf16.mxu0 0
      %1326 = vmatpush1.bf16.msra.mxu0 0
      %1327 = vmatprep.subr.bf16.mxu0 0
      %1328 = vmatpush1.bf16.msra.mxu0 0
      %1329 = vmatprep.subr.bf16.mxu0 0
      %1330 = vmatpush1.bf16.msra.mxu0 0
      %1331 = vmatprep.subr.bf16.mxu0 0
      %1332 = vmatpush1.bf16.msra.mxu0 0
      %1333 = vmatprep.subr.bf16.mxu0 0
      %1334 = vmatpush1.bf16.msra.mxu0 0
      %1335 = vmatprep.subr.bf16.mxu0 0
      %1336 = vmatpush1.bf16.msra.mxu0 %v1319
      %1337 = vmatprep.subr.bf16.mxu0 0
      %1338 = vmatpush2.bf16.msra.mxu0 0
      %1339 = vmatprep.subr.bf16.mxu0 0
      %1340 = vmatpush2.bf16.msra.mxu0 0
      %1341 = vmatprep.subr.bf16.mxu0 0
      %1342 = vmatpush2.bf16.msra.mxu0 0
      %1343 = vmatprep.subr.bf16.mxu0 0
      %1344 = vmatpush2.bf16.msra.mxu0 0
      %1345 = vmatprep.subr.bf16.mxu0 0
      %1346 = vmatpush2.bf16.msra.mxu0 0
      %1347 = vmatprep.subr.bf16.mxu0 0
      %1348 = vmatpush2.bf16.msra.mxu0 0
      %1349 = vmatprep.subr.bf16.mxu0 0
      %1350 = vmatpush2.bf16.msra.mxu0 0
      %1351 = vmatprep.subr.bf16.mxu0 0
      %1352 = vmatpush2.bf16.msra.mxu0 0
      %1353 = vmatprep.mubr.bf16.mxu0 0
      %1354 = vmatmul.mubr.bf16.gmra.mxu0 %v1295
      %v1355 = vpop.f32.mrf.mxu0
      %v1356 = vadd.f32 0.0, %v1355
      %v1357 = vpop.f32.mrf.mxu0
      %v1358 = vpop.f32.mrf.mxu0
      %v1359 = vadd.f32 0.0, %v1358
      %v1360 = vpop.f32.mrf.mxu0
      %1361 = vmatprep.mubr.bf16.mxu0 0
      %1362 = vmatmul.mubr.bf16.gmra.mxu0 %v1298
      %v1363 = vpop.f32.mrf.mxu0
      %v1364 = vadd.f32 0.0, %v1363
      %v1365 = vpop.f32.mrf.mxu0
      %v1366 = vpop.f32.mrf.mxu0
      %v1367 = vadd.f32 0.0, %v1366
      %v1368 = vpop.f32.mrf.mxu0
      %1369 = vmatprep.mubr.bf16.mxu0 0
      %1370 = vmatmul.mubr.bf16.gmra.mxu0 %v1301
      %v1371 = vpop.f32.mrf.mxu0
      %v1372 = vadd.f32 0.0, %v1371
      %v1373 = vpop.f32.mrf.mxu0
      %v1374 = vpop.f32.mrf.mxu0
      %v1375 = vadd.f32 0.0, %v1374
      %v1376 = vpop.f32.mrf.mxu0
      %1377 = vmatprep.mubr.bf16.mxu0 0
      %1378 = vmatmul.mubr.bf16.gmra.mxu0 %v1304
      %v1379 = vpop.f32.mrf.mxu0
      %v1380 = vadd.f32 0.0, %v1379
      %v1381 = vpop.f32.mrf.mxu0
      %v1382 = vpop.f32.mrf.mxu0
      %v1383 = vadd.f32 0.0, %v1382
      %v1384 = vpop.f32.mrf.mxu0
      %1385 = vmatprep.mubr.bf16.mxu0 0
      %1386 = vmatmul.mubr.bf16.gmra.mxu0 %v1307
      %v1387 = vpop.f32.mrf.mxu0
      %v1388 = vadd.f32 0.0, %v1387
      %v1389 = vpop.f32.mrf.mxu0
      %v1390 = vpop.f32.mrf.mxu0
      %v1391 = vadd.f32 0.0, %v1390
      %v1392 = vpop.f32.mrf.mxu0
      %1393 = vmatprep.mubr.bf16.mxu0 0
      %1394 = vmatmul.mubr.bf16.gmra.mxu0 %v1310
      %v1395 = vpop.f32.mrf.mxu0
      %v1396 = vadd.f32 0.0, %v1395
      %v1397 = vpop.f32.mrf.mxu0
      %v1398 = vpop.f32.mrf.mxu0
      %v1399 = vadd.f32 0.0, %v1398
      %v1400 = vpop.f32.mrf.mxu0
      %1401 = vmatprep.mubr.bf16.mxu0 0
      %1402 = vmatmul.mubr.bf16.gmra.mxu0 %v1313
      %v1403 = vpop.f32.mrf.mxu0
      %v1404 = vadd.f32 0.0, %v1403
      %v1405 = vpop.f32.mrf.mxu0
      %v1406 = vpop.f32.mrf.mxu0
      %v1407 = vadd.f32 0.0, %v1406
      %v1408 = vpop.f32.mrf.mxu0
      %1409 = vmatprep.mubr.bf16.mxu0 0
      %1410 = vmatmul.mubr.bf16.gmra.mxu0 %v1316
      %v1411 = vpop.f32.mrf.mxu0
      %v1412 = vadd.f32 0.0, %v1411
      %v1413 = vpop.f32.mrf.mxu0
      %v1414 = vpop.f32.mrf.mxu0
      %v1415 = vadd.f32 0.0, %v1414
      %v1416 = vpop.f32.mrf.mxu0
      %1417 = vdwg.mxu0
      %v1418 = vadd.f32 %v1219, %v1356
      %v1419 = vadd.f32 %v1220, %v1359
      %v1420 = vadd.f32 %v1221, %v1364
      %v1421 = vadd.f32 %v1222, %v1367
      %v1422 = vadd.f32 %v1223, %v1372
      %v1423 = vadd.f32 %v1224, %v1375
      %v1424 = vadd.f32 %v1225, %v1380
      %v1425 = vadd.f32 %v1226, %v1383
      %v1426 = vadd.f32 %v1227, %v1388
      %v1427 = vadd.f32 %v1228, %v1391
      %v1428 = vadd.f32 %v1229, %v1396
      %v1429 = vadd.f32 %v1230, %v1399
      %v1430 = vadd.f32 %v1231, %v1404
      %v1431 = vadd.f32 %v1232, %v1407
      %v1432 = vadd.f32 %v1233, %v1412
      %v1433 = vadd.f32 %v1234, %v1415
      %v1434 = vld [vmem:[%s1235] sm:$0xf]
      %v1435 = vld [vmem:[%s1235 + $0x4] sm:$0xf]
      %v1436 = vld [vmem:[%s1235 + $0x8] sm:$0x1]
      %v1437 = vld [vmem:[%s1235 + $0xc] sm:$0xf]
      %v1438 = vld [vmem:[%s1235 + $0x10] sm:$0xf]
      %v1439 = vld [vmem:[%s1235 + $0x14] sm:$0x1]
      %v1440 = vld [vmem:[%s1235 + $0x18] sm:$0xf]
      %v1441 = vld [vmem:[%s1235 + $0x1c] sm:$0xf]
      %v1442 = vld [vmem:[%s1235 + $0x20] sm:$0x1]
      %v1443 = vld [vmem:[%s1235 + $0x24] sm:$0xf]
      %v1444 = vld [vmem:[%s1235 + $0x28] sm:$0xf]
      %v1445 = vld [vmem:[%s1235 + $0x2c] sm:$0x1]
      %v1446 = vld [vmem:[%s1235 + $0x30] sm:$0xf]
      %v1447 = vld [vmem:[%s1235 + $0x34] sm:$0xf]
      %v1448 = vld [vmem:[%s1235 + $0x38] sm:$0x1]
      %v1449 = vld [vmem:[%s1235 + $0x3c] sm:$0xf]
      %v1450 = vld [vmem:[%s1235 + $0x40] sm:$0xf]
      %v1451 = vld [vmem:[%s1235 + $0x44] sm:$0x1]
      %v1452 = vld [vmem:[%s1235 + $0x48] sm:$0xf]
      %v1453 = vld [vmem:[%s1235 + $0x4c] sm:$0xf]
      %v1454 = vld [vmem:[%s1235 + $0x50] sm:$0x1]
      %v1455 = vld [vmem:[%s1235 + $0x54] sm:$0xf]
      %v1456 = vld [vmem:[%s1235 + $0x58] sm:$0xf]
      %v1457 = vld [vmem:[%s1235 + $0x5c] sm:$0x1]
      %v1459 = vshrl.u32 %v1434, 16
      %v1461 = vrot.slane %v1459, 4
      %v1462 = vshll.u32 %v1434, 16
      %v1464 = vrot.slane %v1462, 5
      %v1465 = vor.u32 %v1461, %v1464
      %v1466 = vrot.slane %v1465, 4
      %v1468 = vshll.u32 %v1435, 16
      %v1470 = vrot.slane %v1468, 5
      %v1471 = vsel %vm477, %v1466, %v1470
      %v1472 = vshrl.u32 %v1435, 16
      %v1474 = vrot.slane %v1472, 4
      %v1475 = vor.u32 %v1474, %v1470
      %v1476 = vrot.slane %v1475, 4
      %v1478 = vshll.u32 %v1436, 16
      %v1480 = vrot.slane %v1478, 5
      %v1481 = vsel %vm477, %v1476, %v1480
      %v1483 = vshrl.u32 %v1437, 16
      %v1485 = vrot.slane %v1483, 4
      %v1486 = vshll.u32 %v1437, 16
      %v1488 = vrot.slane %v1486, 5
      %v1489 = vor.u32 %v1485, %v1488
      %v1490 = vrot.slane %v1489, 4
      %v1492 = vshll.u32 %v1438, 16
      %v1494 = vrot.slane %v1492, 5
      %v1495 = vsel %vm477, %v1490, %v1494
      %v1496 = vshrl.u32 %v1438, 16
      %v1498 = vrot.slane %v1496, 4
      %v1499 = vor.u32 %v1498, %v1494
      %v1500 = vrot.slane %v1499, 4
      %v1502 = vshll.u32 %v1439, 16
      %v1504 = vrot.slane %v1502, 5
      %v1505 = vsel %vm477, %v1500, %v1504
      %v1507 = vshrl.u32 %v1440, 16
      %v1509 = vrot.slane %v1507, 4
      %v1510 = vshll.u32 %v1440, 16
      %v1512 = vrot.slane %v1510, 5
      %v1513 = vor.u32 %v1509, %v1512
      %v1514 = vrot.slane %v1513, 4
      %v1516 = vshll.u32 %v1441, 16
      %v1518 = vrot.slane %v1516, 5
      %v1519 = vsel %vm477, %v1514, %v1518
      %v1520 = vshrl.u32 %v1441, 16
      %v1522 = vrot.slane %v1520, 4
      %v1523 = vor.u32 %v1522, %v1518
      %v1524 = vrot.slane %v1523, 4
      %v1526 = vshll.u32 %v1442, 16
      %v1528 = vrot.slane %v1526, 5
      %v1529 = vsel %vm477, %v1524, %v1528
      %v1531 = vshrl.u32 %v1443, 16
      %v1533 = vrot.slane %v1531, 4
      %v1534 = vshll.u32 %v1443, 16
      %v1536 = vrot.slane %v1534, 5
      %v1537 = vor.u32 %v1533, %v1536
      %v1538 = vrot.slane %v1537, 4
      %v1540 = vshll.u32 %v1444, 16
      %v1542 = vrot.slane %v1540, 5
      %v1543 = vsel %vm477, %v1538, %v1542
      %v1544 = vshrl.u32 %v1444, 16
      %v1546 = vrot.slane %v1544, 4
      %v1547 = vor.u32 %v1546, %v1542
      %v1548 = vrot.slane %v1547, 4
      %v1550 = vshll.u32 %v1445, 16
      %v1552 = vrot.slane %v1550, 5
      %v1553 = vsel %vm477, %v1548, %v1552
      %v1555 = vshrl.u32 %v1446, 16
      %v1557 = vrot.slane %v1555, 4
      %v1558 = vshll.u32 %v1446, 16
      %v1560 = vrot.slane %v1558, 5
      %v1561 = vor.u32 %v1557, %v1560
      %v1562 = vrot.slane %v1561, 4
      %v1564 = vshll.u32 %v1447, 16
      %v1566 = vrot.slane %v1564, 5
      %v1567 = vsel %vm477, %v1562, %v1566
      %v1568 = vshrl.u32 %v1447, 16
      %v1570 = vrot.slane %v1568, 4
      %v1571 = vor.u32 %v1570, %v1566
      %v1572 = vrot.slane %v1571, 4
      %v1574 = vshll.u32 %v1448, 16
      %v1576 = vrot.slane %v1574, 5
      %v1577 = vsel %vm477, %v1572, %v1576
      %v1579 = vshrl.u32 %v1449, 16
      %v1581 = vrot.slane %v1579, 4
      %v1582 = vshll.u32 %v1449, 16
      %v1584 = vrot.slane %v1582, 5
      %v1585 = vor.u32 %v1581, %v1584
      %v1586 = vrot.slane %v1585, 4
      %v1588 = vshll.u32 %v1450, 16
      %v1590 = vrot.slane %v1588, 5
      %v1591 = vsel %vm477, %v1586, %v1590
      %v1592 = vshrl.u32 %v1450, 16
      %v1594 = vrot.slane %v1592, 4
      %v1595 = vor.u32 %v1594, %v1590
      %v1596 = vrot.slane %v1595, 4
      %v1598 = vshll.u32 %v1451, 16
      %v1600 = vrot.slane %v1598, 5
      %v1601 = vsel %vm477, %v1596, %v1600
      %v1603 = vshrl.u32 %v1452, 16
      %v1605 = vrot.slane %v1603, 4
      %v1606 = vshll.u32 %v1452, 16
      %v1608 = vrot.slane %v1606, 5
      %v1609 = vor.u32 %v1605, %v1608
      %v1610 = vrot.slane %v1609, 4
      %v1612 = vshll.u32 %v1453, 16
      %v1614 = vrot.slane %v1612, 5
      %v1615 = vsel %vm477, %v1610, %v1614
      %v1616 = vshrl.u32 %v1453, 16
      %v1618 = vrot.slane %v1616, 4
      %v1619 = vor.u32 %v1618, %v1614
      %v1620 = vrot.slane %v1619, 4
      %v1622 = vshll.u32 %v1454, 16
      %v1624 = vrot.slane %v1622, 5
      %v1625 = vsel %vm477, %v1620, %v1624
      %v1627 = vshrl.u32 %v1455, 16
      %v1629 = vrot.slane %v1627, 4
      %v1630 = vshll.u32 %v1455, 16
      %v1632 = vrot.slane %v1630, 5
      %v1633 = vor.u32 %v1629, %v1632
      %v1634 = vrot.slane %v1633, 4
      %v1636 = vshll.u32 %v1456, 16
      %v1638 = vrot.slane %v1636, 5
      %v1639 = vsel %vm477, %v1634, %v1638
      %v1640 = vshrl.u32 %v1456, 16
      %v1642 = vrot.slane %v1640, 4
      %v1643 = vor.u32 %v1642, %v1638
      %v1644 = vrot.slane %v1643, 4
      %v1646 = vshll.u32 %v1457, 16
      %v1648 = vrot.slane %v1646, 5
      %v1649 = vsel %vm477, %v1644, %v1648
      %s1650 = scalar_lea.vmem %s2, 16
      %v1651 = vld [vmem:[%s1650] sm:$0xf]
      %v1652 = vunpack.c.l.b16 %v1471
      %v1653 = vunpack.c.l.b16 %v1481
      %v1654 = vunpack.c.l.b16 %v1495
      %v1655 = vunpack.c.l.b16 %v1505
      %v1656 = vunpack.c.l.b16 %v1519
      %v1657 = vunpack.c.l.b16 %v1529
      %v1658 = vunpack.c.l.b16 %v1543
      %v1659 = vunpack.c.l.b16 %v1553
      %v1660 = vunpack.c.l.b16 %v1567
      %v1661 = vunpack.c.l.b16 %v1577
      %v1662 = vunpack.c.l.b16 %v1591
      %v1663 = vunpack.c.l.b16 %v1601
      %v1664 = vunpack.c.l.b16 %v1615
      %v1665 = vunpack.c.l.b16 %v1625
      %v1666 = vunpack.c.l.b16 %v1639
      %v1667 = vunpack.c.l.b16 %v1649
      %v1668 = vpack.c.b16 %v1653, %v1652
      %v1669 = vpack.c.b16 %v1655, %v1654
      %v1670 = vpack.c.b16 %v1657, %v1656
      %v1671 = vpack.c.b16 %v1659, %v1658
      %v1672 = vpack.c.b16 %v1661, %v1660
      %v1673 = vpack.c.b16 %v1663, %v1662
      %v1674 = vpack.c.b16 %v1665, %v1664
      %v1675 = vpack.c.b16 %v1667, %v1666
      %v1677 = vsel %vm696, %v1668, 0
      %v1680 = vsel %vm696, %v1669, 0
      %v1683 = vsel %vm696, %v1670, 0
      %v1686 = vsel %vm696, %v1671, 0
      %v1689 = vsel %vm696, %v1672, 0
      %v1692 = vsel %vm696, %v1673, 0
      %v1695 = vsel %vm696, %v1674, 0
      %v1698 = vsel %vm696, %v1675, 0
      %v1701 = vsel %vm721, %v1651, 0
      %1703 = vmatprep.subr.bf16.mxu0 0
      %1704 = vmatpush1.bf16.msra.mxu0 0
      %1705 = vmatprep.subr.bf16.mxu0 0
      %1706 = vmatpush1.bf16.msra.mxu0 0
      %1707 = vmatprep.subr.bf16.mxu0 0
      %1708 = vmatpush1.bf16.msra.mxu0 0
      %1709 = vmatprep.subr.bf16.mxu0 0
      %1710 = vmatpush1.bf16.msra.mxu0 0
      %1711 = vmatprep.subr.bf16.mxu0 0
      %1712 = vmatpush1.bf16.msra.mxu0 0
      %1713 = vmatprep.subr.bf16.mxu0 0
      %1714 = vmatpush1.bf16.msra.mxu0 0
      %1715 = vmatprep.subr.bf16.mxu0 0
      %1716 = vmatpush1.bf16.msra.mxu0 0
      %1717 = vmatprep.subr.bf16.mxu0 0
      %1718 = vmatpush1.bf16.msra.mxu0 %v1701
      %1719 = vmatprep.subr.bf16.mxu0 0
      %1720 = vmatpush2.bf16.msra.mxu0 0
      %1721 = vmatprep.subr.bf16.mxu0 0
      %1722 = vmatpush2.bf16.msra.mxu0 0
      %1723 = vmatprep.subr.bf16.mxu0 0
      %1724 = vmatpush2.bf16.msra.mxu0 0
      %1725 = vmatprep.subr.bf16.mxu0 0
      %1726 = vmatpush2.bf16.msra.mxu0 0
      %1727 = vmatprep.subr.bf16.mxu0 0
      %1728 = vmatpush2.bf16.msra.mxu0 0
      %1729 = vmatprep.subr.bf16.mxu0 0
      %1730 = vmatpush2.bf16.msra.mxu0 0
      %1731 = vmatprep.subr.bf16.mxu0 0
      %1732 = vmatpush2.bf16.msra.mxu0 0
      %1733 = vmatprep.subr.bf16.mxu0 0
      %1734 = vmatpush2.bf16.msra.mxu0 0
      %1735 = vmatprep.mubr.bf16.mxu0 0
      %1736 = vmatmul.mubr.bf16.gmra.mxu0 %v1677
      %v1737 = vpop.f32.mrf.mxu0
      %v1738 = vadd.f32 0.0, %v1737
      %v1739 = vpop.f32.mrf.mxu0
      %v1740 = vpop.f32.mrf.mxu0
      %v1741 = vadd.f32 0.0, %v1740
      %v1742 = vpop.f32.mrf.mxu0
      %1743 = vmatprep.mubr.bf16.mxu0 0
      %1744 = vmatmul.mubr.bf16.gmra.mxu0 %v1680
      %v1745 = vpop.f32.mrf.mxu0
      %v1746 = vadd.f32 0.0, %v1745
      %v1747 = vpop.f32.mrf.mxu0
      %v1748 = vpop.f32.mrf.mxu0
      %v1749 = vadd.f32 0.0, %v1748
      %v1750 = vpop.f32.mrf.mxu0
      %1751 = vmatprep.mubr.bf16.mxu0 0
      %1752 = vmatmul.mubr.bf16.gmra.mxu0 %v1683
      %v1753 = vpop.f32.mrf.mxu0
      %v1754 = vadd.f32 0.0, %v1753
      %v1755 = vpop.f32.mrf.mxu0
      %v1756 = vpop.f32.mrf.mxu0
      %v1757 = vadd.f32 0.0, %v1756
      %v1758 = vpop.f32.mrf.mxu0
      %1759 = vmatprep.mubr.bf16.mxu0 0
      %1760 = vmatmul.mubr.bf16.gmra.mxu0 %v1686
      %v1761 = vpop.f32.mrf.mxu0
      %v1762 = vadd.f32 0.0, %v1761
      %v1763 = vpop.f32.mrf.mxu0
      %v1764 = vpop.f32.mrf.mxu0
      %v1765 = vadd.f32 0.0, %v1764
      %v1766 = vpop.f32.mrf.mxu0
      %1767 = vmatprep.mubr.bf16.mxu0 0
      %1768 = vmatmul.mubr.bf16.gmra.mxu0 %v1689
      %v1769 = vpop.f32.mrf.mxu0
      %v1770 = vadd.f32 0.0, %v1769
      %v1771 = vpop.f32.mrf.mxu0
      %v1772 = vpop.f32.mrf.mxu0
      %v1773 = vadd.f32 0.0, %v1772
      %v1774 = vpop.f32.mrf.mxu0
      %1775 = vmatprep.mubr.bf16.mxu0 0
      %1776 = vmatmul.mubr.bf16.gmra.mxu0 %v1692
      %v1777 = vpop.f32.mrf.mxu0
      %v1778 = vadd.f32 0.0, %v1777
      %v1779 = vpop.f32.mrf.mxu0
      %v1780 = vpop.f32.mrf.mxu0
      %v1781 = vadd.f32 0.0, %v1780
      %v1782 = vpop.f32.mrf.mxu0
      %1783 = vmatprep.mubr.bf16.mxu0 0
      %1784 = vmatmul.mubr.bf16.gmra.mxu0 %v1695
      %v1785 = vpop.f32.mrf.mxu0
      %v1786 = vadd.f32 0.0, %v1785
      %v1787 = vpop.f32.mrf.mxu0
      %v1788 = vpop.f32.mrf.mxu0
      %v1789 = vadd.f32 0.0, %v1788
      %v1790 = vpop.f32.mrf.mxu0
      %1791 = vmatprep.mubr.bf16.mxu0 0
      %1792 = vmatmul.mubr.bf16.gmra.mxu0 %v1698
      %v1793 = vpop.f32.mrf.mxu0
      %v1794 = vadd.f32 0.0, %v1793
      %v1795 = vpop.f32.mrf.mxu0
      %v1796 = vpop.f32.mrf.mxu0
      %v1797 = vadd.f32 0.0, %v1796
      %v1798 = vpop.f32.mrf.mxu0
      %1799 = vdwg.mxu0
      %v1800 = vadd.f32 %v1418, %v1738
      %v1801 = vadd.f32 %v1419, %v1741
      %v1802 = vadd.f32 %v1420, %v1746
      %v1803 = vadd.f32 %v1421, %v1749
      %v1804 = vadd.f32 %v1422, %v1754
      %v1805 = vadd.f32 %v1423, %v1757
      %v1806 = vadd.f32 %v1424, %v1762
      %v1807 = vadd.f32 %v1425, %v1765
      %v1808 = vadd.f32 %v1426, %v1770
      %v1809 = vadd.f32 %v1427, %v1773
      %v1810 = vadd.f32 %v1428, %v1778
      %v1811 = vadd.f32 %v1429, %v1781
      %v1812 = vadd.f32 %v1430, %v1786
      %v1813 = vadd.f32 %v1431, %v1789
      %v1814 = vadd.f32 %v1432, %v1794
      %v1815 = vadd.f32 %v1433, %v1797
      %v1816 = vld [vmem:[%s1235] sm:$0xe]
      %v1817 = vld [vmem:[%s1235 + $0xc] sm:$0xe]
      %v1818 = vld [vmem:[%s1235 + $0x18] sm:$0xe]
      %v1819 = vld [vmem:[%s1235 + $0x24] sm:$0xe]
      %v1820 = vld [vmem:[%s1235 + $0x30] sm:$0xe]
      %v1821 = vld [vmem:[%s1235 + $0x3c] sm:$0xe]
      %v1822 = vld [vmem:[%s1235 + $0x48] sm:$0xe]
      %v1823 = vld [vmem:[%s1235 + $0x54] sm:$0xe]
      %v1848 = vrot.slane %v1816, 5
      %v1849 = vrot.slane %v1848, 4
      %v1850 = vrot.slane %v1435, 5
      %v1851 = vsel %vm1012, %v1849, %v1850
      %v1852 = vrot.slane %v1850, 4
      %v1853 = vrot.slane %v1436, 5
      %v1854 = vsel %vm1012, %v1852, %v1853
      %v1855 = vrot.slane %v1817, 5
      %v1856 = vrot.slane %v1855, 4
      %v1857 = vrot.slane %v1438, 5
      %v1858 = vsel %vm1012, %v1856, %v1857
      %v1859 = vrot.slane %v1857, 4
      %v1860 = vrot.slane %v1439, 5
      %v1861 = vsel %vm1012, %v1859, %v1860
      %v1862 = vrot.slane %v1818, 5
      %v1863 = vrot.slane %v1862, 4
      %v1864 = vrot.slane %v1441, 5
      %v1865 = vsel %vm1012, %v1863, %v1864
      %v1866 = vrot.slane %v1864, 4
      %v1867 = vrot.slane %v1442, 5
      %v1868 = vsel %vm1012, %v1866, %v1867
      %v1869 = vrot.slane %v1819, 5
      %v1870 = vrot.slane %v1869, 4
      %v1871 = vrot.slane %v1444, 5
      %v1872 = vsel %vm1012, %v1870, %v1871
      %v1873 = vrot.slane %v1871, 4
      %v1874 = vrot.slane %v1445, 5
      %v1875 = vsel %vm1012, %v1873, %v1874
      %v1876 = vrot.slane %v1820, 5
      %v1877 = vrot.slane %v1876, 4
      %v1878 = vrot.slane %v1447, 5
      %v1879 = vsel %vm1012, %v1877, %v1878
      %v1880 = vrot.slane %v1878, 4
      %v1881 = vrot.slane %v1448, 5
      %v1882 = vsel %vm1012, %v1880, %v1881
      %v1883 = vrot.slane %v1821, 5
      %v1884 = vrot.slane %v1883, 4
      %v1885 = vrot.slane %v1450, 5
      %v1886 = vsel %vm1012, %v1884, %v1885
      %v1887 = vrot.slane %v1885, 4
      %v1888 = vrot.slane %v1451, 5
      %v1889 = vsel %vm1012, %v1887, %v1888
      %v1890 = vrot.slane %v1822, 5
      %v1891 = vrot.slane %v1890, 4
      %v1892 = vrot.slane %v1453, 5
      %v1893 = vsel %vm1012, %v1891, %v1892
      %v1894 = vrot.slane %v1892, 4
      %v1895 = vrot.slane %v1454, 5
      %v1896 = vsel %vm1012, %v1894, %v1895
      %v1897 = vrot.slane %v1823, 5
      %v1898 = vrot.slane %v1897, 4
      %v1899 = vrot.slane %v1456, 5
      %v1900 = vsel %vm1012, %v1898, %v1899
      %v1901 = vrot.slane %v1899, 4
      %v1902 = vrot.slane %v1457, 5
      %v1903 = vsel %vm1012, %v1901, %v1902
      %s1904 = scalar_lea.vmem %s2, 20
      %v1905 = vld [vmem:[%s1904] sm:$0xf]
      %v1906 = vunpack.c.l.b16 %v1851
      %v1907 = vunpack.c.l.b16 %v1854
      %v1908 = vunpack.c.l.b16 %v1858
      %v1909 = vunpack.c.l.b16 %v1861
      %v1910 = vunpack.c.l.b16 %v1865
      %v1911 = vunpack.c.l.b16 %v1868
      %v1912 = vunpack.c.l.b16 %v1872
      %v1913 = vunpack.c.l.b16 %v1875
      %v1914 = vunpack.c.l.b16 %v1879
      %v1915 = vunpack.c.l.b16 %v1882
      %v1916 = vunpack.c.l.b16 %v1886
      %v1917 = vunpack.c.l.b16 %v1889
      %v1918 = vunpack.c.l.b16 %v1893
      %v1919 = vunpack.c.l.b16 %v1896
      %v1920 = vunpack.c.l.b16 %v1900
      %v1921 = vunpack.c.l.b16 %v1903
      %v1922 = vpack.c.b16 %v1907, %v1906
      %v1923 = vpack.c.b16 %v1909, %v1908
      %v1924 = vpack.c.b16 %v1911, %v1910
      %v1925 = vpack.c.b16 %v1913, %v1912
      %v1926 = vpack.c.b16 %v1915, %v1914
      %v1927 = vpack.c.b16 %v1917, %v1916
      %v1928 = vpack.c.b16 %v1919, %v1918
      %v1929 = vpack.c.b16 %v1921, %v1920
      %v1931 = vsel %vm696, %v1922, 0
      %v1934 = vsel %vm696, %v1923, 0
      %v1937 = vsel %vm696, %v1924, 0
      %v1940 = vsel %vm696, %v1925, 0
      %v1943 = vsel %vm696, %v1926, 0
      %v1946 = vsel %vm696, %v1927, 0
      %v1949 = vsel %vm696, %v1928, 0
      %v1952 = vsel %vm696, %v1929, 0
      %v1955 = vsel %vm721, %v1905, 0
      %1957 = vmatprep.subr.bf16.mxu0 0
      %1958 = vmatpush1.bf16.msra.mxu0 0
      %1959 = vmatprep.subr.bf16.mxu0 0
      %1960 = vmatpush1.bf16.msra.mxu0 0
      %1961 = vmatprep.subr.bf16.mxu0 0
      %1962 = vmatpush1.bf16.msra.mxu0 0
      %1963 = vmatprep.subr.bf16.mxu0 0
      %1964 = vmatpush1.bf16.msra.mxu0 0
      %1965 = vmatprep.subr.bf16.mxu0 0
      %1966 = vmatpush1.bf16.msra.mxu0 0
      %1967 = vmatprep.subr.bf16.mxu0 0
      %1968 = vmatpush1.bf16.msra.mxu0 0
      %1969 = vmatprep.subr.bf16.mxu0 0
      %1970 = vmatpush1.bf16.msra.mxu0 0
      %1971 = vmatprep.subr.bf16.mxu0 0
      %1972 = vmatpush1.bf16.msra.mxu0 %v1955
      %1973 = vmatprep.subr.bf16.mxu0 0
      %1974 = vmatpush2.bf16.msra.mxu0 0
      %1975 = vmatprep.subr.bf16.mxu0 0
      %1976 = vmatpush2.bf16.msra.mxu0 0
      %1977 = vmatprep.subr.bf16.mxu0 0
      %1978 = vmatpush2.bf16.msra.mxu0 0
      %1979 = vmatprep.subr.bf16.mxu0 0
      %1980 = vmatpush2.bf16.msra.mxu0 0
      %1981 = vmatprep.subr.bf16.mxu0 0
      %1982 = vmatpush2.bf16.msra.mxu0 0
      %1983 = vmatprep.subr.bf16.mxu0 0
      %1984 = vmatpush2.bf16.msra.mxu0 0
      %1985 = vmatprep.subr.bf16.mxu0 0
      %1986 = vmatpush2.bf16.msra.mxu0 0
      %1987 = vmatprep.subr.bf16.mxu0 0
      %1988 = vmatpush2.bf16.msra.mxu0 0
      %1989 = vmatprep.mubr.bf16.mxu0 0
      %1990 = vmatmul.mubr.bf16.gmra.mxu0 %v1931
      %v1991 = vpop.f32.mrf.mxu0
      %v1992 = vadd.f32 0.0, %v1991
      %v1993 = vpop.f32.mrf.mxu0
      %v1994 = vpop.f32.mrf.mxu0
      %v1995 = vadd.f32 0.0, %v1994
      %v1996 = vpop.f32.mrf.mxu0
      %1997 = vmatprep.mubr.bf16.mxu0 0
      %1998 = vmatmul.mubr.bf16.gmra.mxu0 %v1934
      %v1999 = vpop.f32.mrf.mxu0
      %v2000 = vadd.f32 0.0, %v1999
      %v2001 = vpop.f32.mrf.mxu0
      %v2002 = vpop.f32.mrf.mxu0
      %v2003 = vadd.f32 0.0, %v2002
      %v2004 = vpop.f32.mrf.mxu0
      %2005 = vmatprep.mubr.bf16.mxu0 0
      %2006 = vmatmul.mubr.bf16.gmra.mxu0 %v1937
      %v2007 = vpop.f32.mrf.mxu0
      %v2008 = vadd.f32 0.0, %v2007
      %v2009 = vpop.f32.mrf.mxu0
      %v2010 = vpop.f32.mrf.mxu0
      %v2011 = vadd.f32 0.0, %v2010
      %v2012 = vpop.f32.mrf.mxu0
      %2013 = vmatprep.mubr.bf16.mxu0 0
      %2014 = vmatmul.mubr.bf16.gmra.mxu0 %v1940
      %v2015 = vpop.f32.mrf.mxu0
      %v2016 = vadd.f32 0.0, %v2015
      %v2017 = vpop.f32.mrf.mxu0
      %v2018 = vpop.f32.mrf.mxu0
      %v2019 = vadd.f32 0.0, %v2018
      %v2020 = vpop.f32.mrf.mxu0
      %2021 = vmatprep.mubr.bf16.mxu0 0
      %2022 = vmatmul.mubr.bf16.gmra.mxu0 %v1943
      %v2023 = vpop.f32.mrf.mxu0
      %v2024 = vadd.f32 0.0, %v2023
      %v2025 = vpop.f32.mrf.mxu0
      %v2026 = vpop.f32.mrf.mxu0
      %v2027 = vadd.f32 0.0, %v2026
      %v2028 = vpop.f32.mrf.mxu0
      %2029 = vmatprep.mubr.bf16.mxu0 0
      %2030 = vmatmul.mubr.bf16.gmra.mxu0 %v1946
      %v2031 = vpop.f32.mrf.mxu0
      %v2032 = vadd.f32 0.0, %v2031
      %v2033 = vpop.f32.mrf.mxu0
      %v2034 = vpop.f32.mrf.mxu0
      %v2035 = vadd.f32 0.0, %v2034
      %v2036 = vpop.f32.mrf.mxu0
      %2037 = vmatprep.mubr.bf16.mxu0 0
      %2038 = vmatmul.mubr.bf16.gmra.mxu0 %v1949
      %v2039 = vpop.f32.mrf.mxu0
      %v2040 = vadd.f32 0.0, %v2039
      %v2041 = vpop.f32.mrf.mxu0
      %v2042 = vpop.f32.mrf.mxu0
      %v2043 = vadd.f32 0.0, %v2042
      %v2044 = vpop.f32.mrf.mxu0
      %2045 = vmatprep.mubr.bf16.mxu0 0
      %2046 = vmatmul.mubr.bf16.gmra.mxu0 %v1952
      %v2047 = vpop.f32.mrf.mxu0
      %v2048 = vadd.f32 0.0, %v2047
      %v2049 = vpop.f32.mrf.mxu0
      %v2050 = vpop.f32.mrf.mxu0
      %v2051 = vadd.f32 0.0, %v2050
      %v2052 = vpop.f32.mrf.mxu0
      %2053 = vdwg.mxu0
      %v2054 = vadd.f32 %v1800, %v1992
      %v2055 = vadd.f32 %v1801, %v1995
      %v2056 = vadd.f32 %v1802, %v2000
      %v2057 = vadd.f32 %v1803, %v2003
      %v2058 = vadd.f32 %v1804, %v2008
      %v2059 = vadd.f32 %v1805, %v2011
      %v2060 = vadd.f32 %v1806, %v2016
      %v2061 = vadd.f32 %v1807, %v2019
      %v2062 = vadd.f32 %v1808, %v2024
      %v2063 = vadd.f32 %v1809, %v2027
      %v2064 = vadd.f32 %v1810, %v2032
      %v2065 = vadd.f32 %v1811, %v2035
      %v2066 = vadd.f32 %v1812, %v2040
      %v2067 = vadd.f32 %v1813, %v2043
      %v2068 = vadd.f32 %v1814, %v2048
      %v2069 = vadd.f32 %v1815, %v2051
      %s2070 = scalar_lea.vmem [#allocation2], 24
      %v2071 = vld [vmem:[%s2070] sm:$0xf]
      %v2072 = vld [vmem:[%s2070 + $0x4] sm:$0xf]
      %v2073 = vld [vmem:[%s2070 + $0xc] sm:$0xf]
      %v2074 = vld [vmem:[%s2070 + $0x10] sm:$0xf]
      %v2075 = vld [vmem:[%s2070 + $0x18] sm:$0xf]
      %v2076 = vld [vmem:[%s2070 + $0x1c] sm:$0xf]
      %v2077 = vld [vmem:[%s2070 + $0x24] sm:$0xf]
      %v2078 = vld [vmem:[%s2070 + $0x28] sm:$0xf]
      %v2079 = vld [vmem:[%s2070 + $0x30] sm:$0xf]
      %v2080 = vld [vmem:[%s2070 + $0x34] sm:$0xf]
      %v2081 = vld [vmem:[%s2070 + $0x3c] sm:$0xf]
      %v2082 = vld [vmem:[%s2070 + $0x40] sm:$0xf]
      %v2083 = vld [vmem:[%s2070 + $0x48] sm:$0xf]
      %v2084 = vld [vmem:[%s2070 + $0x4c] sm:$0xf]
      %v2085 = vld [vmem:[%s2070 + $0x54] sm:$0xf]
      %v2086 = vld [vmem:[%s2070 + $0x58] sm:$0xf]
      %s2087 = scalar_lea.vmem %s2, 24
      %v2088 = vld [vmem:[%s2087] sm:$0xf]
      %v2105 = vunpack.c.l.b16 %v2071
      %v2106 = vunpack.c.l.b16 %v2072
      %v2107 = vunpack.c.l.b16 %v2073
      %v2108 = vunpack.c.l.b16 %v2074
      %v2109 = vunpack.c.l.b16 %v2075
      %v2110 = vunpack.c.l.b16 %v2076
      %v2111 = vunpack.c.l.b16 %v2077
      %v2112 = vunpack.c.l.b16 %v2078
      %v2113 = vunpack.c.l.b16 %v2079
      %v2114 = vunpack.c.l.b16 %v2080
      %v2115 = vunpack.c.l.b16 %v2081
      %v2116 = vunpack.c.l.b16 %v2082
      %v2117 = vunpack.c.l.b16 %v2083
      %v2118 = vunpack.c.l.b16 %v2084
      %v2119 = vunpack.c.l.b16 %v2085
      %v2120 = vunpack.c.l.b16 %v2086
      %v2121 = vpack.c.b16 %v2106, %v2105
      %v2122 = vpack.c.b16 %v2108, %v2107
      %v2123 = vpack.c.b16 %v2110, %v2109
      %v2124 = vpack.c.b16 %v2112, %v2111
      %v2125 = vpack.c.b16 %v2114, %v2113
      %v2126 = vpack.c.b16 %v2116, %v2115
      %v2127 = vpack.c.b16 %v2118, %v2117
      %v2128 = vpack.c.b16 %v2120, %v2119
      %v2130 = vsel %vm696, %v2121, 0
      %v2133 = vsel %vm696, %v2122, 0
      %v2136 = vsel %vm696, %v2123, 0
      %v2139 = vsel %vm696, %v2124, 0
      %v2142 = vsel %vm696, %v2125, 0
      %v2145 = vsel %vm696, %v2126, 0
      %v2148 = vsel %vm696, %v2127, 0
      %v2151 = vsel %vm696, %v2128, 0
      %v2154 = vsel %vm721, %v2088, 0
      %2156 = vmatprep.subr.bf16.mxu0 0
      %2157 = vmatpush1.bf16.msra.mxu0 0
      %2158 = vmatprep.subr.bf16.mxu0 0
      %2159 = vmatpush1.bf16.msra.mxu0 0
      %2160 = vmatprep.subr.bf16.mxu0 0
      %2161 = vmatpush1.bf16.msra.mxu0 0
      %2162 = vmatprep.subr.bf16.mxu0 0
      %2163 = vmatpush1.bf16.msra.mxu0 0
      %2164 = vmatprep.subr.bf16.mxu0 0
      %2165 = vmatpush1.bf16.msra.mxu0 0
      %2166 = vmatprep.subr.bf16.mxu0 0
      %2167 = vmatpush1.bf16.msra.mxu0 0
      %2168 = vmatprep.subr.bf16.mxu0 0
      %2169 = vmatpush1.bf16.msra.mxu0 0
      %2170 = vmatprep.subr.bf16.mxu0 0
      %2171 = vmatpush1.bf16.msra.mxu0 %v2154
      %2172 = vmatprep.subr.bf16.mxu0 0
      %2173 = vmatpush2.bf16.msra.mxu0 0
      %2174 = vmatprep.subr.bf16.mxu0 0
      %2175 = vmatpush2.bf16.msra.mxu0 0
      %2176 = vmatprep.subr.bf16.mxu0 0
      %2177 = vmatpush2.bf16.msra.mxu0 0
      %2178 = vmatprep.subr.bf16.mxu0 0
      %2179 = vmatpush2.bf16.msra.mxu0 0
      %2180 = vmatprep.subr.bf16.mxu0 0
      %2181 = vmatpush2.bf16.msra.mxu0 0
      %2182 = vmatprep.subr.bf16.mxu0 0
      %2183 = vmatpush2.bf16.msra.mxu0 0
      %2184 = vmatprep.subr.bf16.mxu0 0
      %2185 = vmatpush2.bf16.msra.mxu0 0
      %2186 = vmatprep.subr.bf16.mxu0 0
      %2187 = vmatpush2.bf16.msra.mxu0 0
      %2188 = vmatprep.mubr.bf16.mxu0 0
      %2189 = vmatmul.mubr.bf16.gmra.mxu0 %v2130
      %v2190 = vpop.f32.mrf.mxu0
      %v2191 = vadd.f32 0.0, %v2190
      %v2192 = vpop.f32.mrf.mxu0
      %v2193 = vpop.f32.mrf.mxu0
      %v2194 = vadd.f32 0.0, %v2193
      %v2195 = vpop.f32.mrf.mxu0
      %2196 = vmatprep.mubr.bf16.mxu0 0
      %2197 = vmatmul.mubr.bf16.gmra.mxu0 %v2133
      %v2198 = vpop.f32.mrf.mxu0
      %v2199 = vadd.f32 0.0, %v2198
      %v2200 = vpop.f32.mrf.mxu0
      %v2201 = vpop.f32.mrf.mxu0
      %v2202 = vadd.f32 0.0, %v2201
      %v2203 = vpop.f32.mrf.mxu0
      %2204 = vmatprep.mubr.bf16.mxu0 0
      %2205 = vmatmul.mubr.bf16.gmra.mxu0 %v2136
      %v2206 = vpop.f32.mrf.mxu0
      %v2207 = vadd.f32 0.0, %v2206
      %v2208 = vpop.f32.mrf.mxu0
      %v2209 = vpop.f32.mrf.mxu0
      %v2210 = vadd.f32 0.0, %v2209
      %v2211 = vpop.f32.mrf.mxu0
      %2212 = vmatprep.mubr.bf16.mxu0 0
      %2213 = vmatmul.mubr.bf16.gmra.mxu0 %v2139
      %v2214 = vpop.f32.mrf.mxu0
      %v2215 = vadd.f32 0.0, %v2214
      %v2216 = vpop.f32.mrf.mxu0
      %v2217 = vpop.f32.mrf.mxu0
      %v2218 = vadd.f32 0.0, %v2217
      %v2219 = vpop.f32.mrf.mxu0
      %2220 = vmatprep.mubr.bf16.mxu0 0
      %2221 = vmatmul.mubr.bf16.gmra.mxu0 %v2142
      %v2222 = vpop.f32.mrf.mxu0
      %v2223 = vadd.f32 0.0, %v2222
      %v2224 = vpop.f32.mrf.mxu0
      %v2225 = vpop.f32.mrf.mxu0
      %v2226 = vadd.f32 0.0, %v2225
      %v2227 = vpop.f32.mrf.mxu0
      %2228 = vmatprep.mubr.bf16.mxu0 0
      %2229 = vmatmul.mubr.bf16.gmra.mxu0 %v2145
      %v2230 = vpop.f32.mrf.mxu0
      %v2231 = vadd.f32 0.0, %v2230
      %v2232 = vpop.f32.mrf.mxu0
      %v2233 = vpop.f32.mrf.mxu0
      %v2234 = vadd.f32 0.0, %v2233
      %v2235 = vpop.f32.mrf.mxu0
      %2236 = vmatprep.mubr.bf16.mxu0 0
      %2237 = vmatmul.mubr.bf16.gmra.mxu0 %v2148
      %v2238 = vpop.f32.mrf.mxu0
      %v2239 = vadd.f32 0.0, %v2238
      %v2240 = vpop.f32.mrf.mxu0
      %v2241 = vpop.f32.mrf.mxu0
      %v2242 = vadd.f32 0.0, %v2241
      %v2243 = vpop.f32.mrf.mxu0
      %2244 = vmatprep.mubr.bf16.mxu0 0
      %2245 = vmatmul.mubr.bf16.gmra.mxu0 %v2151
      %v2246 = vpop.f32.mrf.mxu0
      %v2247 = vadd.f32 0.0, %v2246
      %v2248 = vpop.f32.mrf.mxu0
      %v2249 = vpop.f32.mrf.mxu0
      %v2250 = vadd.f32 0.0, %v2249
      %v2251 = vpop.f32.mrf.mxu0
      %2252 = vdwg.mxu0
      %v2253 = vadd.f32 %v2054, %v2191
      %v2254 = vadd.f32 %v2055, %v2194
      %v2255 = vadd.f32 %v2056, %v2199
      %v2256 = vadd.f32 %v2057, %v2202
      %v2257 = vadd.f32 %v2058, %v2207
      %v2258 = vadd.f32 %v2059, %v2210
      %v2259 = vadd.f32 %v2060, %v2215
      %v2260 = vadd.f32 %v2061, %v2218
      %v2261 = vadd.f32 %v2062, %v2223
      %v2262 = vadd.f32 %v2063, %v2226
      %v2263 = vadd.f32 %v2064, %v2231
      %v2264 = vadd.f32 %v2065, %v2234
      %v2265 = vadd.f32 %v2066, %v2239
      %v2266 = vadd.f32 %v2067, %v2242
      %v2267 = vadd.f32 %v2068, %v2247
      %v2268 = vadd.f32 %v2069, %v2250
      %v2269 = vld [vmem:[%s2070] sm:$0xf]
      %v2270 = vld [vmem:[%s2070 + $0x4] sm:$0xf]
      %v2271 = vld [vmem:[%s2070 + $0x8] sm:$0x1]
      %v2272 = vld [vmem:[%s2070 + $0xc] sm:$0xf]
      %v2273 = vld [vmem:[%s2070 + $0x10] sm:$0xf]
      %v2274 = vld [vmem:[%s2070 + $0x14] sm:$0x1]
      %v2275 = vld [vmem:[%s2070 + $0x18] sm:$0xf]
      %v2276 = vld [vmem:[%s2070 + $0x1c] sm:$0xf]
      %v2277 = vld [vmem:[%s2070 + $0x20] sm:$0x1]
      %v2278 = vld [vmem:[%s2070 + $0x24] sm:$0xf]
      %v2279 = vld [vmem:[%s2070 + $0x28] sm:$0xf]
      %v2280 = vld [vmem:[%s2070 + $0x2c] sm:$0x1]
      %v2281 = vld [vmem:[%s2070 + $0x30] sm:$0xf]
      %v2282 = vld [vmem:[%s2070 + $0x34] sm:$0xf]
      %v2283 = vld [vmem:[%s2070 + $0x38] sm:$0x1]
      %v2284 = vld [vmem:[%s2070 + $0x3c] sm:$0xf]
      %v2285 = vld [vmem:[%s2070 + $0x40] sm:$0xf]
      %v2286 = vld [vmem:[%s2070 + $0x44] sm:$0x1]
      %v2287 = vld [vmem:[%s2070 + $0x48] sm:$0xf]
      %v2288 = vld [vmem:[%s2070 + $0x4c] sm:$0xf]
      %v2289 = vld [vmem:[%s2070 + $0x50] sm:$0x1]
      %v2290 = vld [vmem:[%s2070 + $0x54] sm:$0xf]
      %v2291 = vld [vmem:[%s2070 + $0x58] sm:$0xf]
      %v2292 = vld [vmem:[%s2070 + $0x5c] sm:$0x1]
      %v2294 = vshrl.u32 %v2269, 16
      %v2296 = vrot.slane %v2294, 4
      %v2297 = vshll.u32 %v2269, 16
      %v2299 = vrot.slane %v2297, 5
      %v2300 = vor.u32 %v2296, %v2299
      %v2301 = vrot.slane %v2300, 4
      %v2303 = vshll.u32 %v2270, 16
      %v2305 = vrot.slane %v2303, 5
      %v2306 = vsel %vm477, %v2301, %v2305
      %v2307 = vshrl.u32 %v2270, 16
      %v2309 = vrot.slane %v2307, 4
      %v2310 = vor.u32 %v2309, %v2305
      %v2311 = vrot.slane %v2310, 4
      %v2313 = vshll.u32 %v2271, 16
      %v2315 = vrot.slane %v2313, 5
      %v2316 = vsel %vm477, %v2311, %v2315
      %v2318 = vshrl.u32 %v2272, 16
      %v2320 = vrot.slane %v2318, 4
      %v2321 = vshll.u32 %v2272, 16
      %v2323 = vrot.slane %v2321, 5
      %v2324 = vor.u32 %v2320, %v2323
      %v2325 = vrot.slane %v2324, 4
      %v2327 = vshll.u32 %v2273, 16
      %v2329 = vrot.slane %v2327, 5
      %v2330 = vsel %vm477, %v2325, %v2329
      %v2331 = vshrl.u32 %v2273, 16
      %v2333 = vrot.slane %v2331, 4
      %v2334 = vor.u32 %v2333, %v2329
      %v2335 = vrot.slane %v2334, 4
      %v2337 = vshll.u32 %v2274, 16
      %v2339 = vrot.slane %v2337, 5
      %v2340 = vsel %vm477, %v2335, %v2339
      %v2342 = vshrl.u32 %v2275, 16
      %v2344 = vrot.slane %v2342, 4
      %v2345 = vshll.u32 %v2275, 16
      %v2347 = vrot.slane %v2345, 5
      %v2348 = vor.u32 %v2344, %v2347
      %v2349 = vrot.slane %v2348, 4
      %v2351 = vshll.u32 %v2276, 16
      %v2353 = vrot.slane %v2351, 5
      %v2354 = vsel %vm477, %v2349, %v2353
      %v2355 = vshrl.u32 %v2276, 16
      %v2357 = vrot.slane %v2355, 4
      %v2358 = vor.u32 %v2357, %v2353
      %v2359 = vrot.slane %v2358, 4
      %v2361 = vshll.u32 %v2277, 16
      %v2363 = vrot.slane %v2361, 5
      %v2364 = vsel %vm477, %v2359, %v2363
      %v2366 = vshrl.u32 %v2278, 16
      %v2368 = vrot.slane %v2366, 4
      %v2369 = vshll.u32 %v2278, 16
      %v2371 = vrot.slane %v2369, 5
      %v2372 = vor.u32 %v2368, %v2371
      %v2373 = vrot.slane %v2372, 4
      %v2375 = vshll.u32 %v2279, 16
      %v2377 = vrot.slane %v2375, 5
      %v2378 = vsel %vm477, %v2373, %v2377
      %v2379 = vshrl.u32 %v2279, 16
      %v2381 = vrot.slane %v2379, 4
      %v2382 = vor.u32 %v2381, %v2377
      %v2383 = vrot.slane %v2382, 4
      %v2385 = vshll.u32 %v2280, 16
      %v2387 = vrot.slane %v2385, 5
      %v2388 = vsel %vm477, %v2383, %v2387
      %v2390 = vshrl.u32 %v2281, 16
      %v2392 = vrot.slane %v2390, 4
      %v2393 = vshll.u32 %v2281, 16
      %v2395 = vrot.slane %v2393, 5
      %v2396 = vor.u32 %v2392, %v2395
      %v2397 = vrot.slane %v2396, 4
      %v2399 = vshll.u32 %v2282, 16
      %v2401 = vrot.slane %v2399, 5
      %v2402 = vsel %vm477, %v2397, %v2401
      %v2403 = vshrl.u32 %v2282, 16
      %v2405 = vrot.slane %v2403, 4
      %v2406 = vor.u32 %v2405, %v2401
      %v2407 = vrot.slane %v2406, 4
      %v2409 = vshll.u32 %v2283, 16
      %v2411 = vrot.slane %v2409, 5
      %v2412 = vsel %vm477, %v2407, %v2411
      %v2414 = vshrl.u32 %v2284, 16
      %v2416 = vrot.slane %v2414, 4
      %v2417 = vshll.u32 %v2284, 16
      %v2419 = vrot.slane %v2417, 5
      %v2420 = vor.u32 %v2416, %v2419
      %v2421 = vrot.slane %v2420, 4
      %v2423 = vshll.u32 %v2285, 16
      %v2425 = vrot.slane %v2423, 5
      %v2426 = vsel %vm477, %v2421, %v2425
      %v2427 = vshrl.u32 %v2285, 16
      %v2429 = vrot.slane %v2427, 4
      %v2430 = vor.u32 %v2429, %v2425
      %v2431 = vrot.slane %v2430, 4
      %v2433 = vshll.u32 %v2286, 16
      %v2435 = vrot.slane %v2433, 5
      %v2436 = vsel %vm477, %v2431, %v2435
      %v2438 = vshrl.u32 %v2287, 16
      %v2440 = vrot.slane %v2438, 4
      %v2441 = vshll.u32 %v2287, 16
      %v2443 = vrot.slane %v2441, 5
      %v2444 = vor.u32 %v2440, %v2443
      %v2445 = vrot.slane %v2444, 4
      %v2447 = vshll.u32 %v2288, 16
      %v2449 = vrot.slane %v2447, 5
      %v2450 = vsel %vm477, %v2445, %v2449
      %v2451 = vshrl.u32 %v2288, 16
      %v2453 = vrot.slane %v2451, 4
      %v2454 = vor.u32 %v2453, %v2449
      %v2455 = vrot.slane %v2454, 4
      %v2457 = vshll.u32 %v2289, 16
      %v2459 = vrot.slane %v2457, 5
      %v2460 = vsel %vm477, %v2455, %v2459
      %v2462 = vshrl.u32 %v2290, 16
      %v2464 = vrot.slane %v2462, 4
      %v2465 = vshll.u32 %v2290, 16
      %v2467 = vrot.slane %v2465, 5
      %v2468 = vor.u32 %v2464, %v2467
      %v2469 = vrot.slane %v2468, 4
      %v2471 = vshll.u32 %v2291, 16
      %v2473 = vrot.slane %v2471, 5
      %v2474 = vsel %vm477, %v2469, %v2473
      %v2475 = vshrl.u32 %v2291, 16
      %v2477 = vrot.slane %v2475, 4
      %v2478 = vor.u32 %v2477, %v2473
      %v2479 = vrot.slane %v2478, 4
      %v2481 = vshll.u32 %v2292, 16
      %v2483 = vrot.slane %v2481, 5
      %v2484 = vsel %vm477, %v2479, %v2483
      %s2485 = scalar_lea.vmem %s2, 28
      %v2486 = vld [vmem:[%s2485] sm:$0xf]
      %v2487 = vunpack.c.l.b16 %v2306
      %v2488 = vunpack.c.l.b16 %v2316
      %v2489 = vunpack.c.l.b16 %v2330
      %v2490 = vunpack.c.l.b16 %v2340
      %v2491 = vunpack.c.l.b16 %v2354
      %v2492 = vunpack.c.l.b16 %v2364
      %v2493 = vunpack.c.l.b16 %v2378
      %v2494 = vunpack.c.l.b16 %v2388
      %v2495 = vunpack.c.l.b16 %v2402
      %v2496 = vunpack.c.l.b16 %v2412
      %v2497 = vunpack.c.l.b16 %v2426
      %v2498 = vunpack.c.l.b16 %v2436
      %v2499 = vunpack.c.l.b16 %v2450
      %v2500 = vunpack.c.l.b16 %v2460
      %v2501 = vunpack.c.l.b16 %v2474
      %v2502 = vunpack.c.l.b16 %v2484
      %v2503 = vpack.c.b16 %v2488, %v2487
      %v2504 = vpack.c.b16 %v2490, %v2489
      %v2505 = vpack.c.b16 %v2492, %v2491
      %v2506 = vpack.c.b16 %v2494, %v2493
      %v2507 = vpack.c.b16 %v2496, %v2495
      %v2508 = vpack.c.b16 %v2498, %v2497
      %v2509 = vpack.c.b16 %v2500, %v2499
      %v2510 = vpack.c.b16 %v2502, %v2501
      %v2512 = vsel %vm696, %v2503, 0
      %v2515 = vsel %vm696, %v2504, 0
      %v2518 = vsel %vm696, %v2505, 0
      %v2521 = vsel %vm696, %v2506, 0
      %v2524 = vsel %vm696, %v2507, 0
      %v2527 = vsel %vm696, %v2508, 0
      %v2530 = vsel %vm696, %v2509, 0
      %v2533 = vsel %vm696, %v2510, 0
      %v2536 = vsel %vm721, %v2486, 0
      %2538 = vmatprep.subr.bf16.mxu0 0
      %2539 = vmatpush1.bf16.msra.mxu0 0
      %2540 = vmatprep.subr.bf16.mxu0 0
      %2541 = vmatpush1.bf16.msra.mxu0 0
      %2542 = vmatprep.subr.bf16.mxu0 0
      %2543 = vmatpush1.bf16.msra.mxu0 0
      %2544 = vmatprep.subr.bf16.mxu0 0
      %2545 = vmatpush1.bf16.msra.mxu0 0
      %2546 = vmatprep.subr.bf16.mxu0 0
      %2547 = vmatpush1.bf16.msra.mxu0 0
      %2548 = vmatprep.subr.bf16.mxu0 0
      %2549 = vmatpush1.bf16.msra.mxu0 0
      %2550 = vmatprep.subr.bf16.mxu0 0
      %2551 = vmatpush1.bf16.msra.mxu0 0
      %2552 = vmatprep.subr.bf16.mxu0 0
      %2553 = vmatpush1.bf16.msra.mxu0 %v2536
      %2554 = vmatprep.subr.bf16.mxu0 0
      %2555 = vmatpush2.bf16.msra.mxu0 0
      %2556 = vmatprep.subr.bf16.mxu0 0
      %2557 = vmatpush2.bf16.msra.mxu0 0
      %2558 = vmatprep.subr.bf16.mxu0 0
      %2559 = vmatpush2.bf16.msra.mxu0 0
      %2560 = vmatprep.subr.bf16.mxu0 0
      %2561 = vmatpush2.bf16.msra.mxu0 0
      %2562 = vmatprep.subr.bf16.mxu0 0
      %2563 = vmatpush2.bf16.msra.mxu0 0
      %2564 = vmatprep.subr.bf16.mxu0 0
      %2565 = vmatpush2.bf16.msra.mxu0 0
      %2566 = vmatprep.subr.bf16.mxu0 0
      %2567 = vmatpush2.bf16.msra.mxu0 0
      %2568 = vmatprep.subr.bf16.mxu0 0
      %2569 = vmatpush2.bf16.msra.mxu0 0
      %2570 = vmatprep.mubr.bf16.mxu0 0
      %2571 = vmatmul.mubr.bf16.gmra.mxu0 %v2512
      %v2572 = vpop.f32.mrf.mxu0
      %v2573 = vadd.f32 0.0, %v2572
      %v2574 = vpop.f32.mrf.mxu0
      %v2575 = vpop.f32.mrf.mxu0
      %v2576 = vadd.f32 0.0, %v2575
      %v2577 = vpop.f32.mrf.mxu0
      %2578 = vmatprep.mubr.bf16.mxu0 0
      %2579 = vmatmul.mubr.bf16.gmra.mxu0 %v2515
      %v2580 = vpop.f32.mrf.mxu0
      %v2581 = vadd.f32 0.0, %v2580
      %v2582 = vpop.f32.mrf.mxu0
      %v2583 = vpop.f32.mrf.mxu0
      %v2584 = vadd.f32 0.0, %v2583
      %v2585 = vpop.f32.mrf.mxu0
      %2586 = vmatprep.mubr.bf16.mxu0 0
      %2587 = vmatmul.mubr.bf16.gmra.mxu0 %v2518
      %v2588 = vpop.f32.mrf.mxu0
      %v2589 = vadd.f32 0.0, %v2588
      %v2590 = vpop.f32.mrf.mxu0
      %v2591 = vpop.f32.mrf.mxu0
      %v2592 = vadd.f32 0.0, %v2591
      %v2593 = vpop.f32.mrf.mxu0
      %2594 = vmatprep.mubr.bf16.mxu0 0
      %2595 = vmatmul.mubr.bf16.gmra.mxu0 %v2521
      %v2596 = vpop.f32.mrf.mxu0
      %v2597 = vadd.f32 0.0, %v2596
      %v2598 = vpop.f32.mrf.mxu0
      %v2599 = vpop.f32.mrf.mxu0
      %v2600 = vadd.f32 0.0, %v2599
      %v2601 = vpop.f32.mrf.mxu0
      %2602 = vmatprep.mubr.bf16.mxu0 0
      %2603 = vmatmul.mubr.bf16.gmra.mxu0 %v2524
      %v2604 = vpop.f32.mrf.mxu0
      %v2605 = vadd.f32 0.0, %v2604
      %v2606 = vpop.f32.mrf.mxu0
      %v2607 = vpop.f32.mrf.mxu0
      %v2608 = vadd.f32 0.0, %v2607
      %v2609 = vpop.f32.mrf.mxu0
      %2610 = vmatprep.mubr.bf16.mxu0 0
      %2611 = vmatmul.mubr.bf16.gmra.mxu0 %v2527
      %v2612 = vpop.f32.mrf.mxu0
      %v2613 = vadd.f32 0.0, %v2612
      %v2614 = vpop.f32.mrf.mxu0
      %v2615 = vpop.f32.mrf.mxu0
      %v2616 = vadd.f32 0.0, %v2615
      %v2617 = vpop.f32.mrf.mxu0
      %2618 = vmatprep.mubr.bf16.mxu0 0
      %2619 = vmatmul.mubr.bf16.gmra.mxu0 %v2530
      %v2620 = vpop.f32.mrf.mxu0
      %v2621 = vadd.f32 0.0, %v2620
      %v2622 = vpop.f32.mrf.mxu0
      %v2623 = vpop.f32.mrf.mxu0
      %v2624 = vadd.f32 0.0, %v2623
      %v2625 = vpop.f32.mrf.mxu0
      %2626 = vmatprep.mubr.bf16.mxu0 0
      %2627 = vmatmul.mubr.bf16.gmra.mxu0 %v2533
      %v2628 = vpop.f32.mrf.mxu0
      %v2629 = vadd.f32 0.0, %v2628
      %v2630 = vpop.f32.mrf.mxu0
      %v2631 = vpop.f32.mrf.mxu0
      %v2632 = vadd.f32 0.0, %v2631
      %v2633 = vpop.f32.mrf.mxu0
      %2634 = vdwg.mxu0
      %v2635 = vadd.f32 %v2253, %v2573
      %v2636 = vadd.f32 %v2254, %v2576
      %v2637 = vadd.f32 %v2255, %v2581
      %v2638 = vadd.f32 %v2256, %v2584
      %v2639 = vadd.f32 %v2257, %v2589
      %v2640 = vadd.f32 %v2258, %v2592
      %v2641 = vadd.f32 %v2259, %v2597
      %v2642 = vadd.f32 %v2260, %v2600
      %v2643 = vadd.f32 %v2261, %v2605
      %v2644 = vadd.f32 %v2262, %v2608
      %v2645 = vadd.f32 %v2263, %v2613
      %v2646 = vadd.f32 %v2264, %v2616
      %v2647 = vadd.f32 %v2265, %v2621
      %v2648 = vadd.f32 %v2266, %v2624
      %v2649 = vadd.f32 %v2267, %v2629
      %v2650 = vadd.f32 %v2268, %v2632
      %v2651 = vld [vmem:[%s2070] sm:$0xe]
      %v2652 = vld [vmem:[%s2070 + $0xc] sm:$0xe]
      %v2653 = vld [vmem:[%s2070 + $0x18] sm:$0xe]
      %v2654 = vld [vmem:[%s2070 + $0x24] sm:$0xe]
      %v2655 = vld [vmem:[%s2070 + $0x30] sm:$0xe]
      %v2656 = vld [vmem:[%s2070 + $0x3c] sm:$0xe]
      %v2657 = vld [vmem:[%s2070 + $0x48] sm:$0xe]
      %v2658 = vld [vmem:[%s2070 + $0x54] sm:$0xe]
      %v2683 = vrot.slane %v2651, 5
      %v2684 = vrot.slane %v2683, 4
      %v2685 = vrot.slane %v2270, 5
      %v2686 = vsel %vm1012, %v2684, %v2685
      %v2687 = vrot.slane %v2685, 4
      %v2688 = vrot.slane %v2271, 5
      %v2689 = vsel %vm1012, %v2687, %v2688
      %v2690 = vrot.slane %v2652, 5
      %v2691 = vrot.slane %v2690, 4
      %v2692 = vrot.slane %v2273, 5
      %v2693 = vsel %vm1012, %v2691, %v2692
      %v2694 = vrot.slane %v2692, 4
      %v2695 = vrot.slane %v2274, 5
      %v2696 = vsel %vm1012, %v2694, %v2695
      %v2697 = vrot.slane %v2653, 5
      %v2698 = vrot.slane %v2697, 4
      %v2699 = vrot.slane %v2276, 5
      %v2700 = vsel %vm1012, %v2698, %v2699
      %v2701 = vrot.slane %v2699, 4
      %v2702 = vrot.slane %v2277, 5
      %v2703 = vsel %vm1012, %v2701, %v2702
      %v2704 = vrot.slane %v2654, 5
      %v2705 = vrot.slane %v2704, 4
      %v2706 = vrot.slane %v2279, 5
      %v2707 = vsel %vm1012, %v2705, %v2706
      %v2708 = vrot.slane %v2706, 4
      %v2709 = vrot.slane %v2280, 5
      %v2710 = vsel %vm1012, %v2708, %v2709
      %v2711 = vrot.slane %v2655, 5
      %v2712 = vrot.slane %v2711, 4
      %v2713 = vrot.slane %v2282, 5
      %v2714 = vsel %vm1012, %v2712, %v2713
      %v2715 = vrot.slane %v2713, 4
      %v2716 = vrot.slane %v2283, 5
      %v2717 = vsel %vm1012, %v2715, %v2716
      %v2718 = vrot.slane %v2656, 5
      %v2719 = vrot.slane %v2718, 4
      %v2720 = vrot.slane %v2285, 5
      %v2721 = vsel %vm1012, %v2719, %v2720
      %v2722 = vrot.slane %v2720, 4
      %v2723 = vrot.slane %v2286, 5
      %v2724 = vsel %vm1012, %v2722, %v2723
      %v2725 = vrot.slane %v2657, 5
      %v2726 = vrot.slane %v2725, 4
      %v2727 = vrot.slane %v2288, 5
      %v2728 = vsel %vm1012, %v2726, %v2727
      %v2729 = vrot.slane %v2727, 4
      %v2730 = vrot.slane %v2289, 5
      %v2731 = vsel %vm1012, %v2729, %v2730
      %v2732 = vrot.slane %v2658, 5
      %v2733 = vrot.slane %v2732, 4
      %v2734 = vrot.slane %v2291, 5
      %v2735 = vsel %vm1012, %v2733, %v2734
      %v2736 = vrot.slane %v2734, 4
      %v2737 = vrot.slane %v2292, 5
      %v2738 = vsel %vm1012, %v2736, %v2737
      %s2739 = scalar_lea.vmem %s2, 32
      %v2740 = vld [vmem:[%s2739] sm:$0xf]
      %v2741 = vunpack.c.l.b16 %v2686
      %v2742 = vunpack.c.l.b16 %v2689
      %v2743 = vunpack.c.l.b16 %v2693
      %v2744 = vunpack.c.l.b16 %v2696
      %v2745 = vunpack.c.l.b16 %v2700
      %v2746 = vunpack.c.l.b16 %v2703
      %v2747 = vunpack.c.l.b16 %v2707
      %v2748 = vunpack.c.l.b16 %v2710
      %v2749 = vunpack.c.l.b16 %v2714
      %v2750 = vunpack.c.l.b16 %v2717
      %v2751 = vunpack.c.l.b16 %v2721
      %v2752 = vunpack.c.l.b16 %v2724
      %v2753 = vunpack.c.l.b16 %v2728
      %v2754 = vunpack.c.l.b16 %v2731
      %v2755 = vunpack.c.l.b16 %v2735
      %v2756 = vunpack.c.l.b16 %v2738
      %v2757 = vpack.c.b16 %v2742, %v2741
      %v2758 = vpack.c.b16 %v2744, %v2743
      %v2759 = vpack.c.b16 %v2746, %v2745
      %v2760 = vpack.c.b16 %v2748, %v2747
      %v2761 = vpack.c.b16 %v2750, %v2749
      %v2762 = vpack.c.b16 %v2752, %v2751
      %v2763 = vpack.c.b16 %v2754, %v2753
      %v2764 = vpack.c.b16 %v2756, %v2755
      %v2766 = vsel %vm696, %v2757, 0
      %v2769 = vsel %vm696, %v2758, 0
      %v2772 = vsel %vm696, %v2759, 0
      %v2775 = vsel %vm696, %v2760, 0
      %v2778 = vsel %vm696, %v2761, 0
      %v2781 = vsel %vm696, %v2762, 0
      %v2784 = vsel %vm696, %v2763, 0
      %v2787 = vsel %vm696, %v2764, 0
      %v2790 = vsel %vm721, %v2740, 0
      %2792 = vmatprep.subr.bf16.mxu0 0
      %2793 = vmatpush1.bf16.msra.mxu0 0
      %2794 = vmatprep.subr.bf16.mxu0 0
      %2795 = vmatpush1.bf16.msra.mxu0 0
      %2796 = vmatprep.subr.bf16.mxu0 0
      %2797 = vmatpush1.bf16.msra.mxu0 0
      %2798 = vmatprep.subr.bf16.mxu0 0
      %2799 = vmatpush1.bf16.msra.mxu0 0
      %2800 = vmatprep.subr.bf16.mxu0 0
      %2801 = vmatpush1.bf16.msra.mxu0 0
      %2802 = vmatprep.subr.bf16.mxu0 0
      %2803 = vmatpush1.bf16.msra.mxu0 0
      %2804 = vmatprep.subr.bf16.mxu0 0
      %2805 = vmatpush1.bf16.msra.mxu0 0
      %2806 = vmatprep.subr.bf16.mxu0 0
      %2807 = vmatpush1.bf16.msra.mxu0 %v2790
      %2808 = vmatprep.subr.bf16.mxu0 0
      %2809 = vmatpush2.bf16.msra.mxu0 0
      %2810 = vmatprep.subr.bf16.mxu0 0
      %2811 = vmatpush2.bf16.msra.mxu0 0
      %2812 = vmatprep.subr.bf16.mxu0 0
      %2813 = vmatpush2.bf16.msra.mxu0 0
      %2814 = vmatprep.subr.bf16.mxu0 0
      %2815 = vmatpush2.bf16.msra.mxu0 0
      %2816 = vmatprep.subr.bf16.mxu0 0
      %2817 = vmatpush2.bf16.msra.mxu0 0
      %2818 = vmatprep.subr.bf16.mxu0 0
      %2819 = vmatpush2.bf16.msra.mxu0 0
      %2820 = vmatprep.subr.bf16.mxu0 0
      %2821 = vmatpush2.bf16.msra.mxu0 0
      %2822 = vmatprep.subr.bf16.mxu0 0
      %2823 = vmatpush2.bf16.msra.mxu0 0
      %2824 = vmatprep.mubr.bf16.mxu0 0
      %2825 = vmatmul.mubr.bf16.gmra.mxu0 %v2766
      %v2826 = vpop.f32.mrf.mxu0
      %v2827 = vadd.f32 0.0, %v2826
      %v2828 = vpop.f32.mrf.mxu0
      %v2829 = vpop.f32.mrf.mxu0
      %v2830 = vadd.f32 0.0, %v2829
      %v2831 = vpop.f32.mrf.mxu0
      %2832 = vmatprep.mubr.bf16.mxu0 0
      %2833 = vmatmul.mubr.bf16.gmra.mxu0 %v2769
      %v2834 = vpop.f32.mrf.mxu0
      %v2835 = vadd.f32 0.0, %v2834
      %v2836 = vpop.f32.mrf.mxu0
      %v2837 = vpop.f32.mrf.mxu0
      %v2838 = vadd.f32 0.0, %v2837
      %v2839 = vpop.f32.mrf.mxu0
      %2840 = vmatprep.mubr.bf16.mxu0 0
      %2841 = vmatmul.mubr.bf16.gmra.mxu0 %v2772
      %v2842 = vpop.f32.mrf.mxu0
      %v2843 = vadd.f32 0.0, %v2842
      %v2844 = vpop.f32.mrf.mxu0
      %v2845 = vpop.f32.mrf.mxu0
      %v2846 = vadd.f32 0.0, %v2845
      %v2847 = vpop.f32.mrf.mxu0
      %2848 = vmatprep.mubr.bf16.mxu0 0
      %2849 = vmatmul.mubr.bf16.gmra.mxu0 %v2775
      %v2850 = vpop.f32.mrf.mxu0
      %v2851 = vadd.f32 0.0, %v2850
      %v2852 = vpop.f32.mrf.mxu0
      %v2853 = vpop.f32.mrf.mxu0
      %v2854 = vadd.f32 0.0, %v2853
      %v2855 = vpop.f32.mrf.mxu0
      %2856 = vmatprep.mubr.bf16.mxu0 0
      %2857 = vmatmul.mubr.bf16.gmra.mxu0 %v2778
      %v2858 = vpop.f32.mrf.mxu0
      %v2859 = vadd.f32 0.0, %v2858
      %v2860 = vpop.f32.mrf.mxu0
      %v2861 = vpop.f32.mrf.mxu0
      %v2862 = vadd.f32 0.0, %v2861
      %v2863 = vpop.f32.mrf.mxu0
      %2864 = vmatprep.mubr.bf16.mxu0 0
      %2865 = vmatmul.mubr.bf16.gmra.mxu0 %v2781
      %v2866 = vpop.f32.mrf.mxu0
      %v2867 = vadd.f32 0.0, %v2866
      %v2868 = vpop.f32.mrf.mxu0
      %v2869 = vpop.f32.mrf.mxu0
      %v2870 = vadd.f32 0.0, %v2869
      %v2871 = vpop.f32.mrf.mxu0
      %2872 = vmatprep.mubr.bf16.mxu0 0
      %2873 = vmatmul.mubr.bf16.gmra.mxu0 %v2784
      %v2874 = vpop.f32.mrf.mxu0
      %v2875 = vadd.f32 0.0, %v2874
      %v2876 = vpop.f32.mrf.mxu0
      %v2877 = vpop.f32.mrf.mxu0
      %v2878 = vadd.f32 0.0, %v2877
      %v2879 = vpop.f32.mrf.mxu0
      %2880 = vmatprep.mubr.bf16.mxu0 0
      %2881 = vmatmul.mubr.bf16.gmra.mxu0 %v2787
      %v2882 = vpop.f32.mrf.mxu0
      %v2883 = vadd.f32 0.0, %v2882
      %v2884 = vpop.f32.mrf.mxu0
      %v2885 = vpop.f32.mrf.mxu0
      %v2886 = vadd.f32 0.0, %v2885
      %v2887 = vpop.f32.mrf.mxu0
      %2888 = vdwg.mxu0
      %v2889 = vadd.f32 %v2635, %v2827
      %v2890 = vadd.f32 %v2636, %v2830
      %v2891 = vadd.f32 %v2637, %v2835
      %v2892 = vadd.f32 %v2638, %v2838
      %v2893 = vadd.f32 %v2639, %v2843
      %v2894 = vadd.f32 %v2640, %v2846
      %v2895 = vadd.f32 %v2641, %v2851
      %v2896 = vadd.f32 %v2642, %v2854
      %v2897 = vadd.f32 %v2643, %v2859
      %v2898 = vadd.f32 %v2644, %v2862
      %v2899 = vadd.f32 %v2645, %v2867
      %v2900 = vadd.f32 %v2646, %v2870
      %v2901 = vadd.f32 %v2647, %v2875
      %v2902 = vadd.f32 %v2648, %v2878
      %v2903 = vadd.f32 %v2649, %v2883
      %v2904 = vadd.f32 %v2650, %v2886
      %v2905 = vadd.f32 %v2889, %v2890
      %v2906 = vadd.f32 %v2905, %v2891
      %v2907 = vadd.f32 %v2906, %v2892
      %v2908 = vadd.f32 %v2907, %v2893
      %v2909 = vadd.f32 %v2908, %v2894
      %v2910 = vadd.f32 %v2909, %v2895
      %v2911 = vadd.f32 %v2910, %v2896
      %v2912 = vadd.f32 %v2911, %v2897
      %v2913 = vadd.f32 %v2912, %v2898
      %v2914 = vadd.f32 %v2913, %v2899
      %v2915 = vadd.f32 %v2914, %v2900
      %v2916 = vadd.f32 %v2915, %v2901
      %v2917 = vadd.f32 %v2916, %v2902
      %v2918 = vadd.f32 %v2917, %v2903
      %v2919 = vadd.f32 %v2918, %v2904
      %v2920 = vrot.slane %v2919, 4
      %v2921 = vadd.f32 %v2919, %v2920
      %v2922 = vrot.slane %v2921, 2
      %v2923 = vadd.f32 %v2921, %v2922
      %v2924 = vrot.slane %v2923, 1
      %v2925 = vadd.f32 %v2923, %v2924
      %v2926 = vadd.f32 %v2925, 0.0
      %v2927 = vmul.f32 %v2889, %v2889
      %v2928 = vmul.f32 %v2890, %v2890
      %v2929 = vmul.f32 %v2891, %v2891
      %v2930 = vmul.f32 %v2892, %v2892
      %v2931 = vmul.f32 %v2893, %v2893
      %v2932 = vmul.f32 %v2894, %v2894
      %v2933 = vmul.f32 %v2895, %v2895
      %v2934 = vmul.f32 %v2896, %v2896
      %v2935 = vmul.f32 %v2897, %v2897
      %v2936 = vmul.f32 %v2898, %v2898
      %v2937 = vmul.f32 %v2899, %v2899
      %v2938 = vmul.f32 %v2900, %v2900
      %v2939 = vmul.f32 %v2901, %v2901
      %v2940 = vmul.f32 %v2902, %v2902
      %v2941 = vmul.f32 %v2903, %v2903
      %v2942 = vmul.f32 %v2904, %v2904
      %v2943 = vadd.f32 %v2927, %v2928
      %v2944 = vadd.f32 %v2943, %v2929
      %v2945 = vadd.f32 %v2944, %v2930
      %v2946 = vadd.f32 %v2945, %v2931
      %v2947 = vadd.f32 %v2946, %v2932
      %v2948 = vadd.f32 %v2947, %v2933
      %v2949 = vadd.f32 %v2948, %v2934
      %v2950 = vadd.f32 %v2949, %v2935
      %v2951 = vadd.f32 %v2950, %v2936
      %v2952 = vadd.f32 %v2951, %v2937
      %v2953 = vadd.f32 %v2952, %v2938
      %v2954 = vadd.f32 %v2953, %v2939
      %v2955 = vadd.f32 %v2954, %v2940
      %v2956 = vadd.f32 %v2955, %v2941
      %v2957 = vadd.f32 %v2956, %v2942
      %v2958 = vrot.slane %v2957, 4
      %v2959 = vadd.f32 %v2957, %v2958
      %v2960 = vrot.slane %v2959, 2
      %v2961 = vadd.f32 %v2959, %v2960
      %v2962 = vrot.slane %v2961, 1
      %v2963 = vadd.f32 %v2961, %v2962
      %v2964 = vadd.f32 %v2963, 0.0
      %v2965 = vpack.c.bf16 %v2890, %v2889
      %v2966 = vpack.c.bf16 %v2892, %v2891
      %v2967 = vpack.c.bf16 %v2894, %v2893
      %v2968 = vpack.c.bf16 %v2896, %v2895
      %v2969 = vpack.c.bf16 %v2898, %v2897
      %v2970 = vpack.c.bf16 %v2900, %v2899
      %v2971 = vpack.c.bf16 %v2902, %v2901
      %v2972 = vpack.c.bf16 %v2904, %v2903
      %v2981 = vunpack.c.l.b16 %v2965
      %v2982 = vunpack.c.h.b16 %v2965
      %v2983 = vunpack.c.l.b16 %v2966
      %v2984 = vunpack.c.h.b16 %v2966
      %v2985 = vunpack.c.l.b16 %v2967
      %v2986 = vunpack.c.h.b16 %v2967
      %v2987 = vunpack.c.l.b16 %v2968
      %v2988 = vunpack.c.h.b16 %v2968
      %v2989 = vunpack.c.l.b16 %v2969
      %v2990 = vunpack.c.h.b16 %v2969
      %v2991 = vunpack.c.l.b16 %v2970
      %v2992 = vunpack.c.h.b16 %v2970
      %v2993 = vunpack.c.l.b16 %v2971
      %v2994 = vunpack.c.h.b16 %v2971
      %v2995 = vunpack.c.l.b16 %v2972
      %v2996 = vunpack.c.h.b16 %v2972
      %v2997 = vpack.c.b16 %v2981, %v2981
      %v2998 = vpack.c.b16 %v2982, %v2982
      %v2999 = vpack.c.b16 %v2983, %v2983
      %v3000 = vpack.c.b16 %v2984, %v2984
      %v3001 = vpack.c.b16 %v2985, %v2985
      %v3002 = vpack.c.b16 %v2986, %v2986
      %v3003 = vpack.c.b16 %v2987, %v2987
      %v3004 = vpack.c.b16 %v2988, %v2988
      %v3005 = vpack.c.b16 %v2989, %v2989
      %v3006 = vpack.c.b16 %v2990, %v2990
      %v3007 = vpack.c.b16 %v2991, %v2991
      %v3008 = vpack.c.b16 %v2992, %v2992
      %v3009 = vpack.c.b16 %v2993, %v2993
      %v3010 = vpack.c.b16 %v2994, %v2994
      %v3011 = vpack.c.b16 %v2995, %v2995
      %v3012 = vpack.c.b16 %v2996, %v2996
      %3029 = vst [vmem:[%s334] sm:$0xf] %v2997
      %3030 = vst [vmem:[%s334 + $0x4] sm:$0xf] %v2998
      %3031 = vst [vmem:[%s334 + $0x8] sm:$0xf] %v2999
      %3032 = vst [vmem:[%s334 + $0xc] sm:$0xf] %v3000
      %3033 = vst [vmem:[%s334 + $0x10] sm:$0xf] %v3001
      %3034 = vst [vmem:[%s334 + $0x14] sm:$0xf] %v3002
      %3035 = vst [vmem:[%s334 + $0x18] sm:$0xf] %v3003
      %3036 = vst [vmem:[%s334 + $0x1c] sm:$0xf] %v3004
      %3037 = vst [vmem:[%s334 + $0x20] sm:$0xf] %v3005
      %3038 = vst [vmem:[%s334 + $0x24] sm:$0xf] %v3006
      %3039 = vst [vmem:[%s334 + $0x28] sm:$0xf] %v3007
      %3040 = vst [vmem:[%s334 + $0x2c] sm:$0xf] %v3008
      %3041 = vst [vmem:[%s334 + $0x30] sm:$0xf] %v3009
      %3042 = vst [vmem:[%s334 + $0x34] sm:$0xf] %v3010
      %3043 = vst [vmem:[%s334 + $0x38] sm:$0xf] %v3011
      %3044 = vst [vmem:[%s334 + $0x3c] sm:$0xf] %v3012
      %3045 = vst [vmem:[%s342] sm:$0x1] %v2926
      %3046 = vst [vmem:[%s349] sm:$0x1] %v2964
      %s3047 = smul.u32 16, %s22
      %p3048 = scmp.lt.s32.totalorder %s21, 1
      %s3049 = scalar_select %p3048, %s21, 1
      %p3050 = scmp.lt.s32.totalorder %s3047, 31
      %s3051 = scalar_select %p3050, %s3047, 31
      %s3052 = smul.addr %s3049, 32
      %s3053 = sadd.s32 %s3051, %s3052
      %s3054 = smul.addr %s3053, 4
      %s3055 = scalar_lea.vmem %s3, %s3054
      %p3056 = scmp.lt.s32.totalorder %s21, 1
      %s3057 = scalar_select %p3056, %s21, 1
      %p3058 = scmp.lt.s32.totalorder %s22, 1
      %s3059 = scalar_select %p3058, %s22, 1
      %s3060 = smul.addr %s3057, 2
      %s3061 = sadd.s32 %s3059, %s3060
      %s3062 = scalar_lea.vmem %s4, %s3061
      %p3063 = scmp.lt.s32.totalorder %s21, 1
      %s3064 = scalar_select %p3063, %s21, 1
      %p3065 = scmp.lt.s32.totalorder %s22, 1
      %s3066 = scalar_select %p3065, %s22, 1
      %s3067 = smul.addr %s3064, 2
      %s3068 = sadd.s32 %s3066, %s3067
      %s3069 = scalar_lea.vmem %s5, %s3068
      // Predicated region
      $region33: #{conv_bn_swish.2} parent=31 // pred_check
        %p3070 = pneg %p128
      $region34: #{conv_bn_swish.2} parent=31 // pred_check_branch
        %3072 = sbr.rel (%p3070) target = $region36
      $region35: #{conv_bn_swish.2} parent=31 // pred_region
        %s3073 = smul.u32 16, %s22
      $region36: #{conv_bn_swish.2} parent=31 // pred_fallthru
        _
      // Predicated region
      $region37: #{conv_bn_swish.2} parent=31 // pred_check
        %p3074 = pneg %p156
      $region38: #{conv_bn_swish.2} parent=31 // pred_check_branch
        %3076 = sbr.rel (%p3074) target = $region40
      $region39: #{conv_bn_swish.2} parent=31 // pred_region
        _
      $region40: #{conv_bn_swish.2} parent=31 // pred_fallthru
        _
      // Predicated region
      $region41: #{conv_bn_swish.2} parent=31 // pred_check
        %p3077 = pneg %p184
      $region42: #{conv_bn_swish.2} parent=31 // pred_check_branch
        %3079 = sbr.rel (%p3077) target = $region44
      $region43: #{conv_bn_swish.2} parent=31 // pred_region
        _
      $region44: #{conv_bn_swish.2} parent=31 // pred_fallthru
        _
    $region32: #{conv_bn_swish.2} parent=5 // pred_fallthru
      _
    %p3080 = scmp.le.s32.totalorder 2, %s12
    // Predicated region
    $region45: #{conv_bn_swish.2} parent=5 // pred_check
      %p3081 = pneg %p3080
    $region46: #{conv_bn_swish.2} parent=5 // pred_check_branch
      %3083 = sbr.rel (%p3081) target = $region48
    $region47: #{conv_bn_swish.2} parent=5 // pred_region
      %s3084 = ssub.s32 %s12, 2
      // Predicated region
      $region49: #{conv_bn_swish.2} parent=47 // pred_check
        %p3085 = pneg %p134
      $region50: #{conv_bn_swish.2} parent=47 // pred_check_branch
        %3087 = sbr.rel (%p3085) target = $region52
      $region51: #{conv_bn_swish.2} parent=47 // pred_region
        %s3088 = smul.u32 16, %s24
        %p3089 = scmp.lt.s32.totalorder %s23, 1
        %s3090 = scalar_select %p3089, %s23, 1
        %p3091 = scmp.lt.s32.totalorder %s3088, 31
        %s3092 = scalar_select %p3091, %s3088, 31
        %s3093 = smul.addr %s3090, 32
        %s3094 = sadd.s32 %s3092, %s3093
        %s3095 = smul.addr %s3094, 4
        %s3096 = scalar_lea.vmem %s3, %s3095
      $region52: #{conv_bn_swish.2} parent=47 // pred_fallthru
        _
      // Predicated region
      $region53: #{conv_bn_swish.2} parent=47 // pred_check
        %p3097 = pneg %p162
      $region54: #{conv_bn_swish.2} parent=47 // pred_check_branch
        %3099 = sbr.rel (%p3097) target = $region56
      $region55: #{conv_bn_swish.2} parent=47 // pred_region
        %p3100 = scmp.lt.s32.totalorder %s23, 1
        %s3101 = scalar_select %p3100, %s23, 1
        %p3102 = scmp.lt.s32.totalorder %s24, 1
        %s3103 = scalar_select %p3102, %s24, 1
        %s3104 = smul.addr %s3101, 2
        %s3105 = sadd.s32 %s3103, %s3104
        %s3106 = scalar_lea.vmem %s4, %s3105
      $region56: #{conv_bn_swish.2} parent=47 // pred_fallthru
        _
      // Predicated region
      $region57: #{conv_bn_swish.2} parent=47 // pred_check
        %p3107 = pneg %p190
      $region58: #{conv_bn_swish.2} parent=47 // pred_check_branch
        %3109 = sbr.rel (%p3107) target = $region60
      $region59: #{conv_bn_swish.2} parent=47 // pred_region
        %p3110 = scmp.lt.s32.totalorder %s23, 1
        %s3111 = scalar_select %p3110, %s23, 1
        %p3112 = scmp.lt.s32.totalorder %s24, 1
        %s3113 = scalar_select %p3112, %s24, 1
        %s3114 = smul.addr %s3111, 2
        %s3115 = sadd.s32 %s3113, %s3114
        %s3116 = scalar_lea.vmem %s5, %s3115
      $region60: #{conv_bn_swish.2} parent=47 // pred_fallthru
        _
    $region48: #{conv_bn_swish.2} parent=5 // pred_fallthru
      _
  $region6: #{conv_bn_swish.2} parent=0 // loop_footer
    %s16 = sadd.s32 1, %s12
  $region7: #{conv_bn_swish.2} parent=0 // loop_footer_branch
    %11 = sbr.rel target = $region3
  $region8: #{conv_bn_swish.2} parent=0 // loop_exit
    _

</llo_original>
